<compile_context>
chip_gen: v7x
topology: tpu7x:2x2x1
jax: 0.10.0
libtpu: 0.0.40
codegen_flags: <defaults>
</compile_context>

<pallas_src>
import functools

import jax
import jax.numpy as jnp
from jax.experimental import pallas as pl
from jax.experimental.pallas import tpu as pltpu


def _full_spec(shape):
    """Whole array as a single block (no grid)."""
    return pl.BlockSpec(tuple(shape), lambda *_: (0,) * len(shape))


# ----------------------------------------------------------------------------
# Single fused kernel: input stage -> TCM stacks -> mix -> GRUs -> decode.
# All frame math is on time-major (T*B, C) slabs (row = t*B + b), so causal
# time shifts are plain row shifts and never leak across the batch axis.
# ----------------------------------------------------------------------------
def _fused_kernel(x_en_ref, mag_ref, ph_ref,
                  en_w_ref, en_b_ref,
                  w_gr_en_ref, gr_b_ref, wg_mag_ref, wr_ph_ref,
                  w_in_ref, b_in_ref, w_dil_ref, b_dil_ref,
                  w_out_ref, b_out_ref,
                  w_go_ref, b_go_ref, w_ro_ref, b_ro_ref,
                  wih_ref, bih_ref, whh_ref, bhhn_ref, dec_w_ref,
                  o_ref, h_scr,
                  *, freq, d_feat, cd1, kd1, dilations, group_num,
                  batch, seq_len):
    f32 = jnp.float32
    bf16 = jnp.bfloat16
    tb = x_en_ref.shape[0]

    def bdot(a, w):
        # bf16 x bf16 -> f32 accumulate on the MXU; elementwise stays f32.
        return jnp.dot(a.astype(bf16), w, preferred_element_type=f32)

    # ---------------- input stage (encoder stub + gain_in / resi_in) --------
    x_en = x_en_ref[...]                                        # (TB, 4F) f32
    en = jnp.maximum(bdot(x_en, en_w_ref[...]) + en_b_ref[...], 0.0)  # (TB, D)

    m0 = mag_ref[0]
    m1 = mag_ref[1]
    mag_norm = jnp.sqrt(m0 * m0 + m1 * m1)                      # (TB, F)
    ph_flat = x_en[:, 2 * freq:]                                # (TB, 2F)

    # gain/resi en-driven halves fused along the output lane axis.
    gr = bdot(en, w_gr_en_ref[...]) + gr_b_ref[...]             # (TB, 2D)
    gain_x = gr[:, :d_feat] + bdot(mag_norm, wg_mag_ref[...])   # (TB, D)
    resi_x = gr[:, d_feat:] + bdot(ph_flat, wr_ph_ref[...])     # (TB, D)

    # ---------------- TCM stacks (stream 0 = gain, stream 1 = resi) ---------
    n_blocks = group_num * len(dilations)
    row = jax.lax.broadcasted_iota(jnp.int32, (tb, cd1), 0)

    def tcm_stream(x, s):
        for l in range(n_blocks):
            d = dilations[l % len(dilations)]
            h = jnp.maximum(bdot(x, w_in_ref[s, l]) + b_in_ref[s, l], 0.0)
            taps = []
            for j in range(kd1):
                off = (kd1 - 1 - j) * d * batch                 # static row shift
                if off == 0:
                    taps.append(h)
                elif off >= tb:
                    taps.append(jnp.zeros((tb, cd1), f32))
                else:
                    # causal shift: roll rides the XLU, mask zeroes t < delay.
                    taps.append(jnp.where(row >= off,
                                          pltpu.roll(h, off, 0), 0.0))
            tap_cat = jnp.concatenate(taps, axis=-1)            # (TB, kd1*cd1)
            y = jnp.maximum(bdot(tap_cat, w_dil_ref[s, l]) + b_dil_ref[s, l],
                            0.0)                                # (TB, cd1)
            x = x + bdot(y, w_out_ref[s, l]) + b_out_ref[s, l]  # residual
        return x

    gain_t = tcm_stream(gain_x, 0)
    resi_t = tcm_stream(resi_x, 1)

    # ---------------- out convs (shared gain computed once) -----------------
    gain = jax.nn.sigmoid(bdot(gain_t, w_go_ref[...]) + b_go_ref[...])  # (TB, F)
    resi = bdot(resi_t, w_ro_ref[...]) + b_ro_ref[...]                  # (TB, 2F)

    # ---------------- per-{real, imag} GRU + decode --------------------------
    hdim = freq
    dec_outs = []
    for s in range(2):
        resi_s = resi[:, s * freq:(s + 1) * freq]
        # mix: cat(phase * gain, mag + resi) -> GRU input (stays in VMEM).
        x_rnn = jnp.concatenate([ph_ref[s] * gain, mag_ref[s] + resi_s],
                                axis=-1)                        # (TB, 2F)
        # Hoisted, gate-fused input projection (b_hh for r/z pre-folded).
        gx = bdot(x_rnn, wih_ref[s]) + bih_ref[s]               # (TB, 3H)
        whh = whh_ref[s]                                        # (H, 3H) bf16
        bhh_n = bhhn_ref[s]                                     # (1, H)

        h = jnp.zeros((batch, hdim), f32)
        for t in range(seq_len):                 # fully unrolled (small T)
            lo = t * batch                       # static python offset
            gh = jnp.dot(h.astype(bf16), whh, preferred_element_type=f32)
            gx_t = gx[lo:lo + batch]
            r = jax.nn.sigmoid(gx_t[:, :hdim] + gh[:, :hdim])
            z = jax.nn.sigmoid(gx_t[:, hdim:2 * hdim] + gh[:, hdim:2 * hdim])
            n = jnp.tanh(gx_t[:, 2 * hdim:] + r * (gh[:, 2 * hdim:] + bhh_n))
            h = (1.0 - z) * n + z * h
            h_scr[s, lo:lo + batch, :] = h       # VMEM slab, bounds live ranges

        dec_outs.append(bdot(h_scr[s], dec_w_ref[s]))           # (TB, F)

    # Lane-dense packed output slab [real | imag], single store.
    o_ref[...] = jnp.concatenate(dec_outs, axis=-1)             # (TB, 2F)


# ----------------------------------------------------------------------------
# Top-level forward (matches the reference forward semantics).
# ----------------------------------------------------------------------------
def collaborative_post_processing(comp_mag, comp_phase, params, cfg):
    """comp_mag, comp_phase: (B, 2, T, F) -> (B, 2, T, F)."""
    B, _, T, F = comp_mag.shape
    # Host-side layout plumbing: time-major frame slabs, row = t*B + b, plus a
    # pre-concatenated encoder slab (folded into the same transpose).
    mag_f = jnp.transpose(comp_mag, (1, 2, 0, 3)).reshape(2, T * B, F)
    ph_f = jnp.transpose(comp_phase, (1, 2, 0, 3)).reshape(2, T * B, F)
    x_en = jnp.concatenate([mag_f[0], mag_f[1], ph_f[0], ph_f[1]], axis=-1)

    kern = functools.partial(
        _fused_kernel, freq=F, d_feat=cfg["d_feat"], cd1=cfg["cd1"],
        kd1=cfg["kd1"], dilations=tuple(cfg["dilations"]),
        group_num=cfg["group_num"], batch=B, seq_len=T)

    args = (x_en, mag_f, ph_f,
            params["en_w"], params["en_b"],
            params["w_gr_en"], params["gr_b"], params["wg_mag"], params["wr_ph"],
            params["tcm_w_in"], params["tcm_b_in"], params["tcm_w_dil"],
            params["tcm_b_dil"], params["tcm_w_out"], params["tcm_b_out"],
            params["gain_out_w"], params["gain_out_b"],
            params["resi_out_w"], params["resi_out_b"],
            params["gru_wih"], params["gru_bih"], params["gru_whh"],
            params["gru_bhh_n"], params["dec_w"])

    y = pl.pallas_call(
        kern,
        out_shape=jax.ShapeDtypeStruct((T * B, 2 * F), jnp.float32),
        in_specs=[_full_spec(a.shape) for a in args],
        out_specs=_full_spec((T * B, 2 * F)),
        scratch_shapes=[pltpu.VMEM((2, T * B, F), jnp.float32)],
    )(*args)

    # (T*B, 2F) -> (B, 2, T, F); pure layout plumbing.
    return jnp.transpose(y.reshape(T, B, 2, F), (1, 2, 0, 3))


# ----------------------------------------------------------------------------
# Deterministic parameter init (PyTorch-style uniform(-1/sqrt(fan_in), ...)),
# stored directly in kernel-ready fused layouts.  Weights bf16, biases f32.
# ----------------------------------------------------------------------------
def _uniform(key, shape, fan_in, dtype=jnp.float32):
    s = 1.0 / (fan_in ** 0.5)
    return jax.random.uniform(key, shape, jnp.float32, -s, s).astype(dtype)


def init_params(key, cfg, freq):
    d_feat, cd1, kd1, cin = cfg["d_feat"], cfg["cd1"], cfg["kd1"], cfg["cin"]
    nb = cfg["group_num"] * len(cfg["dilations"])
    H = freq
    bf16 = jnp.bfloat16
    ks = iter(jax.random.split(key, 32))
    p = {}
    # Encoder stub.
    p["en_w"] = _uniform(next(ks), (cin * freq, d_feat), cin * freq, bf16)
    p["en_b"] = _uniform(next(ks), (1, d_feat), cin * freq)
    # gain_in / resi_in: en-driven halves fused along the output axis.
    wg_en = _uniform(next(ks), (d_feat, d_feat), d_feat + freq)
    wr_en = _uniform(next(ks), (d_feat, d_feat), d_feat + 2 * freq)
    p["w_gr_en"] = jnp.concatenate([wg_en, wr_en], axis=-1).astype(bf16)
    gb = _uniform(next(ks), (1, d_feat), d_feat + freq)
    rb = _uniform(next(ks), (1, d_feat), d_feat + 2 * freq)
    p["gr_b"] = jnp.concatenate([gb, rb], axis=-1)
    p["wg_mag"] = _uniform(next(ks), (freq, d_feat), d_feat + freq, bf16)
    p["wr_ph"] = _uniform(next(ks), (2 * freq, d_feat), d_feat + 2 * freq, bf16)
    # TCM stacks: axis 0 = {gain, resi} stream, axis 1 = block index.
    p["tcm_w_in"] = _uniform(next(ks), (2, nb, d_feat, cd1), d_feat, bf16)
    p["tcm_b_in"] = _uniform(next(ks), (2, nb, 1, cd1), d_feat)
    p["tcm_w_dil"] = _uniform(next(ks), (2, nb, kd1 * cd1, cd1), kd1 * cd1, bf16)
    p["tcm_b_dil"] = _uniform(next(ks), (2, nb, 1, cd1), kd1 * cd1)
    p["tcm_w_out"] = _uniform(next(ks), (2, nb, cd1, d_feat), cd1, bf16)
    p["tcm_b_out"] = _uniform(next(ks), (2, nb, 1, d_feat), cd1)
    # Output 1x1 convs: gain shared, resi produces [real | imag] packed lanes.
    p["gain_out_w"] = _uniform(next(ks), (d_feat, freq), d_feat, bf16)
    p["gain_out_b"] = _uniform(next(ks), (1, freq), d_feat)
    p["resi_out_w"] = _uniform(next(ks), (d_feat, 2 * freq), d_feat, bf16)
    p["resi_out_b"] = _uniform(next(ks), (1, 2 * freq), d_feat)
    # GRUs: axis 0 = {real, imag}; gates r|z|n fused along the output axis.
    p["gru_wih"] = _uniform(next(ks), (2, 2 * freq, 3 * H), 2 * freq, bf16)
    b_ih = _uniform(next(ks), (2, 1, 3 * H), H)
    b_hh = _uniform(next(ks), (2, 1, 3 * H), H)
    # Fold b_hh for r/z into the hoisted input-projection bias; b_hh_n stays
    # separate (it sits inside the r*(W_hn h + b_hn) term of the PyTorch GRU).
    fold = jnp.concatenate([jnp.ones((1, 1, 2 * H), jnp.float32),
                            jnp.zeros((1, 1, H), jnp.float32)], axis=-1)
    p["gru_bih"] = b_ih + fold * b_hh
    p["gru_bhh_n"] = b_hh[:, :, 2 * H:]
    p["gru_whh"] = _uniform(next(ks), (2, H, 3 * H), H, bf16)
    p["dec_w"] = _uniform(next(ks), (2, H, freq), H, bf16)
    return p


if __name__ == "__main__":
    B, T = 2, 8
    fft_num = 30
    F = fft_num // 2 + 1  # freq_dim = 16
    cfg = dict(cin=4, c=8, d_feat=32, kd1=3, cd1=16, fft_num=fft_num,
               dilations=(1, 2), group_num=2)

    key = jax.random.PRNGKey(0)
    k_mag, k_phase = jax.random.split(key)
    comp_mag = jax.random.normal(k_mag, (B, 2, T, F), jnp.float32)
    comp_phase = jax.random.normal(k_phase, (B, 2, T, F), jnp.float32)

    params = init_params(jax.random.PRNGKey(42), cfg, F)

    fwd = jax.jit(functools.partial(collaborative_post_processing, cfg=cfg))
    out = fwd(comp_mag, comp_phase, params)
    out = jax.block_until_ready(out)

    assert out.shape == (B, 2, T, F), out.shape
    assert out.dtype == jnp.float32
    assert bool(jnp.all(jnp.isfinite(out)))
    print("KERNEL_OK")
</pallas_src>

<mosaic_0001>
module attributes {stable_mosaic.version = 11 : i64} {
  func.func @_fused_kernel(%arg0: memref<16x64xf32, #tpu.memory_space<vmem>>, %arg1: memref<2x16x16xf32, #tpu.memory_space<vmem>>, %arg2: memref<2x16x16xf32, #tpu.memory_space<vmem>>, %arg3: memref<64x32xbf16, #tpu.memory_space<vmem>>, %arg4: memref<1x32xf32, #tpu.memory_space<vmem>>, %arg5: memref<32x64xbf16, #tpu.memory_space<vmem>>, %arg6: memref<1x64xf32, #tpu.memory_space<vmem>>, %arg7: memref<16x32xbf16, #tpu.memory_space<vmem>>, %arg8: memref<32x32xbf16, #tpu.memory_space<vmem>>, %arg9: memref<2x4x32x16xbf16, #tpu.memory_space<vmem>>, %arg10: memref<2x4x1x16xf32, #tpu.memory_space<vmem>>, %arg11: memref<2x4x48x16xbf16, #tpu.memory_space<vmem>>, %arg12: memref<2x4x1x16xf32, #tpu.memory_space<vmem>>, %arg13: memref<2x4x16x32xbf16, #tpu.memory_space<vmem>>, %arg14: memref<2x4x1x32xf32, #tpu.memory_space<vmem>>, %arg15: memref<32x16xbf16, #tpu.memory_space<vmem>>, %arg16: memref<1x16xf32, #tpu.memory_space<vmem>>, %arg17: memref<32x32xbf16, #tpu.memory_space<vmem>>, %arg18: memref<1x32xf32, #tpu.memory_space<vmem>>, %arg19: memref<2x32x48xbf16, #tpu.memory_space<vmem>>, %arg20: memref<2x1x48xf32, #tpu.memory_space<vmem>>, %arg21: memref<2x16x48xbf16, #tpu.memory_space<vmem>>, %arg22: memref<2x1x16xf32, #tpu.memory_space<vmem>>, %arg23: memref<2x16x16xbf16, #tpu.memory_space<vmem>>, %arg24: memref<16x32xf32, #tpu.memory_space<vmem>>, %arg25: memref<2x16x16xf32, #tpu.memory_space<vmem>>) attributes {dimension_semantics = [], scalar_prefetch = 0 : i64, scratch_operands = 1 : i64, tpu.core_type = #tpu.core_type<tc>} {
    %c0 = arith.constant 0 : index
    %c0_0 = arith.constant 0 : index
    %0 = vector.load %arg0[%c0, %c0_0] : memref<16x64xf32, #tpu.memory_space<vmem>>, vector<16x64xf32>
    %c0_1 = arith.constant 0 : index
    %c0_2 = arith.constant 0 : index
    %1 = vector.load %arg3[%c0_1, %c0_2] : memref<64x32xbf16, #tpu.memory_space<vmem>>, vector<64x32xbf16>
    %2 = arith.truncf %0 : vector<16x64xf32> to vector<16x64xbf16>
    %cst = arith.constant dense<0.000000e+00> : vector<16x32xf32>
    %3 = tpu.matmul %2, %1, %cst {dimension_numbers = #tpu.dot_dimension_numbers<[1], [0], [0], [1], [0, 0, 1, 1], [], []>} : vector<16x64xbf16>, vector<64x32xbf16>, vector<16x32xf32> -> vector<16x32xf32>
    %c0_3 = arith.constant 0 : index
    %c0_4 = arith.constant 0 : index
    %4 = vector.load %arg4[%c0_3, %c0_4] : memref<1x32xf32, #tpu.memory_space<vmem>>, vector<1x32xf32>
    %5 = vector.broadcast %4 : vector<1x32xf32> to vector<16x32xf32>
    %6 = arith.addf %3, %5 : vector<16x32xf32>
    %cst_5 = arith.constant 0.000000e+00 : f32
    %7 = vector.broadcast %cst_5 : f32 to vector<16x32xf32>
    %8 = arith.maximumf %6, %7 : vector<16x32xf32>
    %c0_6 = arith.constant 0 : index
    %c0_7 = arith.constant 0 : index
    %c0_8 = arith.constant 0 : index
    %9 = vector.load %arg1[%c0_6, %c0_7, %c0_8] : memref<2x16x16xf32, #tpu.memory_space<vmem>>, vector<1x16x16xf32>
    %10 = vector.shape_cast %9 : vector<1x16x16xf32> to vector<16x16xf32>
    %c1 = arith.constant 1 : index
    %c0_9 = arith.constant 0 : index
    %c0_10 = arith.constant 0 : index
    %11 = vector.load %arg1[%c1, %c0_9, %c0_10] : memref<2x16x16xf32, #tpu.memory_space<vmem>>, vector<1x16x16xf32>
    %12 = vector.shape_cast %11 : vector<1x16x16xf32> to vector<16x16xf32>
    %13 = arith.mulf %10, %10 : vector<16x16xf32>
    %14 = arith.mulf %12, %12 : vector<16x16xf32>
    %15 = arith.addf %13, %14 : vector<16x16xf32>
    %16 = math.sqrt %15 : vector<16x16xf32>
    %17 = vector.extract_strided_slice %0 {offsets = [0, 32], sizes = [16, 32], strides = [1, 1]} : vector<16x64xf32> to vector<16x32xf32>
    %c0_11 = arith.constant 0 : index
    %c0_12 = arith.constant 0 : index
    %18 = vector.load %arg5[%c0_11, %c0_12] : memref<32x64xbf16, #tpu.memory_space<vmem>>, vector<32x64xbf16>
    %19 = arith.truncf %8 : vector<16x32xf32> to vector<16x32xbf16>
    %cst_13 = arith.constant dense<0.000000e+00> : vector<16x64xf32>
    %20 = tpu.matmul %19, %18, %cst_13 {dimension_numbers = #tpu.dot_dimension_numbers<[1], [0], [0], [1], [0, 0, 1, 1], [], []>} : vector<16x32xbf16>, vector<32x64xbf16>, vector<16x64xf32> -> vector<16x64xf32>
    %c0_14 = arith.constant 0 : index
    %c0_15 = arith.constant 0 : index
    %21 = vector.load %arg6[%c0_14, %c0_15] : memref<1x64xf32, #tpu.memory_space<vmem>>, vector<1x64xf32>
    %22 = vector.broadcast %21 : vector<1x64xf32> to vector<16x64xf32>
    %23 = arith.addf %20, %22 : vector<16x64xf32>
    %24 = vector.extract_strided_slice %23 {offsets = [0, 0], sizes = [16, 32], strides = [1, 1]} : vector<16x64xf32> to vector<16x32xf32>
    %c0_16 = arith.constant 0 : index
    %c0_17 = arith.constant 0 : index
    %25 = vector.load %arg7[%c0_16, %c0_17] : memref<16x32xbf16, #tpu.memory_space<vmem>>, vector<16x32xbf16>
    %26 = arith.truncf %16 : vector<16x16xf32> to vector<16x16xbf16>
    %cst_18 = arith.constant dense<0.000000e+00> : vector<16x32xf32>
    %27 = tpu.matmul %26, %25, %cst_18 {dimension_numbers = #tpu.dot_dimension_numbers<[1], [0], [0], [1], [0, 0, 1, 1], [], []>} : vector<16x16xbf16>, vector<16x32xbf16>, vector<16x32xf32> -> vector<16x32xf32>
    %28 = arith.addf %24, %27 : vector<16x32xf32>
    %29 = vector.extract_strided_slice %23 {offsets = [0, 32], sizes = [16, 32], strides = [1, 1]} : vector<16x64xf32> to vector<16x32xf32>
    %c0_19 = arith.constant 0 : index
    %c0_20 = arith.constant 0 : index
    %30 = vector.load %arg8[%c0_19, %c0_20] : memref<32x32xbf16, #tpu.memory_space<vmem>>, vector<32x32xbf16>
    %31 = arith.truncf %17 : vector<16x32xf32> to vector<16x32xbf16>
    %cst_21 = arith.constant dense<0.000000e+00> : vector<16x32xf32>
    %32 = tpu.matmul %31, %30, %cst_21 {dimension_numbers = #tpu.dot_dimension_numbers<[1], [0], [0], [1], [0, 0, 1, 1], [], []>} : vector<16x32xbf16>, vector<32x32xbf16>, vector<16x32xf32> -> vector<16x32xf32>
    %33 = arith.addf %29, %32 : vector<16x32xf32>
    %34 = tpu.iota {dimensions = array<i32: 0>} : vector<16x16xi32>
    %c0_22 = arith.constant 0 : index
    %c0_23 = arith.constant 0 : index
    %c0_24 = arith.constant 0 : index
    %c0_25 = arith.constant 0 : index
    %35 = vector.load %arg9[%c0_22, %c0_23, %c0_24, %c0_25] : memref<2x4x32x16xbf16, #tpu.memory_space<vmem>>, vector<1x1x32x16xbf16>
    %36 = vector.shape_cast %35 : vector<1x1x32x16xbf16> to vector<32x16xbf16>
    %37 = arith.truncf %28 : vector<16x32xf32> to vector<16x32xbf16>
    %cst_26 = arith.constant dense<0.000000e+00> : vector<16x16xf32>
    %38 = tpu.matmul %37, %36, %cst_26 {dimension_numbers = #tpu.dot_dimension_numbers<[1], [0], [0], [1], [0, 0, 1, 1], [], []>} : vector<16x32xbf16>, vector<32x16xbf16>, vector<16x16xf32> -> vector<16x16xf32>
    %c0_27 = arith.constant 0 : index
    %c0_28 = arith.constant 0 : index
    %c0_29 = arith.constant 0 : index
    %c0_30 = arith.constant 0 : index
    %39 = vector.load %arg10[%c0_27, %c0_28, %c0_29, %c0_30] : memref<2x4x1x16xf32, #tpu.memory_space<vmem>>, vector<1x1x1x16xf32>
    %40 = vector.shape_cast %39 : vector<1x1x1x16xf32> to vector<1x16xf32>
    %41 = vector.broadcast %40 : vector<1x16xf32> to vector<16x16xf32>
    %42 = arith.addf %38, %41 : vector<16x16xf32>
    %cst_31 = arith.constant 0.000000e+00 : f32
    %43 = vector.broadcast %cst_31 : f32 to vector<16x16xf32>
    %44 = arith.maximumf %42, %43 : vector<16x16xf32>
    %c4_i32 = arith.constant 4 : i32
    %45 = vector.broadcast %c4_i32 : i32 to vector<16x16xi32>
    %46 = arith.cmpi sge, %34, %45 : vector<16x16xi32>
    %c4_i32_32 = arith.constant 4 : i32
    %47 = tpu.dynamic_rotate %44 by %c4_i32_32 dim 0 : vector<16x16xf32>, i32 -> vector<16x16xf32>
    %cst_33 = arith.constant 0.000000e+00 : f32
    %48 = vector.broadcast %cst_33 : f32 to vector<16x16xf32>
    %49 = arith.select %46, %47, %48 : vector<16x16xi1>, vector<16x16xf32>
    %c2_i32 = arith.constant 2 : i32
    %50 = vector.broadcast %c2_i32 : i32 to vector<16x16xi32>
    %51 = arith.cmpi sge, %34, %50 : vector<16x16xi32>
    %c2_i32_34 = arith.constant 2 : i32
    %52 = tpu.dynamic_rotate %44 by %c2_i32_34 dim 0 : vector<16x16xf32>, i32 -> vector<16x16xf32>
    %cst_35 = arith.constant 0.000000e+00 : f32
    %53 = vector.broadcast %cst_35 : f32 to vector<16x16xf32>
    %54 = arith.select %51, %52, %53 : vector<16x16xi1>, vector<16x16xf32>
    %55 = tpu.concatenate %49, %54, %44 in 1 : vector<16x16xf32>, vector<16x16xf32>, vector<16x16xf32> -> vector<16x48xf32>
    %c0_36 = arith.constant 0 : index
    %c0_37 = arith.constant 0 : index
    %c0_38 = arith.constant 0 : index
    %c0_39 = arith.constant 0 : index
    %56 = vector.load %arg11[%c0_36, %c0_37, %c0_38, %c0_39] : memref<2x4x48x16xbf16, #tpu.memory_space<vmem>>, vector<1x1x48x16xbf16>
    %57 = vector.shape_cast %56 : vector<1x1x48x16xbf16> to vector<48x16xbf16>
    %58 = arith.truncf %55 : vector<16x48xf32> to vector<16x48xbf16>
    %cst_40 = arith.constant dense<0.000000e+00> : vector<16x16xf32>
    %59 = tpu.matmul %58, %57, %cst_40 {dimension_numbers = #tpu.dot_dimension_numbers<[1], [0], [0], [1], [0, 0, 1, 1], [], []>} : vector<16x48xbf16>, vector<48x16xbf16>, vector<16x16xf32> -> vector<16x16xf32>
    %c0_41 = arith.constant 0 : index
    %c0_42 = arith.constant 0 : index
    %c0_43 = arith.constant 0 : index
    %c0_44 = arith.constant 0 : index
    %60 = vector.load %arg12[%c0_41, %c0_42, %c0_43, %c0_44] : memref<2x4x1x16xf32, #tpu.memory_space<vmem>>, vector<1x1x1x16xf32>
    %61 = vector.shape_cast %60 : vector<1x1x1x16xf32> to vector<1x16xf32>
    %62 = vector.broadcast %61 : vector<1x16xf32> to vector<16x16xf32>
    %63 = arith.addf %59, %62 : vector<16x16xf32>
    %cst_45 = arith.constant 0.000000e+00 : f32
    %64 = vector.broadcast %cst_45 : f32 to vector<16x16xf32>
    %65 = arith.maximumf %63, %64 : vector<16x16xf32>
    %c0_46 = arith.constant 0 : index
    %c0_47 = arith.constant 0 : index
    %c0_48 = arith.constant 0 : index
    %c0_49 = arith.constant 0 : index
    %66 = vector.load %arg13[%c0_46, %c0_47, %c0_48, %c0_49] : memref<2x4x16x32xbf16, #tpu.memory_space<vmem>>, vector<1x1x16x32xbf16>
    %67 = vector.shape_cast %66 : vector<1x1x16x32xbf16> to vector<16x32xbf16>
    %68 = arith.truncf %65 : vector<16x16xf32> to vector<16x16xbf16>
    %cst_50 = arith.constant dense<0.000000e+00> : vector<16x32xf32>
    %69 = tpu.matmul %68, %67, %cst_50 {dimension_numbers = #tpu.dot_dimension_numbers<[1], [0], [0], [1], [0, 0, 1, 1], [], []>} : vector<16x16xbf16>, vector<16x32xbf16>, vector<16x32xf32> -> vector<16x32xf32>
    %70 = arith.addf %28, %69 : vector<16x32xf32>
    %c0_51 = arith.constant 0 : index
    %c0_52 = arith.constant 0 : index
    %c0_53 = arith.constant 0 : index
    %c0_54 = arith.constant 0 : index
    %71 = vector.load %arg14[%c0_51, %c0_52, %c0_53, %c0_54] : memref<2x4x1x32xf32, #tpu.memory_space<vmem>>, vector<1x1x1x32xf32>
    %72 = vector.shape_cast %71 : vector<1x1x1x32xf32> to vector<1x32xf32>
    %73 = vector.broadcast %72 : vector<1x32xf32> to vector<16x32xf32>
    %74 = arith.addf %70, %73 : vector<16x32xf32>
    %c0_55 = arith.constant 0 : index
    %c1_56 = arith.constant 1 : index
    %c0_57 = arith.constant 0 : index
    %c0_58 = arith.constant 0 : index
    %75 = vector.load %arg9[%c0_55, %c1_56, %c0_57, %c0_58] : memref<2x4x32x16xbf16, #tpu.memory_space<vmem>>, vector<1x1x32x16xbf16>
    %76 = vector.shape_cast %75 : vector<1x1x32x16xbf16> to vector<32x16xbf16>
    %77 = arith.truncf %74 : vector<16x32xf32> to vector<16x32xbf16>
    %cst_59 = arith.constant dense<0.000000e+00> : vector<16x16xf32>
    %78 = tpu.matmul %77, %76, %cst_59 {dimension_numbers = #tpu.dot_dimension_numbers<[1], [0], [0], [1], [0, 0, 1, 1], [], []>} : vector<16x32xbf16>, vector<32x16xbf16>, vector<16x16xf32> -> vector<16x16xf32>
    %c0_60 = arith.constant 0 : index
    %c1_61 = arith.constant 1 : index
    %c0_62 = arith.constant 0 : index
    %c0_63 = arith.constant 0 : index
    %79 = vector.load %arg10[%c0_60, %c1_61, %c0_62, %c0_63] : memref<2x4x1x16xf32, #tpu.memory_space<vmem>>, vector<1x1x1x16xf32>
    %80 = vector.shape_cast %79 : vector<1x1x1x16xf32> to vector<1x16xf32>
    %81 = vector.broadcast %80 : vector<1x16xf32> to vector<16x16xf32>
    %82 = arith.addf %78, %81 : vector<16x16xf32>
    %cst_64 = arith.constant 0.000000e+00 : f32
    %83 = vector.broadcast %cst_64 : f32 to vector<16x16xf32>
    %84 = arith.maximumf %82, %83 : vector<16x16xf32>
    %c8_i32 = arith.constant 8 : i32
    %85 = vector.broadcast %c8_i32 : i32 to vector<16x16xi32>
    %86 = arith.cmpi sge, %34, %85 : vector<16x16xi32>
    %c8_i32_65 = arith.constant 8 : i32
    %87 = tpu.dynamic_rotate %84 by %c8_i32_65 dim 0 : vector<16x16xf32>, i32 -> vector<16x16xf32>
    %cst_66 = arith.constant 0.000000e+00 : f32
    %88 = vector.broadcast %cst_66 : f32 to vector<16x16xf32>
    %89 = arith.select %86, %87, %88 : vector<16x16xi1>, vector<16x16xf32>
    %c4_i32_67 = arith.constant 4 : i32
    %90 = vector.broadcast %c4_i32_67 : i32 to vector<16x16xi32>
    %91 = arith.cmpi sge, %34, %90 : vector<16x16xi32>
    %c4_i32_68 = arith.constant 4 : i32
    %92 = tpu.dynamic_rotate %84 by %c4_i32_68 dim 0 : vector<16x16xf32>, i32 -> vector<16x16xf32>
    %cst_69 = arith.constant 0.000000e+00 : f32
    %93 = vector.broadcast %cst_69 : f32 to vector<16x16xf32>
    %94 = arith.select %91, %92, %93 : vector<16x16xi1>, vector<16x16xf32>
    %95 = tpu.concatenate %89, %94, %84 in 1 : vector<16x16xf32>, vector<16x16xf32>, vector<16x16xf32> -> vector<16x48xf32>
    %c0_70 = arith.constant 0 : index
    %c1_71 = arith.constant 1 : index
    %c0_72 = arith.constant 0 : index
    %c0_73 = arith.constant 0 : index
    %96 = vector.load %arg11[%c0_70, %c1_71, %c0_72, %c0_73] : memref<2x4x48x16xbf16, #tpu.memory_space<vmem>>, vector<1x1x48x16xbf16>
    %97 = vector.shape_cast %96 : vector<1x1x48x16xbf16> to vector<48x16xbf16>
    %98 = arith.truncf %95 : vector<16x48xf32> to vector<16x48xbf16>
    %cst_74 = arith.constant dense<0.000000e+00> : vector<16x16xf32>
    %99 = tpu.matmul %98, %97, %cst_74 {dimension_numbers = #tpu.dot_dimension_numbers<[1], [0], [0], [1], [0, 0, 1, 1], [], []>} : vector<16x48xbf16>, vector<48x16xbf16>, vector<16x16xf32> -> vector<16x16xf32>
    %c0_75 = arith.constant 0 : index
    %c1_76 = arith.constant 1 : index
    %c0_77 = arith.constant 0 : index
    %c0_78 = arith.constant 0 : index
    %100 = vector.load %arg12[%c0_75, %c1_76, %c0_77, %c0_78] : memref<2x4x1x16xf32, #tpu.memory_space<vmem>>, vector<1x1x1x16xf32>
    %101 = vector.shape_cast %100 : vector<1x1x1x16xf32> to vector<1x16xf32>
    %102 = vector.broadcast %101 : vector<1x16xf32> to vector<16x16xf32>
    %103 = arith.addf %99, %102 : vector<16x16xf32>
    %cst_79 = arith.constant 0.000000e+00 : f32
    %104 = vector.broadcast %cst_79 : f32 to vector<16x16xf32>
    %105 = arith.maximumf %103, %104 : vector<16x16xf32>
    %c0_80 = arith.constant 0 : index
    %c1_81 = arith.constant 1 : index
    %c0_82 = arith.constant 0 : index
    %c0_83 = arith.constant 0 : index
    %106 = vector.load %arg13[%c0_80, %c1_81, %c0_82, %c0_83] : memref<2x4x16x32xbf16, #tpu.memory_space<vmem>>, vector<1x1x16x32xbf16>
    %107 = vector.shape_cast %106 : vector<1x1x16x32xbf16> to vector<16x32xbf16>
    %108 = arith.truncf %105 : vector<16x16xf32> to vector<16x16xbf16>
    %cst_84 = arith.constant dense<0.000000e+00> : vector<16x32xf32>
    %109 = tpu.matmul %108, %107, %cst_84 {dimension_numbers = #tpu.dot_dimension_numbers<[1], [0], [0], [1], [0, 0, 1, 1], [], []>} : vector<16x16xbf16>, vector<16x32xbf16>, vector<16x32xf32> -> vector<16x32xf32>
    %110 = arith.addf %74, %109 : vector<16x32xf32>
    %c0_85 = arith.constant 0 : index
    %c1_86 = arith.constant 1 : index
    %c0_87 = arith.constant 0 : index
    %c0_88 = arith.constant 0 : index
    %111 = vector.load %arg14[%c0_85, %c1_86, %c0_87, %c0_88] : memref<2x4x1x32xf32, #tpu.memory_space<vmem>>, vector<1x1x1x32xf32>
    %112 = vector.shape_cast %111 : vector<1x1x1x32xf32> to vector<1x32xf32>
    %113 = vector.broadcast %112 : vector<1x32xf32> to vector<16x32xf32>
    %114 = arith.addf %110, %113 : vector<16x32xf32>
    %c0_89 = arith.constant 0 : index
    %c2 = arith.constant 2 : index
    %c0_90 = arith.constant 0 : index
    %c0_91 = arith.constant 0 : index
    %115 = vector.load %arg9[%c0_89, %c2, %c0_90, %c0_91] : memref<2x4x32x16xbf16, #tpu.memory_space<vmem>>, vector<1x1x32x16xbf16>
    %116 = vector.shape_cast %115 : vector<1x1x32x16xbf16> to vector<32x16xbf16>
    %117 = arith.truncf %114 : vector<16x32xf32> to vector<16x32xbf16>
    %cst_92 = arith.constant dense<0.000000e+00> : vector<16x16xf32>
    %118 = tpu.matmul %117, %116, %cst_92 {dimension_numbers = #tpu.dot_dimension_numbers<[1], [0], [0], [1], [0, 0, 1, 1], [], []>} : vector<16x32xbf16>, vector<32x16xbf16>, vector<16x16xf32> -> vector<16x16xf32>
    %c0_93 = arith.constant 0 : index
    %c2_94 = arith.constant 2 : index
    %c0_95 = arith.constant 0 : index
    %c0_96 = arith.constant 0 : index
    %119 = vector.load %arg10[%c0_93, %c2_94, %c0_95, %c0_96] : memref<2x4x1x16xf32, #tpu.memory_space<vmem>>, vector<1x1x1x16xf32>
    %120 = vector.shape_cast %119 : vector<1x1x1x16xf32> to vector<1x16xf32>
    %121 = vector.broadcast %120 : vector<1x16xf32> to vector<16x16xf32>
    %122 = arith.addf %118, %121 : vector<16x16xf32>
    %cst_97 = arith.constant 0.000000e+00 : f32
    %123 = vector.broadcast %cst_97 : f32 to vector<16x16xf32>
    %124 = arith.maximumf %122, %123 : vector<16x16xf32>
    %c4_i32_98 = arith.constant 4 : i32
    %125 = vector.broadcast %c4_i32_98 : i32 to vector<16x16xi32>
    %126 = arith.cmpi sge, %34, %125 : vector<16x16xi32>
    %c4_i32_99 = arith.constant 4 : i32
    %127 = tpu.dynamic_rotate %124 by %c4_i32_99 dim 0 : vector<16x16xf32>, i32 -> vector<16x16xf32>
    %cst_100 = arith.constant 0.000000e+00 : f32
    %128 = vector.broadcast %cst_100 : f32 to vector<16x16xf32>
    %129 = arith.select %126, %127, %128 : vector<16x16xi1>, vector<16x16xf32>
    %c2_i32_101 = arith.constant 2 : i32
    %130 = vector.broadcast %c2_i32_101 : i32 to vector<16x16xi32>
    %131 = arith.cmpi sge, %34, %130 : vector<16x16xi32>
    %c2_i32_102 = arith.constant 2 : i32
    %132 = tpu.dynamic_rotate %124 by %c2_i32_102 dim 0 : vector<16x16xf32>, i32 -> vector<16x16xf32>
    %cst_103 = arith.constant 0.000000e+00 : f32
    %133 = vector.broadcast %cst_103 : f32 to vector<16x16xf32>
    %134 = arith.select %131, %132, %133 : vector<16x16xi1>, vector<16x16xf32>
    %135 = tpu.concatenate %129, %134, %124 in 1 : vector<16x16xf32>, vector<16x16xf32>, vector<16x16xf32> -> vector<16x48xf32>
    %c0_104 = arith.constant 0 : index
    %c2_105 = arith.constant 2 : index
    %c0_106 = arith.constant 0 : index
    %c0_107 = arith.constant 0 : index
    %136 = vector.load %arg11[%c0_104, %c2_105, %c0_106, %c0_107] : memref<2x4x48x16xbf16, #tpu.memory_space<vmem>>, vector<1x1x48x16xbf16>
    %137 = vector.shape_cast %136 : vector<1x1x48x16xbf16> to vector<48x16xbf16>
    %138 = arith.truncf %135 : vector<16x48xf32> to vector<16x48xbf16>
    %cst_108 = arith.constant dense<0.000000e+00> : vector<16x16xf32>
    %139 = tpu.matmul %138, %137, %cst_108 {dimension_numbers = #tpu.dot_dimension_numbers<[1], [0], [0], [1], [0, 0, 1, 1], [], []>} : vector<16x48xbf16>, vector<48x16xbf16>, vector<16x16xf32> -> vector<16x16xf32>
    %c0_109 = arith.constant 0 : index
    %c2_110 = arith.constant 2 : index
    %c0_111 = arith.constant 0 : index
    %c0_112 = arith.constant 0 : index
    %140 = vector.load %arg12[%c0_109, %c2_110, %c0_111, %c0_112] : memref<2x4x1x16xf32, #tpu.memory_space<vmem>>, vector<1x1x1x16xf32>
    %141 = vector.shape_cast %140 : vector<1x1x1x16xf32> to vector<1x16xf32>
    %142 = vector.broadcast %141 : vector<1x16xf32> to vector<16x16xf32>
    %143 = arith.addf %139, %142 : vector<16x16xf32>
    %cst_113 = arith.constant 0.000000e+00 : f32
    %144 = vector.broadcast %cst_113 : f32 to vector<16x16xf32>
    %145 = arith.maximumf %143, %144 : vector<16x16xf32>
    %c0_114 = arith.constant 0 : index
    %c2_115 = arith.constant 2 : index
    %c0_116 = arith.constant 0 : index
    %c0_117 = arith.constant 0 : index
    %146 = vector.load %arg13[%c0_114, %c2_115, %c0_116, %c0_117] : memref<2x4x16x32xbf16, #tpu.memory_space<vmem>>, vector<1x1x16x32xbf16>
    %147 = vector.shape_cast %146 : vector<1x1x16x32xbf16> to vector<16x32xbf16>
    %148 = arith.truncf %145 : vector<16x16xf32> to vector<16x16xbf16>
    %cst_118 = arith.constant dense<0.000000e+00> : vector<16x32xf32>
    %149 = tpu.matmul %148, %147, %cst_118 {dimension_numbers = #tpu.dot_dimension_numbers<[1], [0], [0], [1], [0, 0, 1, 1], [], []>} : vector<16x16xbf16>, vector<16x32xbf16>, vector<16x32xf32> -> vector<16x32xf32>
    %150 = arith.addf %114, %149 : vector<16x32xf32>
    %c0_119 = arith.constant 0 : index
    %c2_120 = arith.constant 2 : index
    %c0_121 = arith.constant 0 : index
    %c0_122 = arith.constant 0 : index
    %151 = vector.load %arg14[%c0_119, %c2_120, %c0_121, %c0_122] : memref<2x4x1x32xf32, #tpu.memory_space<vmem>>, vector<1x1x1x32xf32>
    %152 = vector.shape_cast %151 : vector<1x1x1x32xf32> to vector<1x32xf32>
    %153 = vector.broadcast %152 : vector<1x32xf32> to vector<16x32xf32>
    %154 = arith.addf %150, %153 : vector<16x32xf32>
    %c0_123 = arith.constant 0 : index
    %c3 = arith.constant 3 : index
    %c0_124 = arith.constant 0 : index
    %c0_125 = arith.constant 0 : index
    %155 = vector.load %arg9[%c0_123, %c3, %c0_124, %c0_125] : memref<2x4x32x16xbf16, #tpu.memory_space<vmem>>, vector<1x1x32x16xbf16>
    %156 = vector.shape_cast %155 : vector<1x1x32x16xbf16> to vector<32x16xbf16>
    %157 = arith.truncf %154 : vector<16x32xf32> to vector<16x32xbf16>
    %cst_126 = arith.constant dense<0.000000e+00> : vector<16x16xf32>
    %158 = tpu.matmul %157, %156, %cst_126 {dimension_numbers = #tpu.dot_dimension_numbers<[1], [0], [0], [1], [0, 0, 1, 1], [], []>} : vector<16x32xbf16>, vector<32x16xbf16>, vector<16x16xf32> -> vector<16x16xf32>
    %c0_127 = arith.constant 0 : index
    %c3_128 = arith.constant 3 : index
    %c0_129 = arith.constant 0 : index
    %c0_130 = arith.constant 0 : index
    %159 = vector.load %arg10[%c0_127, %c3_128, %c0_129, %c0_130] : memref<2x4x1x16xf32, #tpu.memory_space<vmem>>, vector<1x1x1x16xf32>
    %160 = vector.shape_cast %159 : vector<1x1x1x16xf32> to vector<1x16xf32>
    %161 = vector.broadcast %160 : vector<1x16xf32> to vector<16x16xf32>
    %162 = arith.addf %158, %161 : vector<16x16xf32>
    %cst_131 = arith.constant 0.000000e+00 : f32
    %163 = vector.broadcast %cst_131 : f32 to vector<16x16xf32>
    %164 = arith.maximumf %162, %163 : vector<16x16xf32>
    %c8_i32_132 = arith.constant 8 : i32
    %165 = vector.broadcast %c8_i32_132 : i32 to vector<16x16xi32>
    %166 = arith.cmpi sge, %34, %165 : vector<16x16xi32>
    %c8_i32_133 = arith.constant 8 : i32
    %167 = tpu.dynamic_rotate %164 by %c8_i32_133 dim 0 : vector<16x16xf32>, i32 -> vector<16x16xf32>
    %cst_134 = arith.constant 0.000000e+00 : f32
    %168 = vector.broadcast %cst_134 : f32 to vector<16x16xf32>
    %169 = arith.select %166, %167, %168 : vector<16x16xi1>, vector<16x16xf32>
    %c4_i32_135 = arith.constant 4 : i32
    %170 = vector.broadcast %c4_i32_135 : i32 to vector<16x16xi32>
    %171 = arith.cmpi sge, %34, %170 : vector<16x16xi32>
    %c4_i32_136 = arith.constant 4 : i32
    %172 = tpu.dynamic_rotate %164 by %c4_i32_136 dim 0 : vector<16x16xf32>, i32 -> vector<16x16xf32>
    %cst_137 = arith.constant 0.000000e+00 : f32
    %173 = vector.broadcast %cst_137 : f32 to vector<16x16xf32>
    %174 = arith.select %171, %172, %173 : vector<16x16xi1>, vector<16x16xf32>
    %175 = tpu.concatenate %169, %174, %164 in 1 : vector<16x16xf32>, vector<16x16xf32>, vector<16x16xf32> -> vector<16x48xf32>
    %c0_138 = arith.constant 0 : index
    %c3_139 = arith.constant 3 : index
    %c0_140 = arith.constant 0 : index
    %c0_141 = arith.constant 0 : index
    %176 = vector.load %arg11[%c0_138, %c3_139, %c0_140, %c0_141] : memref<2x4x48x16xbf16, #tpu.memory_space<vmem>>, vector<1x1x48x16xbf16>
    %177 = vector.shape_cast %176 : vector<1x1x48x16xbf16> to vector<48x16xbf16>
    %178 = arith.truncf %175 : vector<16x48xf32> to vector<16x48xbf16>
    %cst_142 = arith.constant dense<0.000000e+00> : vector<16x16xf32>
    %179 = tpu.matmul %178, %177, %cst_142 {dimension_numbers = #tpu.dot_dimension_numbers<[1], [0], [0], [1], [0, 0, 1, 1], [], []>} : vector<16x48xbf16>, vector<48x16xbf16>, vector<16x16xf32> -> vector<16x16xf32>
    %c0_143 = arith.constant 0 : index
    %c3_144 = arith.constant 3 : index
    %c0_145 = arith.constant 0 : index
    %c0_146 = arith.constant 0 : index
    %180 = vector.load %arg12[%c0_143, %c3_144, %c0_145, %c0_146] : memref<2x4x1x16xf32, #tpu.memory_space<vmem>>, vector<1x1x1x16xf32>
    %181 = vector.shape_cast %180 : vector<1x1x1x16xf32> to vector<1x16xf32>
    %182 = vector.broadcast %181 : vector<1x16xf32> to vector<16x16xf32>
    %183 = arith.addf %179, %182 : vector<16x16xf32>
    %cst_147 = arith.constant 0.000000e+00 : f32
    %184 = vector.broadcast %cst_147 : f32 to vector<16x16xf32>
    %185 = arith.maximumf %183, %184 : vector<16x16xf32>
    %c0_148 = arith.constant 0 : index
    %c3_149 = arith.constant 3 : index
    %c0_150 = arith.constant 0 : index
    %c0_151 = arith.constant 0 : index
    %186 = vector.load %arg13[%c0_148, %c3_149, %c0_150, %c0_151] : memref<2x4x16x32xbf16, #tpu.memory_space<vmem>>, vector<1x1x16x32xbf16>
    %187 = vector.shape_cast %186 : vector<1x1x16x32xbf16> to vector<16x32xbf16>
    %188 = arith.truncf %185 : vector<16x16xf32> to vector<16x16xbf16>
    %cst_152 = arith.constant dense<0.000000e+00> : vector<16x32xf32>
    %189 = tpu.matmul %188, %187, %cst_152 {dimension_numbers = #tpu.dot_dimension_numbers<[1], [0], [0], [1], [0, 0, 1, 1], [], []>} : vector<16x16xbf16>, vector<16x32xbf16>, vector<16x32xf32> -> vector<16x32xf32>
    %190 = arith.addf %154, %189 : vector<16x32xf32>
    %c0_153 = arith.constant 0 : index
    %c3_154 = arith.constant 3 : index
    %c0_155 = arith.constant 0 : index
    %c0_156 = arith.constant 0 : index
    %191 = vector.load %arg14[%c0_153, %c3_154, %c0_155, %c0_156] : memref<2x4x1x32xf32, #tpu.memory_space<vmem>>, vector<1x1x1x32xf32>
    %192 = vector.shape_cast %191 : vector<1x1x1x32xf32> to vector<1x32xf32>
    %193 = vector.broadcast %192 : vector<1x32xf32> to vector<16x32xf32>
    %194 = arith.addf %190, %193 : vector<16x32xf32>
    %c1_157 = arith.constant 1 : index
    %c0_158 = arith.constant 0 : index
    %c0_159 = arith.constant 0 : index
    %c0_160 = arith.constant 0 : index
    %195 = vector.load %arg9[%c1_157, %c0_158, %c0_159, %c0_160] : memref<2x4x32x16xbf16, #tpu.memory_space<vmem>>, vector<1x1x32x16xbf16>
    %196 = vector.shape_cast %195 : vector<1x1x32x16xbf16> to vector<32x16xbf16>
    %197 = arith.truncf %33 : vector<16x32xf32> to vector<16x32xbf16>
    %cst_161 = arith.constant dense<0.000000e+00> : vector<16x16xf32>
    %198 = tpu.matmul %197, %196, %cst_161 {dimension_numbers = #tpu.dot_dimension_numbers<[1], [0], [0], [1], [0, 0, 1, 1], [], []>} : vector<16x32xbf16>, vector<32x16xbf16>, vector<16x16xf32> -> vector<16x16xf32>
    %c1_162 = arith.constant 1 : index
    %c0_163 = arith.constant 0 : index
    %c0_164 = arith.constant 0 : index
    %c0_165 = arith.constant 0 : index
    %199 = vector.load %arg10[%c1_162, %c0_163, %c0_164, %c0_165] : memref<2x4x1x16xf32, #tpu.memory_space<vmem>>, vector<1x1x1x16xf32>
    %200 = vector.shape_cast %199 : vector<1x1x1x16xf32> to vector<1x16xf32>
    %201 = vector.broadcast %200 : vector<1x16xf32> to vector<16x16xf32>
    %202 = arith.addf %198, %201 : vector<16x16xf32>
    %cst_166 = arith.constant 0.000000e+00 : f32
    %203 = vector.broadcast %cst_166 : f32 to vector<16x16xf32>
    %204 = arith.maximumf %202, %203 : vector<16x16xf32>
    %c4_i32_167 = arith.constant 4 : i32
    %205 = vector.broadcast %c4_i32_167 : i32 to vector<16x16xi32>
    %206 = arith.cmpi sge, %34, %205 : vector<16x16xi32>
    %c4_i32_168 = arith.constant 4 : i32
    %207 = tpu.dynamic_rotate %204 by %c4_i32_168 dim 0 : vector<16x16xf32>, i32 -> vector<16x16xf32>
    %cst_169 = arith.constant 0.000000e+00 : f32
    %208 = vector.broadcast %cst_169 : f32 to vector<16x16xf32>
    %209 = arith.select %206, %207, %208 : vector<16x16xi1>, vector<16x16xf32>
    %c2_i32_170 = arith.constant 2 : i32
    %210 = vector.broadcast %c2_i32_170 : i32 to vector<16x16xi32>
    %211 = arith.cmpi sge, %34, %210 : vector<16x16xi32>
    %c2_i32_171 = arith.constant 2 : i32
    %212 = tpu.dynamic_rotate %204 by %c2_i32_171 dim 0 : vector<16x16xf32>, i32 -> vector<16x16xf32>
    %cst_172 = arith.constant 0.000000e+00 : f32
    %213 = vector.broadcast %cst_172 : f32 to vector<16x16xf32>
    %214 = arith.select %211, %212, %213 : vector<16x16xi1>, vector<16x16xf32>
    %215 = tpu.concatenate %209, %214, %204 in 1 : vector<16x16xf32>, vector<16x16xf32>, vector<16x16xf32> -> vector<16x48xf32>
    %c1_173 = arith.constant 1 : index
    %c0_174 = arith.constant 0 : index
    %c0_175 = arith.constant 0 : index
    %c0_176 = arith.constant 0 : index
    %216 = vector.load %arg11[%c1_173, %c0_174, %c0_175, %c0_176] : memref<2x4x48x16xbf16, #tpu.memory_space<vmem>>, vector<1x1x48x16xbf16>
    %217 = vector.shape_cast %216 : vector<1x1x48x16xbf16> to vector<48x16xbf16>
    %218 = arith.truncf %215 : vector<16x48xf32> to vector<16x48xbf16>
    %cst_177 = arith.constant dense<0.000000e+00> : vector<16x16xf32>
    %219 = tpu.matmul %218, %217, %cst_177 {dimension_numbers = #tpu.dot_dimension_numbers<[1], [0], [0], [1], [0, 0, 1, 1], [], []>} : vector<16x48xbf16>, vector<48x16xbf16>, vector<16x16xf32> -> vector<16x16xf32>
    %c1_178 = arith.constant 1 : index
    %c0_179 = arith.constant 0 : index
    %c0_180 = arith.constant 0 : index
    %c0_181 = arith.constant 0 : index
    %220 = vector.load %arg12[%c1_178, %c0_179, %c0_180, %c0_181] : memref<2x4x1x16xf32, #tpu.memory_space<vmem>>, vector<1x1x1x16xf32>
    %221 = vector.shape_cast %220 : vector<1x1x1x16xf32> to vector<1x16xf32>
    %222 = vector.broadcast %221 : vector<1x16xf32> to vector<16x16xf32>
    %223 = arith.addf %219, %222 : vector<16x16xf32>
    %cst_182 = arith.constant 0.000000e+00 : f32
    %224 = vector.broadcast %cst_182 : f32 to vector<16x16xf32>
    %225 = arith.maximumf %223, %224 : vector<16x16xf32>
    %c1_183 = arith.constant 1 : index
    %c0_184 = arith.constant 0 : index
    %c0_185 = arith.constant 0 : index
    %c0_186 = arith.constant 0 : index
    %226 = vector.load %arg13[%c1_183, %c0_184, %c0_185, %c0_186] : memref<2x4x16x32xbf16, #tpu.memory_space<vmem>>, vector<1x1x16x32xbf16>
    %227 = vector.shape_cast %226 : vector<1x1x16x32xbf16> to vector<16x32xbf16>
    %228 = arith.truncf %225 : vector<16x16xf32> to vector<16x16xbf16>
    %cst_187 = arith.constant dense<0.000000e+00> : vector<16x32xf32>
    %229 = tpu.matmul %228, %227, %cst_187 {dimension_numbers = #tpu.dot_dimension_numbers<[1], [0], [0], [1], [0, 0, 1, 1], [], []>} : vector<16x16xbf16>, vector<16x32xbf16>, vector<16x32xf32> -> vector<16x32xf32>
    %230 = arith.addf %33, %229 : vector<16x32xf32>
    %c1_188 = arith.constant 1 : index
    %c0_189 = arith.constant 0 : index
    %c0_190 = arith.constant 0 : index
    %c0_191 = arith.constant 0 : index
    %231 = vector.load %arg14[%c1_188, %c0_189, %c0_190, %c0_191] : memref<2x4x1x32xf32, #tpu.memory_space<vmem>>, vector<1x1x1x32xf32>
    %232 = vector.shape_cast %231 : vector<1x1x1x32xf32> to vector<1x32xf32>
    %233 = vector.broadcast %232 : vector<1x32xf32> to vector<16x32xf32>
    %234 = arith.addf %230, %233 : vector<16x32xf32>
    %c1_192 = arith.constant 1 : index
    %c1_193 = arith.constant 1 : index
    %c0_194 = arith.constant 0 : index
    %c0_195 = arith.constant 0 : index
    %235 = vector.load %arg9[%c1_192, %c1_193, %c0_194, %c0_195] : memref<2x4x32x16xbf16, #tpu.memory_space<vmem>>, vector<1x1x32x16xbf16>
    %236 = vector.shape_cast %235 : vector<1x1x32x16xbf16> to vector<32x16xbf16>
    %237 = arith.truncf %234 : vector<16x32xf32> to vector<16x32xbf16>
    %cst_196 = arith.constant dense<0.000000e+00> : vector<16x16xf32>
    %238 = tpu.matmul %237, %236, %cst_196 {dimension_numbers = #tpu.dot_dimension_numbers<[1], [0], [0], [1], [0, 0, 1, 1], [], []>} : vector<16x32xbf16>, vector<32x16xbf16>, vector<16x16xf32> -> vector<16x16xf32>
    %c1_197 = arith.constant 1 : index
    %c1_198 = arith.constant 1 : index
    %c0_199 = arith.constant 0 : index
    %c0_200 = arith.constant 0 : index
    %239 = vector.load %arg10[%c1_197, %c1_198, %c0_199, %c0_200] : memref<2x4x1x16xf32, #tpu.memory_space<vmem>>, vector<1x1x1x16xf32>
    %240 = vector.shape_cast %239 : vector<1x1x1x16xf32> to vector<1x16xf32>
    %241 = vector.broadcast %240 : vector<1x16xf32> to vector<16x16xf32>
    %242 = arith.addf %238, %241 : vector<16x16xf32>
    %cst_201 = arith.constant 0.000000e+00 : f32
    %243 = vector.broadcast %cst_201 : f32 to vector<16x16xf32>
    %244 = arith.maximumf %242, %243 : vector<16x16xf32>
    %c8_i32_202 = arith.constant 8 : i32
    %245 = vector.broadcast %c8_i32_202 : i32 to vector<16x16xi32>
    %246 = arith.cmpi sge, %34, %245 : vector<16x16xi32>
    %c8_i32_203 = arith.constant 8 : i32
    %247 = tpu.dynamic_rotate %244 by %c8_i32_203 dim 0 : vector<16x16xf32>, i32 -> vector<16x16xf32>
    %cst_204 = arith.constant 0.000000e+00 : f32
    %248 = vector.broadcast %cst_204 : f32 to vector<16x16xf32>
    %249 = arith.select %246, %247, %248 : vector<16x16xi1>, vector<16x16xf32>
    %c4_i32_205 = arith.constant 4 : i32
    %250 = vector.broadcast %c4_i32_205 : i32 to vector<16x16xi32>
    %251 = arith.cmpi sge, %34, %250 : vector<16x16xi32>
    %c4_i32_206 = arith.constant 4 : i32
    %252 = tpu.dynamic_rotate %244 by %c4_i32_206 dim 0 : vector<16x16xf32>, i32 -> vector<16x16xf32>
    %cst_207 = arith.constant 0.000000e+00 : f32
    %253 = vector.broadcast %cst_207 : f32 to vector<16x16xf32>
    %254 = arith.select %251, %252, %253 : vector<16x16xi1>, vector<16x16xf32>
    %255 = tpu.concatenate %249, %254, %244 in 1 : vector<16x16xf32>, vector<16x16xf32>, vector<16x16xf32> -> vector<16x48xf32>
    %c1_208 = arith.constant 1 : index
    %c1_209 = arith.constant 1 : index
    %c0_210 = arith.constant 0 : index
    %c0_211 = arith.constant 0 : index
    %256 = vector.load %arg11[%c1_208, %c1_209, %c0_210, %c0_211] : memref<2x4x48x16xbf16, #tpu.memory_space<vmem>>, vector<1x1x48x16xbf16>
    %257 = vector.shape_cast %256 : vector<1x1x48x16xbf16> to vector<48x16xbf16>
    %258 = arith.truncf %255 : vector<16x48xf32> to vector<16x48xbf16>
    %cst_212 = arith.constant dense<0.000000e+00> : vector<16x16xf32>
    %259 = tpu.matmul %258, %257, %cst_212 {dimension_numbers = #tpu.dot_dimension_numbers<[1], [0], [0], [1], [0, 0, 1, 1], [], []>} : vector<16x48xbf16>, vector<48x16xbf16>, vector<16x16xf32> -> vector<16x16xf32>
    %c1_213 = arith.constant 1 : index
    %c1_214 = arith.constant 1 : index
    %c0_215 = arith.constant 0 : index
    %c0_216 = arith.constant 0 : index
    %260 = vector.load %arg12[%c1_213, %c1_214, %c0_215, %c0_216] : memref<2x4x1x16xf32, #tpu.memory_space<vmem>>, vector<1x1x1x16xf32>
    %261 = vector.shape_cast %260 : vector<1x1x1x16xf32> to vector<1x16xf32>
    %262 = vector.broadcast %261 : vector<1x16xf32> to vector<16x16xf32>
    %263 = arith.addf %259, %262 : vector<16x16xf32>
    %cst_217 = arith.constant 0.000000e+00 : f32
    %264 = vector.broadcast %cst_217 : f32 to vector<16x16xf32>
    %265 = arith.maximumf %263, %264 : vector<16x16xf32>
    %c1_218 = arith.constant 1 : index
    %c1_219 = arith.constant 1 : index
    %c0_220 = arith.constant 0 : index
    %c0_221 = arith.constant 0 : index
    %266 = vector.load %arg13[%c1_218, %c1_219, %c0_220, %c0_221] : memref<2x4x16x32xbf16, #tpu.memory_space<vmem>>, vector<1x1x16x32xbf16>
    %267 = vector.shape_cast %266 : vector<1x1x16x32xbf16> to vector<16x32xbf16>
    %268 = arith.truncf %265 : vector<16x16xf32> to vector<16x16xbf16>
    %cst_222 = arith.constant dense<0.000000e+00> : vector<16x32xf32>
    %269 = tpu.matmul %268, %267, %cst_222 {dimension_numbers = #tpu.dot_dimension_numbers<[1], [0], [0], [1], [0, 0, 1, 1], [], []>} : vector<16x16xbf16>, vector<16x32xbf16>, vector<16x32xf32> -> vector<16x32xf32>
    %270 = arith.addf %234, %269 : vector<16x32xf32>
    %c1_223 = arith.constant 1 : index
    %c1_224 = arith.constant 1 : index
    %c0_225 = arith.constant 0 : index
    %c0_226 = arith.constant 0 : index
    %271 = vector.load %arg14[%c1_223, %c1_224, %c0_225, %c0_226] : memref<2x4x1x32xf32, #tpu.memory_space<vmem>>, vector<1x1x1x32xf32>
    %272 = vector.shape_cast %271 : vector<1x1x1x32xf32> to vector<1x32xf32>
    %273 = vector.broadcast %272 : vector<1x32xf32> to vector<16x32xf32>
    %274 = arith.addf %270, %273 : vector<16x32xf32>
    %c1_227 = arith.constant 1 : index
    %c2_228 = arith.constant 2 : index
    %c0_229 = arith.constant 0 : index
    %c0_230 = arith.constant 0 : index
    %275 = vector.load %arg9[%c1_227, %c2_228, %c0_229, %c0_230] : memref<2x4x32x16xbf16, #tpu.memory_space<vmem>>, vector<1x1x32x16xbf16>
    %276 = vector.shape_cast %275 : vector<1x1x32x16xbf16> to vector<32x16xbf16>
    %277 = arith.truncf %274 : vector<16x32xf32> to vector<16x32xbf16>
    %cst_231 = arith.constant dense<0.000000e+00> : vector<16x16xf32>
    %278 = tpu.matmul %277, %276, %cst_231 {dimension_numbers = #tpu.dot_dimension_numbers<[1], [0], [0], [1], [0, 0, 1, 1], [], []>} : vector<16x32xbf16>, vector<32x16xbf16>, vector<16x16xf32> -> vector<16x16xf32>
    %c1_232 = arith.constant 1 : index
    %c2_233 = arith.constant 2 : index
    %c0_234 = arith.constant 0 : index
    %c0_235 = arith.constant 0 : index
    %279 = vector.load %arg10[%c1_232, %c2_233, %c0_234, %c0_235] : memref<2x4x1x16xf32, #tpu.memory_space<vmem>>, vector<1x1x1x16xf32>
    %280 = vector.shape_cast %279 : vector<1x1x1x16xf32> to vector<1x16xf32>
    %281 = vector.broadcast %280 : vector<1x16xf32> to vector<16x16xf32>
    %282 = arith.addf %278, %281 : vector<16x16xf32>
    %cst_236 = arith.constant 0.000000e+00 : f32
    %283 = vector.broadcast %cst_236 : f32 to vector<16x16xf32>
    %284 = arith.maximumf %282, %283 : vector<16x16xf32>
    %c4_i32_237 = arith.constant 4 : i32
    %285 = vector.broadcast %c4_i32_237 : i32 to vector<16x16xi32>
    %286 = arith.cmpi sge, %34, %285 : vector<16x16xi32>
    %c4_i32_238 = arith.constant 4 : i32
    %287 = tpu.dynamic_rotate %284 by %c4_i32_238 dim 0 : vector<16x16xf32>, i32 -> vector<16x16xf32>
    %cst_239 = arith.constant 0.000000e+00 : f32
    %288 = vector.broadcast %cst_239 : f32 to vector<16x16xf32>
    %289 = arith.select %286, %287, %288 : vector<16x16xi1>, vector<16x16xf32>
    %c2_i32_240 = arith.constant 2 : i32
    %290 = vector.broadcast %c2_i32_240 : i32 to vector<16x16xi32>
    %291 = arith.cmpi sge, %34, %290 : vector<16x16xi32>
    %c2_i32_241 = arith.constant 2 : i32
    %292 = tpu.dynamic_rotate %284 by %c2_i32_241 dim 0 : vector<16x16xf32>, i32 -> vector<16x16xf32>
    %cst_242 = arith.constant 0.000000e+00 : f32
    %293 = vector.broadcast %cst_242 : f32 to vector<16x16xf32>
    %294 = arith.select %291, %292, %293 : vector<16x16xi1>, vector<16x16xf32>
    %295 = tpu.concatenate %289, %294, %284 in 1 : vector<16x16xf32>, vector<16x16xf32>, vector<16x16xf32> -> vector<16x48xf32>
    %c1_243 = arith.constant 1 : index
    %c2_244 = arith.constant 2 : index
    %c0_245 = arith.constant 0 : index
    %c0_246 = arith.constant 0 : index
    %296 = vector.load %arg11[%c1_243, %c2_244, %c0_245, %c0_246] : memref<2x4x48x16xbf16, #tpu.memory_space<vmem>>, vector<1x1x48x16xbf16>
    %297 = vector.shape_cast %296 : vector<1x1x48x16xbf16> to vector<48x16xbf16>
    %298 = arith.truncf %295 : vector<16x48xf32> to vector<16x48xbf16>
    %cst_247 = arith.constant dense<0.000000e+00> : vector<16x16xf32>
    %299 = tpu.matmul %298, %297, %cst_247 {dimension_numbers = #tpu.dot_dimension_numbers<[1], [0], [0], [1], [0, 0, 1, 1], [], []>} : vector<16x48xbf16>, vector<48x16xbf16>, vector<16x16xf32> -> vector<16x16xf32>
    %c1_248 = arith.constant 1 : index
    %c2_249 = arith.constant 2 : index
    %c0_250 = arith.constant 0 : index
    %c0_251 = arith.constant 0 : index
    %300 = vector.load %arg12[%c1_248, %c2_249, %c0_250, %c0_251] : memref<2x4x1x16xf32, #tpu.memory_space<vmem>>, vector<1x1x1x16xf32>
    %301 = vector.shape_cast %300 : vector<1x1x1x16xf32> to vector<1x16xf32>
    %302 = vector.broadcast %301 : vector<1x16xf32> to vector<16x16xf32>
    %303 = arith.addf %299, %302 : vector<16x16xf32>
    %cst_252 = arith.constant 0.000000e+00 : f32
    %304 = vector.broadcast %cst_252 : f32 to vector<16x16xf32>
    %305 = arith.maximumf %303, %304 : vector<16x16xf32>
    %c1_253 = arith.constant 1 : index
    %c2_254 = arith.constant 2 : index
    %c0_255 = arith.constant 0 : index
    %c0_256 = arith.constant 0 : index
    %306 = vector.load %arg13[%c1_253, %c2_254, %c0_255, %c0_256] : memref<2x4x16x32xbf16, #tpu.memory_space<vmem>>, vector<1x1x16x32xbf16>
    %307 = vector.shape_cast %306 : vector<1x1x16x32xbf16> to vector<16x32xbf16>
    %308 = arith.truncf %305 : vector<16x16xf32> to vector<16x16xbf16>
    %cst_257 = arith.constant dense<0.000000e+00> : vector<16x32xf32>
    %309 = tpu.matmul %308, %307, %cst_257 {dimension_numbers = #tpu.dot_dimension_numbers<[1], [0], [0], [1], [0, 0, 1, 1], [], []>} : vector<16x16xbf16>, vector<16x32xbf16>, vector<16x32xf32> -> vector<16x32xf32>
    %310 = arith.addf %274, %309 : vector<16x32xf32>
    %c1_258 = arith.constant 1 : index
    %c2_259 = arith.constant 2 : index
    %c0_260 = arith.constant 0 : index
    %c0_261 = arith.constant 0 : index
    %311 = vector.load %arg14[%c1_258, %c2_259, %c0_260, %c0_261] : memref<2x4x1x32xf32, #tpu.memory_space<vmem>>, vector<1x1x1x32xf32>
    %312 = vector.shape_cast %311 : vector<1x1x1x32xf32> to vector<1x32xf32>
    %313 = vector.broadcast %312 : vector<1x32xf32> to vector<16x32xf32>
    %314 = arith.addf %310, %313 : vector<16x32xf32>
    %c1_262 = arith.constant 1 : index
    %c3_263 = arith.constant 3 : index
    %c0_264 = arith.constant 0 : index
    %c0_265 = arith.constant 0 : index
    %315 = vector.load %arg9[%c1_262, %c3_263, %c0_264, %c0_265] : memref<2x4x32x16xbf16, #tpu.memory_space<vmem>>, vector<1x1x32x16xbf16>
    %316 = vector.shape_cast %315 : vector<1x1x32x16xbf16> to vector<32x16xbf16>
    %317 = arith.truncf %314 : vector<16x32xf32> to vector<16x32xbf16>
    %cst_266 = arith.constant dense<0.000000e+00> : vector<16x16xf32>
    %318 = tpu.matmul %317, %316, %cst_266 {dimension_numbers = #tpu.dot_dimension_numbers<[1], [0], [0], [1], [0, 0, 1, 1], [], []>} : vector<16x32xbf16>, vector<32x16xbf16>, vector<16x16xf32> -> vector<16x16xf32>
    %c1_267 = arith.constant 1 : index
    %c3_268 = arith.constant 3 : index
    %c0_269 = arith.constant 0 : index
    %c0_270 = arith.constant 0 : index
    %319 = vector.load %arg10[%c1_267, %c3_268, %c0_269, %c0_270] : memref<2x4x1x16xf32, #tpu.memory_space<vmem>>, vector<1x1x1x16xf32>
    %320 = vector.shape_cast %319 : vector<1x1x1x16xf32> to vector<1x16xf32>
    %321 = vector.broadcast %320 : vector<1x16xf32> to vector<16x16xf32>
    %322 = arith.addf %318, %321 : vector<16x16xf32>
    %cst_271 = arith.constant 0.000000e+00 : f32
    %323 = vector.broadcast %cst_271 : f32 to vector<16x16xf32>
    %324 = arith.maximumf %322, %323 : vector<16x16xf32>
    %c8_i32_272 = arith.constant 8 : i32
    %325 = vector.broadcast %c8_i32_272 : i32 to vector<16x16xi32>
    %326 = arith.cmpi sge, %34, %325 : vector<16x16xi32>
    %c8_i32_273 = arith.constant 8 : i32
    %327 = tpu.dynamic_rotate %324 by %c8_i32_273 dim 0 : vector<16x16xf32>, i32 -> vector<16x16xf32>
    %cst_274 = arith.constant 0.000000e+00 : f32
    %328 = vector.broadcast %cst_274 : f32 to vector<16x16xf32>
    %329 = arith.select %326, %327, %328 : vector<16x16xi1>, vector<16x16xf32>
    %c4_i32_275 = arith.constant 4 : i32
    %330 = vector.broadcast %c4_i32_275 : i32 to vector<16x16xi32>
    %331 = arith.cmpi sge, %34, %330 : vector<16x16xi32>
    %c4_i32_276 = arith.constant 4 : i32
    %332 = tpu.dynamic_rotate %324 by %c4_i32_276 dim 0 : vector<16x16xf32>, i32 -> vector<16x16xf32>
    %cst_277 = arith.constant 0.000000e+00 : f32
    %333 = vector.broadcast %cst_277 : f32 to vector<16x16xf32>
    %334 = arith.select %331, %332, %333 : vector<16x16xi1>, vector<16x16xf32>
    %335 = tpu.concatenate %329, %334, %324 in 1 : vector<16x16xf32>, vector<16x16xf32>, vector<16x16xf32> -> vector<16x48xf32>
    %c1_278 = arith.constant 1 : index
    %c3_279 = arith.constant 3 : index
    %c0_280 = arith.constant 0 : index
    %c0_281 = arith.constant 0 : index
    %336 = vector.load %arg11[%c1_278, %c3_279, %c0_280, %c0_281] : memref<2x4x48x16xbf16, #tpu.memory_space<vmem>>, vector<1x1x48x16xbf16>
    %337 = vector.shape_cast %336 : vector<1x1x48x16xbf16> to vector<48x16xbf16>
    %338 = arith.truncf %335 : vector<16x48xf32> to vector<16x48xbf16>
    %cst_282 = arith.constant dense<0.000000e+00> : vector<16x16xf32>
    %339 = tpu.matmul %338, %337, %cst_282 {dimension_numbers = #tpu.dot_dimension_numbers<[1], [0], [0], [1], [0, 0, 1, 1], [], []>} : vector<16x48xbf16>, vector<48x16xbf16>, vector<16x16xf32> -> vector<16x16xf32>
    %c1_283 = arith.constant 1 : index
    %c3_284 = arith.constant 3 : index
    %c0_285 = arith.constant 0 : index
    %c0_286 = arith.constant 0 : index
    %340 = vector.load %arg12[%c1_283, %c3_284, %c0_285, %c0_286] : memref<2x4x1x16xf32, #tpu.memory_space<vmem>>, vector<1x1x1x16xf32>
    %341 = vector.shape_cast %340 : vector<1x1x1x16xf32> to vector<1x16xf32>
    %342 = vector.broadcast %341 : vector<1x16xf32> to vector<16x16xf32>
    %343 = arith.addf %339, %342 : vector<16x16xf32>
    %cst_287 = arith.constant 0.000000e+00 : f32
    %344 = vector.broadcast %cst_287 : f32 to vector<16x16xf32>
    %345 = arith.maximumf %343, %344 : vector<16x16xf32>
    %c1_288 = arith.constant 1 : index
    %c3_289 = arith.constant 3 : index
    %c0_290 = arith.constant 0 : index
    %c0_291 = arith.constant 0 : index
    %346 = vector.load %arg13[%c1_288, %c3_289, %c0_290, %c0_291] : memref<2x4x16x32xbf16, #tpu.memory_space<vmem>>, vector<1x1x16x32xbf16>
    %347 = vector.shape_cast %346 : vector<1x1x16x32xbf16> to vector<16x32xbf16>
    %348 = arith.truncf %345 : vector<16x16xf32> to vector<16x16xbf16>
    %cst_292 = arith.constant dense<0.000000e+00> : vector<16x32xf32>
    %349 = tpu.matmul %348, %347, %cst_292 {dimension_numbers = #tpu.dot_dimension_numbers<[1], [0], [0], [1], [0, 0, 1, 1], [], []>} : vector<16x16xbf16>, vector<16x32xbf16>, vector<16x32xf32> -> vector<16x32xf32>
    %350 = arith.addf %314, %349 : vector<16x32xf32>
    %c1_293 = arith.constant 1 : index
    %c3_294 = arith.constant 3 : index
    %c0_295 = arith.constant 0 : index
    %c0_296 = arith.constant 0 : index
    %351 = vector.load %arg14[%c1_293, %c3_294, %c0_295, %c0_296] : memref<2x4x1x32xf32, #tpu.memory_space<vmem>>, vector<1x1x1x32xf32>
    %352 = vector.shape_cast %351 : vector<1x1x1x32xf32> to vector<1x32xf32>
    %353 = vector.broadcast %352 : vector<1x32xf32> to vector<16x32xf32>
    %354 = arith.addf %350, %353 : vector<16x32xf32>
    %c0_297 = arith.constant 0 : index
    %c0_298 = arith.constant 0 : index
    %355 = vector.load %arg15[%c0_297, %c0_298] : memref<32x16xbf16, #tpu.memory_space<vmem>>, vector<32x16xbf16>
    %356 = arith.truncf %194 : vector<16x32xf32> to vector<16x32xbf16>
    %cst_299 = arith.constant dense<0.000000e+00> : vector<16x16xf32>
    %357 = tpu.matmul %356, %355, %cst_299 {dimension_numbers = #tpu.dot_dimension_numbers<[1], [0], [0], [1], [0, 0, 1, 1], [], []>} : vector<16x32xbf16>, vector<32x16xbf16>, vector<16x16xf32> -> vector<16x16xf32>
    %c0_300 = arith.constant 0 : index
    %c0_301 = arith.constant 0 : index
    %358 = vector.load %arg16[%c0_300, %c0_301] : memref<1x16xf32, #tpu.memory_space<vmem>>, vector<1x16xf32>
    %359 = vector.broadcast %358 : vector<1x16xf32> to vector<16x16xf32>
    %360 = arith.addf %357, %359 : vector<16x16xf32>
    %361 = arith.negf %360 : vector<16x16xf32>
    %362 = math.exp %361 : vector<16x16xf32>
    %cst_302 = arith.constant 1.000000e+00 : f32
    %363 = vector.broadcast %cst_302 : f32 to vector<16x16xf32>
    %364 = arith.addf %363, %362 : vector<16x16xf32>
    %365 = arith.divf %363, %364 : vector<16x16xf32>
    %c0_303 = arith.constant 0 : index
    %c0_304 = arith.constant 0 : index
    %366 = vector.load %arg17[%c0_303, %c0_304] : memref<32x32xbf16, #tpu.memory_space<vmem>>, vector<32x32xbf16>
    %367 = arith.truncf %354 : vector<16x32xf32> to vector<16x32xbf16>
    %cst_305 = arith.constant dense<0.000000e+00> : vector<16x32xf32>
    %368 = tpu.matmul %367, %366, %cst_305 {dimension_numbers = #tpu.dot_dimension_numbers<[1], [0], [0], [1], [0, 0, 1, 1], [], []>} : vector<16x32xbf16>, vector<32x32xbf16>, vector<16x32xf32> -> vector<16x32xf32>
    %c0_306 = arith.constant 0 : index
    %c0_307 = arith.constant 0 : index
    %369 = vector.load %arg18[%c0_306, %c0_307] : memref<1x32xf32, #tpu.memory_space<vmem>>, vector<1x32xf32>
    %370 = vector.broadcast %369 : vector<1x32xf32> to vector<16x32xf32>
    %371 = arith.addf %368, %370 : vector<16x32xf32>
    %372 = vector.extract_strided_slice %371 {offsets = [0, 0], sizes = [16, 16], strides = [1, 1]} : vector<16x32xf32> to vector<16x16xf32>
    %c0_308 = arith.constant 0 : index
    %c0_309 = arith.constant 0 : index
    %c0_310 = arith.constant 0 : index
    %373 = vector.load %arg2[%c0_308, %c0_309, %c0_310] : memref<2x16x16xf32, #tpu.memory_space<vmem>>, vector<1x16x16xf32>
    %374 = vector.shape_cast %373 : vector<1x16x16xf32> to vector<16x16xf32>
    %375 = arith.mulf %374, %365 : vector<16x16xf32>
    %c0_311 = arith.constant 0 : index
    %c0_312 = arith.constant 0 : index
    %c0_313 = arith.constant 0 : index
    %376 = vector.load %arg1[%c0_311, %c0_312, %c0_313] : memref<2x16x16xf32, #tpu.memory_space<vmem>>, vector<1x16x16xf32>
    %377 = vector.shape_cast %376 : vector<1x16x16xf32> to vector<16x16xf32>
    %378 = arith.addf %377, %372 : vector<16x16xf32>
    %379 = tpu.concatenate %375, %378 in 1 : vector<16x16xf32>, vector<16x16xf32> -> vector<16x32xf32>
    %c0_314 = arith.constant 0 : index
    %c0_315 = arith.constant 0 : index
    %c0_316 = arith.constant 0 : index
    %380 = vector.load %arg19[%c0_314, %c0_315, %c0_316] : memref<2x32x48xbf16, #tpu.memory_space<vmem>>, vector<1x32x48xbf16>
    %381 = vector.shape_cast %380 : vector<1x32x48xbf16> to vector<32x48xbf16>
    %382 = arith.truncf %379 : vector<16x32xf32> to vector<16x32xbf16>
    %cst_317 = arith.constant dense<0.000000e+00> : vector<16x48xf32>
    %383 = tpu.matmul %382, %381, %cst_317 {dimension_numbers = #tpu.dot_dimension_numbers<[1], [0], [0], [1], [0, 0, 1, 1], [], []>} : vector<16x32xbf16>, vector<32x48xbf16>, vector<16x48xf32> -> vector<16x48xf32>
    %c0_318 = arith.constant 0 : index
    %c0_319 = arith.constant 0 : index
    %c0_320 = arith.constant 0 : index
    %384 = vector.load %arg20[%c0_318, %c0_319, %c0_320] : memref<2x1x48xf32, #tpu.memory_space<vmem>>, vector<1x1x48xf32>
    %385 = vector.shape_cast %384 : vector<1x1x48xf32> to vector<1x48xf32>
    %386 = vector.broadcast %385 : vector<1x48xf32> to vector<16x48xf32>
    %387 = arith.addf %383, %386 : vector<16x48xf32>
    %c0_321 = arith.constant 0 : index
    %c0_322 = arith.constant 0 : index
    %c0_323 = arith.constant 0 : index
    %388 = vector.load %arg21[%c0_321, %c0_322, %c0_323] : memref<2x16x48xbf16, #tpu.memory_space<vmem>>, vector<1x16x48xbf16>
    %389 = vector.shape_cast %388 : vector<1x16x48xbf16> to vector<16x48xbf16>
    %c0_324 = arith.constant 0 : index
    %c0_325 = arith.constant 0 : index
    %c0_326 = arith.constant 0 : index
    %390 = vector.load %arg22[%c0_324, %c0_325, %c0_326] : memref<2x1x16xf32, #tpu.memory_space<vmem>>, vector<1x1x16xf32>
    %391 = vector.shape_cast %390 : vector<1x1x16xf32> to vector<1x16xf32>
    %cst_327 = arith.constant 0.000000e+00 : f32
    %392 = vector.broadcast %cst_327 : f32 to vector<2x16xf32>
    %393 = arith.truncf %392 : vector<2x16xf32> to vector<2x16xbf16>
    %cst_328 = arith.constant dense<0.000000e+00> : vector<2x48xf32>
    %394 = tpu.matmul %393, %389, %cst_328 {dimension_numbers = #tpu.dot_dimension_numbers<[1], [0], [0], [1], [0, 0, 1, 1], [], []>} : vector<2x16xbf16>, vector<16x48xbf16>, vector<2x48xf32> -> vector<2x48xf32>
    %395 = vector.extract_strided_slice %387 {offsets = [0, 0], sizes = [2, 48], strides = [1, 1]} : vector<16x48xf32> to vector<2x48xf32>
    %396 = vector.extract_strided_slice %395 {offsets = [0, 0], sizes = [2, 16], strides = [1, 1]} : vector<2x48xf32> to vector<2x16xf32>
    %397 = vector.extract_strided_slice %394 {offsets = [0, 0], sizes = [2, 16], strides = [1, 1]} : vector<2x48xf32> to vector<2x16xf32>
    %398 = arith.addf %396, %397 : vector<2x16xf32>
    %399 = arith.negf %398 : vector<2x16xf32>
    %400 = math.exp %399 : vector<2x16xf32>
    %cst_329 = arith.constant 1.000000e+00 : f32
    %401 = vector.broadcast %cst_329 : f32 to vector<2x16xf32>
    %402 = arith.addf %401, %400 : vector<2x16xf32>
    %403 = arith.divf %401, %402 : vector<2x16xf32>
    %404 = vector.extract_strided_slice %395 {offsets = [0, 16], sizes = [2, 16], strides = [1, 1]} : vector<2x48xf32> to vector<2x16xf32>
    %405 = vector.extract_strided_slice %394 {offsets = [0, 16], sizes = [2, 16], strides = [1, 1]} : vector<2x48xf32> to vector<2x16xf32>
    %406 = arith.addf %404, %405 : vector<2x16xf32>
    %407 = arith.negf %406 : vector<2x16xf32>
    %408 = math.exp %407 : vector<2x16xf32>
    %cst_330 = arith.constant 1.000000e+00 : f32
    %409 = vector.broadcast %cst_330 : f32 to vector<2x16xf32>
    %410 = arith.addf %409, %408 : vector<2x16xf32>
    %411 = arith.divf %409, %410 : vector<2x16xf32>
    %412 = vector.extract_strided_slice %395 {offsets = [0, 32], sizes = [2, 16], strides = [1, 1]} : vector<2x48xf32> to vector<2x16xf32>
    %413 = vector.extract_strided_slice %394 {offsets = [0, 32], sizes = [2, 16], strides = [1, 1]} : vector<2x48xf32> to vector<2x16xf32>
    %414 = vector.broadcast %391 : vector<1x16xf32> to vector<2x16xf32>
    %415 = arith.addf %413, %414 : vector<2x16xf32>
    %416 = arith.mulf %403, %415 : vector<2x16xf32>
    %417 = arith.addf %412, %416 : vector<2x16xf32>
    %418 = math.tanh %417 : vector<2x16xf32>
    %cst_331 = arith.constant 1.000000e+00 : f32
    %419 = vector.broadcast %cst_331 : f32 to vector<2x16xf32>
    %420 = arith.subf %419, %411 : vector<2x16xf32>
    %421 = arith.mulf %420, %418 : vector<2x16xf32>
    %422 = arith.mulf %411, %392 : vector<2x16xf32>
    %423 = arith.addf %421, %422 : vector<2x16xf32>
    %c0_332 = arith.constant 0 : index
    %c0_333 = arith.constant 0 : index
    %c0_334 = arith.constant 0 : index
    %424 = vector.load %arg25[%c0_332, %c0_333, %c0_334] : memref<2x16x16xf32, #tpu.memory_space<vmem>>, vector<1x2x16xf32>
    %425 = vector.shape_cast %424 : vector<1x2x16xf32> to vector<2x16xf32>
    %426 = vector.shape_cast %423 : vector<2x16xf32> to vector<1x2x16xf32>
    tpu.vector_store %arg25[%c0_332, %c0_333, %c0_334], %426 {strides = array<i32>} : memref<2x16x16xf32, #tpu.memory_space<vmem>>, vector<1x2x16xf32>,
    %427 = arith.truncf %423 : vector<2x16xf32> to vector<2x16xbf16>
    %cst_335 = arith.constant dense<0.000000e+00> : vector<2x48xf32>
    %428 = tpu.matmul %427, %389, %cst_335 {dimension_numbers = #tpu.dot_dimension_numbers<[1], [0], [0], [1], [0, 0, 1, 1], [], []>} : vector<2x16xbf16>, vector<16x48xbf16>, vector<2x48xf32> -> vector<2x48xf32>
    %429 = vector.extract_strided_slice %387 {offsets = [2, 0], sizes = [2, 48], strides = [1, 1]} : vector<16x48xf32> to vector<2x48xf32>
    %430 = vector.extract_strided_slice %429 {offsets = [0, 0], sizes = [2, 16], strides = [1, 1]} : vector<2x48xf32> to vector<2x16xf32>
    %431 = vector.extract_strided_slice %428 {offsets = [0, 0], sizes = [2, 16], strides = [1, 1]} : vector<2x48xf32> to vector<2x16xf32>
    %432 = arith.addf %430, %431 : vector<2x16xf32>
    %433 = arith.negf %432 : vector<2x16xf32>
    %434 = math.exp %433 : vector<2x16xf32>
    %cst_336 = arith.constant 1.000000e+00 : f32
    %435 = vector.broadcast %cst_336 : f32 to vector<2x16xf32>
    %436 = arith.addf %435, %434 : vector<2x16xf32>
    %437 = arith.divf %435, %436 : vector<2x16xf32>
    %438 = vector.extract_strided_slice %429 {offsets = [0, 16], sizes = [2, 16], strides = [1, 1]} : vector<2x48xf32> to vector<2x16xf32>
    %439 = vector.extract_strided_slice %428 {offsets = [0, 16], sizes = [2, 16], strides = [1, 1]} : vector<2x48xf32> to vector<2x16xf32>
    %440 = arith.addf %438, %439 : vector<2x16xf32>
    %441 = arith.negf %440 : vector<2x16xf32>
    %442 = math.exp %441 : vector<2x16xf32>
    %cst_337 = arith.constant 1.000000e+00 : f32
    %443 = vector.broadcast %cst_337 : f32 to vector<2x16xf32>
    %444 = arith.addf %443, %442 : vector<2x16xf32>
    %445 = arith.divf %443, %444 : vector<2x16xf32>
    %446 = vector.extract_strided_slice %429 {offsets = [0, 32], sizes = [2, 16], strides = [1, 1]} : vector<2x48xf32> to vector<2x16xf32>
    %447 = vector.extract_strided_slice %428 {offsets = [0, 32], sizes = [2, 16], strides = [1, 1]} : vector<2x48xf32> to vector<2x16xf32>
    %448 = vector.broadcast %391 : vector<1x16xf32> to vector<2x16xf32>
    %449 = arith.addf %447, %448 : vector<2x16xf32>
    %450 = arith.mulf %437, %449 : vector<2x16xf32>
    %451 = arith.addf %446, %450 : vector<2x16xf32>
    %452 = math.tanh %451 : vector<2x16xf32>
    %cst_338 = arith.constant 1.000000e+00 : f32
    %453 = vector.broadcast %cst_338 : f32 to vector<2x16xf32>
    %454 = arith.subf %453, %445 : vector<2x16xf32>
    %455 = arith.mulf %454, %452 : vector<2x16xf32>
    %456 = arith.mulf %445, %423 : vector<2x16xf32>
    %457 = arith.addf %455, %456 : vector<2x16xf32>
    %c0_339 = arith.constant 0 : index
    %c2_340 = arith.constant 2 : index
    %c0_341 = arith.constant 0 : index
    %458 = vector.load %arg25[%c0_339, %c2_340, %c0_341] : memref<2x16x16xf32, #tpu.memory_space<vmem>>, vector<1x2x16xf32>
    %459 = vector.shape_cast %458 : vector<1x2x16xf32> to vector<2x16xf32>
    %460 = vector.shape_cast %457 : vector<2x16xf32> to vector<1x2x16xf32>
    tpu.vector_store %arg25[%c0_339, %c2_340, %c0_341], %460 {strides = array<i32>} : memref<2x16x16xf32, #tpu.memory_space<vmem>>, vector<1x2x16xf32>,
    %461 = arith.truncf %457 : vector<2x16xf32> to vector<2x16xbf16>
    %cst_342 = arith.constant dense<0.000000e+00> : vector<2x48xf32>
    %462 = tpu.matmul %461, %389, %cst_342 {dimension_numbers = #tpu.dot_dimension_numbers<[1], [0], [0], [1], [0, 0, 1, 1], [], []>} : vector<2x16xbf16>, vector<16x48xbf16>, vector<2x48xf32> -> vector<2x48xf32>
    %463 = vector.extract_strided_slice %387 {offsets = [4, 0], sizes = [2, 48], strides = [1, 1]} : vector<16x48xf32> to vector<2x48xf32>
    %464 = vector.extract_strided_slice %463 {offsets = [0, 0], sizes = [2, 16], strides = [1, 1]} : vector<2x48xf32> to vector<2x16xf32>
    %465 = vector.extract_strided_slice %462 {offsets = [0, 0], sizes = [2, 16], strides = [1, 1]} : vector<2x48xf32> to vector<2x16xf32>
    %466 = arith.addf %464, %465 : vector<2x16xf32>
    %467 = arith.negf %466 : vector<2x16xf32>
    %468 = math.exp %467 : vector<2x16xf32>
    %cst_343 = arith.constant 1.000000e+00 : f32
    %469 = vector.broadcast %cst_343 : f32 to vector<2x16xf32>
    %470 = arith.addf %469, %468 : vector<2x16xf32>
    %471 = arith.divf %469, %470 : vector<2x16xf32>
    %472 = vector.extract_strided_slice %463 {offsets = [0, 16], sizes = [2, 16], strides = [1, 1]} : vector<2x48xf32> to vector<2x16xf32>
    %473 = vector.extract_strided_slice %462 {offsets = [0, 16], sizes = [2, 16], strides = [1, 1]} : vector<2x48xf32> to vector<2x16xf32>
    %474 = arith.addf %472, %473 : vector<2x16xf32>
    %475 = arith.negf %474 : vector<2x16xf32>
    %476 = math.exp %475 : vector<2x16xf32>
    %cst_344 = arith.constant 1.000000e+00 : f32
    %477 = vector.broadcast %cst_344 : f32 to vector<2x16xf32>
    %478 = arith.addf %477, %476 : vector<2x16xf32>
    %479 = arith.divf %477, %478 : vector<2x16xf32>
    %480 = vector.extract_strided_slice %463 {offsets = [0, 32], sizes = [2, 16], strides = [1, 1]} : vector<2x48xf32> to vector<2x16xf32>
    %481 = vector.extract_strided_slice %462 {offsets = [0, 32], sizes = [2, 16], strides = [1, 1]} : vector<2x48xf32> to vector<2x16xf32>
    %482 = vector.broadcast %391 : vector<1x16xf32> to vector<2x16xf32>
    %483 = arith.addf %481, %482 : vector<2x16xf32>
    %484 = arith.mulf %471, %483 : vector<2x16xf32>
    %485 = arith.addf %480, %484 : vector<2x16xf32>
    %486 = math.tanh %485 : vector<2x16xf32>
    %cst_345 = arith.constant 1.000000e+00 : f32
    %487 = vector.broadcast %cst_345 : f32 to vector<2x16xf32>
    %488 = arith.subf %487, %479 : vector<2x16xf32>
    %489 = arith.mulf %488, %486 : vector<2x16xf32>
    %490 = arith.mulf %479, %457 : vector<2x16xf32>
    %491 = arith.addf %489, %490 : vector<2x16xf32>
    %c0_346 = arith.constant 0 : index
    %c4 = arith.constant 4 : index
    %c0_347 = arith.constant 0 : index
    %492 = vector.load %arg25[%c0_346, %c4, %c0_347] : memref<2x16x16xf32, #tpu.memory_space<vmem>>, vector<1x2x16xf32>
    %493 = vector.shape_cast %492 : vector<1x2x16xf32> to vector<2x16xf32>
    %494 = vector.shape_cast %491 : vector<2x16xf32> to vector<1x2x16xf32>
    tpu.vector_store %arg25[%c0_346, %c4, %c0_347], %494 {strides = array<i32>} : memref<2x16x16xf32, #tpu.memory_space<vmem>>, vector<1x2x16xf32>,
    %495 = arith.truncf %491 : vector<2x16xf32> to vector<2x16xbf16>
    %cst_348 = arith.constant dense<0.000000e+00> : vector<2x48xf32>
    %496 = tpu.matmul %495, %389, %cst_348 {dimension_numbers = #tpu.dot_dimension_numbers<[1], [0], [0], [1], [0, 0, 1, 1], [], []>} : vector<2x16xbf16>, vector<16x48xbf16>, vector<2x48xf32> -> vector<2x48xf32>
    %497 = vector.extract_strided_slice %387 {offsets = [6, 0], sizes = [2, 48], strides = [1, 1]} : vector<16x48xf32> to vector<2x48xf32>
    %498 = vector.extract_strided_slice %497 {offsets = [0, 0], sizes = [2, 16], strides = [1, 1]} : vector<2x48xf32> to vector<2x16xf32>
    %499 = vector.extract_strided_slice %496 {offsets = [0, 0], sizes = [2, 16], strides = [1, 1]} : vector<2x48xf32> to vector<2x16xf32>
    %500 = arith.addf %498, %499 : vector<2x16xf32>
    %501 = arith.negf %500 : vector<2x16xf32>
    %502 = math.exp %501 : vector<2x16xf32>
    %cst_349 = arith.constant 1.000000e+00 : f32
    %503 = vector.broadcast %cst_349 : f32 to vector<2x16xf32>
    %504 = arith.addf %503, %502 : vector<2x16xf32>
    %505 = arith.divf %503, %504 : vector<2x16xf32>
    %506 = vector.extract_strided_slice %497 {offsets = [0, 16], sizes = [2, 16], strides = [1, 1]} : vector<2x48xf32> to vector<2x16xf32>
    %507 = vector.extract_strided_slice %496 {offsets = [0, 16], sizes = [2, 16], strides = [1, 1]} : vector<2x48xf32> to vector<2x16xf32>
    %508 = arith.addf %506, %507 : vector<2x16xf32>
    %509 = arith.negf %508 : vector<2x16xf32>
    %510 = math.exp %509 : vector<2x16xf32>
    %cst_350 = arith.constant 1.000000e+00 : f32
    %511 = vector.broadcast %cst_350 : f32 to vector<2x16xf32>
    %512 = arith.addf %511, %510 : vector<2x16xf32>
    %513 = arith.divf %511, %512 : vector<2x16xf32>
    %514 = vector.extract_strided_slice %497 {offsets = [0, 32], sizes = [2, 16], strides = [1, 1]} : vector<2x48xf32> to vector<2x16xf32>
    %515 = vector.extract_strided_slice %496 {offsets = [0, 32], sizes = [2, 16], strides = [1, 1]} : vector<2x48xf32> to vector<2x16xf32>
    %516 = vector.broadcast %391 : vector<1x16xf32> to vector<2x16xf32>
    %517 = arith.addf %515, %516 : vector<2x16xf32>
    %518 = arith.mulf %505, %517 : vector<2x16xf32>
    %519 = arith.addf %514, %518 : vector<2x16xf32>
    %520 = math.tanh %519 : vector<2x16xf32>
    %cst_351 = arith.constant 1.000000e+00 : f32
    %521 = vector.broadcast %cst_351 : f32 to vector<2x16xf32>
    %522 = arith.subf %521, %513 : vector<2x16xf32>
    %523 = arith.mulf %522, %520 : vector<2x16xf32>
    %524 = arith.mulf %513, %491 : vector<2x16xf32>
    %525 = arith.addf %523, %524 : vector<2x16xf32>
    %c0_352 = arith.constant 0 : index
    %c6 = arith.constant 6 : index
    %c0_353 = arith.constant 0 : index
    %526 = vector.load %arg25[%c0_352, %c6, %c0_353] : memref<2x16x16xf32, #tpu.memory_space<vmem>>, vector<1x2x16xf32>
    %527 = vector.shape_cast %526 : vector<1x2x16xf32> to vector<2x16xf32>
    %528 = vector.shape_cast %525 : vector<2x16xf32> to vector<1x2x16xf32>
    tpu.vector_store %arg25[%c0_352, %c6, %c0_353], %528 {strides = array<i32>} : memref<2x16x16xf32, #tpu.memory_space<vmem>>, vector<1x2x16xf32>,
    %529 = arith.truncf %525 : vector<2x16xf32> to vector<2x16xbf16>
    %cst_354 = arith.constant dense<0.000000e+00> : vector<2x48xf32>
    %530 = tpu.matmul %529, %389, %cst_354 {dimension_numbers = #tpu.dot_dimension_numbers<[1], [0], [0], [1], [0, 0, 1, 1], [], []>} : vector<2x16xbf16>, vector<16x48xbf16>, vector<2x48xf32> -> vector<2x48xf32>
    %531 = vector.extract_strided_slice %387 {offsets = [8, 0], sizes = [2, 48], strides = [1, 1]} : vector<16x48xf32> to vector<2x48xf32>
    %532 = vector.extract_strided_slice %531 {offsets = [0, 0], sizes = [2, 16], strides = [1, 1]} : vector<2x48xf32> to vector<2x16xf32>
    %533 = vector.extract_strided_slice %530 {offsets = [0, 0], sizes = [2, 16], strides = [1, 1]} : vector<2x48xf32> to vector<2x16xf32>
    %534 = arith.addf %532, %533 : vector<2x16xf32>
    %535 = arith.negf %534 : vector<2x16xf32>
    %536 = math.exp %535 : vector<2x16xf32>
    %cst_355 = arith.constant 1.000000e+00 : f32
    %537 = vector.broadcast %cst_355 : f32 to vector<2x16xf32>
    %538 = arith.addf %537, %536 : vector<2x16xf32>
    %539 = arith.divf %537, %538 : vector<2x16xf32>
    %540 = vector.extract_strided_slice %531 {offsets = [0, 16], sizes = [2, 16], strides = [1, 1]} : vector<2x48xf32> to vector<2x16xf32>
    %541 = vector.extract_strided_slice %530 {offsets = [0, 16], sizes = [2, 16], strides = [1, 1]} : vector<2x48xf32> to vector<2x16xf32>
    %542 = arith.addf %540, %541 : vector<2x16xf32>
    %543 = arith.negf %542 : vector<2x16xf32>
    %544 = math.exp %543 : vector<2x16xf32>
    %cst_356 = arith.constant 1.000000e+00 : f32
    %545 = vector.broadcast %cst_356 : f32 to vector<2x16xf32>
    %546 = arith.addf %545, %544 : vector<2x16xf32>
    %547 = arith.divf %545, %546 : vector<2x16xf32>
    %548 = vector.extract_strided_slice %531 {offsets = [0, 32], sizes = [2, 16], strides = [1, 1]} : vector<2x48xf32> to vector<2x16xf32>
    %549 = vector.extract_strided_slice %530 {offsets = [0, 32], sizes = [2, 16], strides = [1, 1]} : vector<2x48xf32> to vector<2x16xf32>
    %550 = vector.broadcast %391 : vector<1x16xf32> to vector<2x16xf32>
    %551 = arith.addf %549, %550 : vector<2x16xf32>
    %552 = arith.mulf %539, %551 : vector<2x16xf32>
    %553 = arith.addf %548, %552 : vector<2x16xf32>
    %554 = math.tanh %553 : vector<2x16xf32>
    %cst_357 = arith.constant 1.000000e+00 : f32
    %555 = vector.broadcast %cst_357 : f32 to vector<2x16xf32>
    %556 = arith.subf %555, %547 : vector<2x16xf32>
    %557 = arith.mulf %556, %554 : vector<2x16xf32>
    %558 = arith.mulf %547, %525 : vector<2x16xf32>
    %559 = arith.addf %557, %558 : vector<2x16xf32>
    %c0_358 = arith.constant 0 : index
    %c8 = arith.constant 8 : index
    %c0_359 = arith.constant 0 : index
    %560 = vector.load %arg25[%c0_358, %c8, %c0_359] : memref<2x16x16xf32, #tpu.memory_space<vmem>>, vector<1x2x16xf32>
    %561 = vector.shape_cast %560 : vector<1x2x16xf32> to vector<2x16xf32>
    %562 = vector.shape_cast %559 : vector<2x16xf32> to vector<1x2x16xf32>
    tpu.vector_store %arg25[%c0_358, %c8, %c0_359], %562 {strides = array<i32>} : memref<2x16x16xf32, #tpu.memory_space<vmem>>, vector<1x2x16xf32>,
    %563 = arith.truncf %559 : vector<2x16xf32> to vector<2x16xbf16>
    %cst_360 = arith.constant dense<0.000000e+00> : vector<2x48xf32>
    %564 = tpu.matmul %563, %389, %cst_360 {dimension_numbers = #tpu.dot_dimension_numbers<[1], [0], [0], [1], [0, 0, 1, 1], [], []>} : vector<2x16xbf16>, vector<16x48xbf16>, vector<2x48xf32> -> vector<2x48xf32>
    %565 = vector.extract_strided_slice %387 {offsets = [10, 0], sizes = [2, 48], strides = [1, 1]} : vector<16x48xf32> to vector<2x48xf32>
    %566 = vector.extract_strided_slice %565 {offsets = [0, 0], sizes = [2, 16], strides = [1, 1]} : vector<2x48xf32> to vector<2x16xf32>
    %567 = vector.extract_strided_slice %564 {offsets = [0, 0], sizes = [2, 16], strides = [1, 1]} : vector<2x48xf32> to vector<2x16xf32>
    %568 = arith.addf %566, %567 : vector<2x16xf32>
    %569 = arith.negf %568 : vector<2x16xf32>
    %570 = math.exp %569 : vector<2x16xf32>
    %cst_361 = arith.constant 1.000000e+00 : f32
    %571 = vector.broadcast %cst_361 : f32 to vector<2x16xf32>
    %572 = arith.addf %571, %570 : vector<2x16xf32>
    %573 = arith.divf %571, %572 : vector<2x16xf32>
    %574 = vector.extract_strided_slice %565 {offsets = [0, 16], sizes = [2, 16], strides = [1, 1]} : vector<2x48xf32> to vector<2x16xf32>
    %575 = vector.extract_strided_slice %564 {offsets = [0, 16], sizes = [2, 16], strides = [1, 1]} : vector<2x48xf32> to vector<2x16xf32>
    %576 = arith.addf %574, %575 : vector<2x16xf32>
    %577 = arith.negf %576 : vector<2x16xf32>
    %578 = math.exp %577 : vector<2x16xf32>
    %cst_362 = arith.constant 1.000000e+00 : f32
    %579 = vector.broadcast %cst_362 : f32 to vector<2x16xf32>
    %580 = arith.addf %579, %578 : vector<2x16xf32>
    %581 = arith.divf %579, %580 : vector<2x16xf32>
    %582 = vector.extract_strided_slice %565 {offsets = [0, 32], sizes = [2, 16], strides = [1, 1]} : vector<2x48xf32> to vector<2x16xf32>
    %583 = vector.extract_strided_slice %564 {offsets = [0, 32], sizes = [2, 16], strides = [1, 1]} : vector<2x48xf32> to vector<2x16xf32>
    %584 = vector.broadcast %391 : vector<1x16xf32> to vector<2x16xf32>
    %585 = arith.addf %583, %584 : vector<2x16xf32>
    %586 = arith.mulf %573, %585 : vector<2x16xf32>
    %587 = arith.addf %582, %586 : vector<2x16xf32>
    %588 = math.tanh %587 : vector<2x16xf32>
    %cst_363 = arith.constant 1.000000e+00 : f32
    %589 = vector.broadcast %cst_363 : f32 to vector<2x16xf32>
    %590 = arith.subf %589, %581 : vector<2x16xf32>
    %591 = arith.mulf %590, %588 : vector<2x16xf32>
    %592 = arith.mulf %581, %559 : vector<2x16xf32>
    %593 = arith.addf %591, %592 : vector<2x16xf32>
    %c0_364 = arith.constant 0 : index
    %c10 = arith.constant 10 : index
    %c0_365 = arith.constant 0 : index
    %594 = vector.load %arg25[%c0_364, %c10, %c0_365] : memref<2x16x16xf32, #tpu.memory_space<vmem>>, vector<1x2x16xf32>
    %595 = vector.shape_cast %594 : vector<1x2x16xf32> to vector<2x16xf32>
    %596 = vector.shape_cast %593 : vector<2x16xf32> to vector<1x2x16xf32>
    tpu.vector_store %arg25[%c0_364, %c10, %c0_365], %596 {strides = array<i32>} : memref<2x16x16xf32, #tpu.memory_space<vmem>>, vector<1x2x16xf32>,
    %597 = arith.truncf %593 : vector<2x16xf32> to vector<2x16xbf16>
    %cst_366 = arith.constant dense<0.000000e+00> : vector<2x48xf32>
    %598 = tpu.matmul %597, %389, %cst_366 {dimension_numbers = #tpu.dot_dimension_numbers<[1], [0], [0], [1], [0, 0, 1, 1], [], []>} : vector<2x16xbf16>, vector<16x48xbf16>, vector<2x48xf32> -> vector<2x48xf32>
    %599 = vector.extract_strided_slice %387 {offsets = [12, 0], sizes = [2, 48], strides = [1, 1]} : vector<16x48xf32> to vector<2x48xf32>
    %600 = vector.extract_strided_slice %599 {offsets = [0, 0], sizes = [2, 16], strides = [1, 1]} : vector<2x48xf32> to vector<2x16xf32>
    %601 = vector.extract_strided_slice %598 {offsets = [0, 0], sizes = [2, 16], strides = [1, 1]} : vector<2x48xf32> to vector<2x16xf32>
    %602 = arith.addf %600, %601 : vector<2x16xf32>
    %603 = arith.negf %602 : vector<2x16xf32>
    %604 = math.exp %603 : vector<2x16xf32>
    %cst_367 = arith.constant 1.000000e+00 : f32
    %605 = vector.broadcast %cst_367 : f32 to vector<2x16xf32>
    %606 = arith.addf %605, %604 : vector<2x16xf32>
    %607 = arith.divf %605, %606 : vector<2x16xf32>
    %608 = vector.extract_strided_slice %599 {offsets = [0, 16], sizes = [2, 16], strides = [1, 1]} : vector<2x48xf32> to vector<2x16xf32>
    %609 = vector.extract_strided_slice %598 {offsets = [0, 16], sizes = [2, 16], strides = [1, 1]} : vector<2x48xf32> to vector<2x16xf32>
    %610 = arith.addf %608, %609 : vector<2x16xf32>
    %611 = arith.negf %610 : vector<2x16xf32>
    %612 = math.exp %611 : vector<2x16xf32>
    %cst_368 = arith.constant 1.000000e+00 : f32
    %613 = vector.broadcast %cst_368 : f32 to vector<2x16xf32>
    %614 = arith.addf %613, %612 : vector<2x16xf32>
    %615 = arith.divf %613, %614 : vector<2x16xf32>
    %616 = vector.extract_strided_slice %599 {offsets = [0, 32], sizes = [2, 16], strides = [1, 1]} : vector<2x48xf32> to vector<2x16xf32>
    %617 = vector.extract_strided_slice %598 {offsets = [0, 32], sizes = [2, 16], strides = [1, 1]} : vector<2x48xf32> to vector<2x16xf32>
    %618 = vector.broadcast %391 : vector<1x16xf32> to vector<2x16xf32>
    %619 = arith.addf %617, %618 : vector<2x16xf32>
    %620 = arith.mulf %607, %619 : vector<2x16xf32>
    %621 = arith.addf %616, %620 : vector<2x16xf32>
    %622 = math.tanh %621 : vector<2x16xf32>
    %cst_369 = arith.constant 1.000000e+00 : f32
    %623 = vector.broadcast %cst_369 : f32 to vector<2x16xf32>
    %624 = arith.subf %623, %615 : vector<2x16xf32>
    %625 = arith.mulf %624, %622 : vector<2x16xf32>
    %626 = arith.mulf %615, %593 : vector<2x16xf32>
    %627 = arith.addf %625, %626 : vector<2x16xf32>
    %c0_370 = arith.constant 0 : index
    %c12 = arith.constant 12 : index
    %c0_371 = arith.constant 0 : index
    %628 = vector.load %arg25[%c0_370, %c12, %c0_371] : memref<2x16x16xf32, #tpu.memory_space<vmem>>, vector<1x2x16xf32>
    %629 = vector.shape_cast %628 : vector<1x2x16xf32> to vector<2x16xf32>
    %630 = vector.shape_cast %627 : vector<2x16xf32> to vector<1x2x16xf32>
    tpu.vector_store %arg25[%c0_370, %c12, %c0_371], %630 {strides = array<i32>} : memref<2x16x16xf32, #tpu.memory_space<vmem>>, vector<1x2x16xf32>,
    %631 = arith.truncf %627 : vector<2x16xf32> to vector<2x16xbf16>
    %cst_372 = arith.constant dense<0.000000e+00> : vector<2x48xf32>
    %632 = tpu.matmul %631, %389, %cst_372 {dimension_numbers = #tpu.dot_dimension_numbers<[1], [0], [0], [1], [0, 0, 1, 1], [], []>} : vector<2x16xbf16>, vector<16x48xbf16>, vector<2x48xf32> -> vector<2x48xf32>
    %633 = vector.extract_strided_slice %387 {offsets = [14, 0], sizes = [2, 48], strides = [1, 1]} : vector<16x48xf32> to vector<2x48xf32>
    %634 = vector.extract_strided_slice %633 {offsets = [0, 0], sizes = [2, 16], strides = [1, 1]} : vector<2x48xf32> to vector<2x16xf32>
    %635 = vector.extract_strided_slice %632 {offsets = [0, 0], sizes = [2, 16], strides = [1, 1]} : vector<2x48xf32> to vector<2x16xf32>
    %636 = arith.addf %634, %635 : vector<2x16xf32>
    %637 = arith.negf %636 : vector<2x16xf32>
    %638 = math.exp %637 : vector<2x16xf32>
    %cst_373 = arith.constant 1.000000e+00 : f32
    %639 = vector.broadcast %cst_373 : f32 to vector<2x16xf32>
    %640 = arith.addf %639, %638 : vector<2x16xf32>
    %641 = arith.divf %639, %640 : vector<2x16xf32>
    %642 = vector.extract_strided_slice %633 {offsets = [0, 16], sizes = [2, 16], strides = [1, 1]} : vector<2x48xf32> to vector<2x16xf32>
    %643 = vector.extract_strided_slice %632 {offsets = [0, 16], sizes = [2, 16], strides = [1, 1]} : vector<2x48xf32> to vector<2x16xf32>
    %644 = arith.addf %642, %643 : vector<2x16xf32>
    %645 = arith.negf %644 : vector<2x16xf32>
    %646 = math.exp %645 : vector<2x16xf32>
    %cst_374 = arith.constant 1.000000e+00 : f32
    %647 = vector.broadcast %cst_374 : f32 to vector<2x16xf32>
    %648 = arith.addf %647, %646 : vector<2x16xf32>
    %649 = arith.divf %647, %648 : vector<2x16xf32>
    %650 = vector.extract_strided_slice %633 {offsets = [0, 32], sizes = [2, 16], strides = [1, 1]} : vector<2x48xf32> to vector<2x16xf32>
    %651 = vector.extract_strided_slice %632 {offsets = [0, 32], sizes = [2, 16], strides = [1, 1]} : vector<2x48xf32> to vector<2x16xf32>
    %652 = vector.broadcast %391 : vector<1x16xf32> to vector<2x16xf32>
    %653 = arith.addf %651, %652 : vector<2x16xf32>
    %654 = arith.mulf %641, %653 : vector<2x16xf32>
    %655 = arith.addf %650, %654 : vector<2x16xf32>
    %656 = math.tanh %655 : vector<2x16xf32>
    %cst_375 = arith.constant 1.000000e+00 : f32
    %657 = vector.broadcast %cst_375 : f32 to vector<2x16xf32>
    %658 = arith.subf %657, %649 : vector<2x16xf32>
    %659 = arith.mulf %658, %656 : vector<2x16xf32>
    %660 = arith.mulf %649, %627 : vector<2x16xf32>
    %661 = arith.addf %659, %660 : vector<2x16xf32>
    %c0_376 = arith.constant 0 : index
    %c14 = arith.constant 14 : index
    %c0_377 = arith.constant 0 : index
    %662 = vector.load %arg25[%c0_376, %c14, %c0_377] : memref<2x16x16xf32, #tpu.memory_space<vmem>>, vector<1x2x16xf32>
    %663 = vector.shape_cast %662 : vector<1x2x16xf32> to vector<2x16xf32>
    %664 = vector.shape_cast %661 : vector<2x16xf32> to vector<1x2x16xf32>
    tpu.vector_store %arg25[%c0_376, %c14, %c0_377], %664 {strides = array<i32>} : memref<2x16x16xf32, #tpu.memory_space<vmem>>, vector<1x2x16xf32>,
    %c0_378 = arith.constant 0 : index
    %c0_379 = arith.constant 0 : index
    %c0_380 = arith.constant 0 : index
    %665 = vector.load %arg25[%c0_378, %c0_379, %c0_380] : memref<2x16x16xf32, #tpu.memory_space<vmem>>, vector<1x16x16xf32>
    %666 = vector.shape_cast %665 : vector<1x16x16xf32> to vector<16x16xf32>
    %c0_381 = arith.constant 0 : index
    %c0_382 = arith.constant 0 : index
    %c0_383 = arith.constant 0 : index
    %667 = vector.load %arg23[%c0_381, %c0_382, %c0_383] : memref<2x16x16xbf16, #tpu.memory_space<vmem>>, vector<1x16x16xbf16>
    %668 = vector.shape_cast %667 : vector<1x16x16xbf16> to vector<16x16xbf16>
    %669 = arith.truncf %666 : vector<16x16xf32> to vector<16x16xbf16>
    %cst_384 = arith.constant dense<0.000000e+00> : vector<16x16xf32>
    %670 = tpu.matmul %669, %668, %cst_384 {dimension_numbers = #tpu.dot_dimension_numbers<[1], [0], [0], [1], [0, 0, 1, 1], [], []>} : vector<16x16xbf16>, vector<16x16xbf16>, vector<16x16xf32> -> vector<16x16xf32>
    %671 = vector.extract_strided_slice %371 {offsets = [0, 16], sizes = [16, 16], strides = [1, 1]} : vector<16x32xf32> to vector<16x16xf32>
    %c1_385 = arith.constant 1 : index
    %c0_386 = arith.constant 0 : index
    %c0_387 = arith.constant 0 : index
    %672 = vector.load %arg2[%c1_385, %c0_386, %c0_387] : memref<2x16x16xf32, #tpu.memory_space<vmem>>, vector<1x16x16xf32>
    %673 = vector.shape_cast %672 : vector<1x16x16xf32> to vector<16x16xf32>
    %674 = arith.mulf %673, %365 : vector<16x16xf32>
    %c1_388 = arith.constant 1 : index
    %c0_389 = arith.constant 0 : index
    %c0_390 = arith.constant 0 : index
    %675 = vector.load %arg1[%c1_388, %c0_389, %c0_390] : memref<2x16x16xf32, #tpu.memory_space<vmem>>, vector<1x16x16xf32>
    %676 = vector.shape_cast %675 : vector<1x16x16xf32> to vector<16x16xf32>
    %677 = arith.addf %676, %671 : vector<16x16xf32>
    %678 = tpu.concatenate %674, %677 in 1 : vector<16x16xf32>, vector<16x16xf32> -> vector<16x32xf32>
    %c1_391 = arith.constant 1 : index
    %c0_392 = arith.constant 0 : index
    %c0_393 = arith.constant 0 : index
    %679 = vector.load %arg19[%c1_391, %c0_392, %c0_393] : memref<2x32x48xbf16, #tpu.memory_space<vmem>>, vector<1x32x48xbf16>
    %680 = vector.shape_cast %679 : vector<1x32x48xbf16> to vector<32x48xbf16>
    %681 = arith.truncf %678 : vector<16x32xf32> to vector<16x32xbf16>
    %cst_394 = arith.constant dense<0.000000e+00> : vector<16x48xf32>
    %682 = tpu.matmul %681, %680, %cst_394 {dimension_numbers = #tpu.dot_dimension_numbers<[1], [0], [0], [1], [0, 0, 1, 1], [], []>} : vector<16x32xbf16>, vector<32x48xbf16>, vector<16x48xf32> -> vector<16x48xf32>
    %c1_395 = arith.constant 1 : index
    %c0_396 = arith.constant 0 : index
    %c0_397 = arith.constant 0 : index
    %683 = vector.load %arg20[%c1_395, %c0_396, %c0_397] : memref<2x1x48xf32, #tpu.memory_space<vmem>>, vector<1x1x48xf32>
    %684 = vector.shape_cast %683 : vector<1x1x48xf32> to vector<1x48xf32>
    %685 = vector.broadcast %684 : vector<1x48xf32> to vector<16x48xf32>
    %686 = arith.addf %682, %685 : vector<16x48xf32>
    %c1_398 = arith.constant 1 : index
    %c0_399 = arith.constant 0 : index
    %c0_400 = arith.constant 0 : index
    %687 = vector.load %arg21[%c1_398, %c0_399, %c0_400] : memref<2x16x48xbf16, #tpu.memory_space<vmem>>, vector<1x16x48xbf16>
    %688 = vector.shape_cast %687 : vector<1x16x48xbf16> to vector<16x48xbf16>
    %c1_401 = arith.constant 1 : index
    %c0_402 = arith.constant 0 : index
    %c0_403 = arith.constant 0 : index
    %689 = vector.load %arg22[%c1_401, %c0_402, %c0_403] : memref<2x1x16xf32, #tpu.memory_space<vmem>>, vector<1x1x16xf32>
    %690 = vector.shape_cast %689 : vector<1x1x16xf32> to vector<1x16xf32>
    %cst_404 = arith.constant 0.000000e+00 : f32
    %691 = vector.broadcast %cst_404 : f32 to vector<2x16xf32>
    %692 = arith.truncf %691 : vector<2x16xf32> to vector<2x16xbf16>
    %cst_405 = arith.constant dense<0.000000e+00> : vector<2x48xf32>
    %693 = tpu.matmul %692, %688, %cst_405 {dimension_numbers = #tpu.dot_dimension_numbers<[1], [0], [0], [1], [0, 0, 1, 1], [], []>} : vector<2x16xbf16>, vector<16x48xbf16>, vector<2x48xf32> -> vector<2x48xf32>
    %694 = vector.extract_strided_slice %686 {offsets = [0, 0], sizes = [2, 48], strides = [1, 1]} : vector<16x48xf32> to vector<2x48xf32>
    %695 = vector.extract_strided_slice %694 {offsets = [0, 0], sizes = [2, 16], strides = [1, 1]} : vector<2x48xf32> to vector<2x16xf32>
    %696 = vector.extract_strided_slice %693 {offsets = [0, 0], sizes = [2, 16], strides = [1, 1]} : vector<2x48xf32> to vector<2x16xf32>
    %697 = arith.addf %695, %696 : vector<2x16xf32>
    %698 = arith.negf %697 : vector<2x16xf32>
    %699 = math.exp %698 : vector<2x16xf32>
    %cst_406 = arith.constant 1.000000e+00 : f32
    %700 = vector.broadcast %cst_406 : f32 to vector<2x16xf32>
    %701 = arith.addf %700, %699 : vector<2x16xf32>
    %702 = arith.divf %700, %701 : vector<2x16xf32>
    %703 = vector.extract_strided_slice %694 {offsets = [0, 16], sizes = [2, 16], strides = [1, 1]} : vector<2x48xf32> to vector<2x16xf32>
    %704 = vector.extract_strided_slice %693 {offsets = [0, 16], sizes = [2, 16], strides = [1, 1]} : vector<2x48xf32> to vector<2x16xf32>
    %705 = arith.addf %703, %704 : vector<2x16xf32>
    %706 = arith.negf %705 : vector<2x16xf32>
    %707 = math.exp %706 : vector<2x16xf32>
    %cst_407 = arith.constant 1.000000e+00 : f32
    %708 = vector.broadcast %cst_407 : f32 to vector<2x16xf32>
    %709 = arith.addf %708, %707 : vector<2x16xf32>
    %710 = arith.divf %708, %709 : vector<2x16xf32>
    %711 = vector.extract_strided_slice %694 {offsets = [0, 32], sizes = [2, 16], strides = [1, 1]} : vector<2x48xf32> to vector<2x16xf32>
    %712 = vector.extract_strided_slice %693 {offsets = [0, 32], sizes = [2, 16], strides = [1, 1]} : vector<2x48xf32> to vector<2x16xf32>
    %713 = vector.broadcast %690 : vector<1x16xf32> to vector<2x16xf32>
    %714 = arith.addf %712, %713 : vector<2x16xf32>
    %715 = arith.mulf %702, %714 : vector<2x16xf32>
    %716 = arith.addf %711, %715 : vector<2x16xf32>
    %717 = math.tanh %716 : vector<2x16xf32>
    %cst_408 = arith.constant 1.000000e+00 : f32
    %718 = vector.broadcast %cst_408 : f32 to vector<2x16xf32>
    %719 = arith.subf %718, %710 : vector<2x16xf32>
    %720 = arith.mulf %719, %717 : vector<2x16xf32>
    %721 = arith.mulf %710, %691 : vector<2x16xf32>
    %722 = arith.addf %720, %721 : vector<2x16xf32>
    %c1_409 = arith.constant 1 : index
    %c0_410 = arith.constant 0 : index
    %c0_411 = arith.constant 0 : index
    %723 = vector.load %arg25[%c1_409, %c0_410, %c0_411] : memref<2x16x16xf32, #tpu.memory_space<vmem>>, vector<1x2x16xf32>
    %724 = vector.shape_cast %723 : vector<1x2x16xf32> to vector<2x16xf32>
    %725 = vector.shape_cast %722 : vector<2x16xf32> to vector<1x2x16xf32>
    tpu.vector_store %arg25[%c1_409, %c0_410, %c0_411], %725 {strides = array<i32>} : memref<2x16x16xf32, #tpu.memory_space<vmem>>, vector<1x2x16xf32>,
    %726 = arith.truncf %722 : vector<2x16xf32> to vector<2x16xbf16>
    %cst_412 = arith.constant dense<0.000000e+00> : vector<2x48xf32>
    %727 = tpu.matmul %726, %688, %cst_412 {dimension_numbers = #tpu.dot_dimension_numbers<[1], [0], [0], [1], [0, 0, 1, 1], [], []>} : vector<2x16xbf16>, vector<16x48xbf16>, vector<2x48xf32> -> vector<2x48xf32>
    %728 = vector.extract_strided_slice %686 {offsets = [2, 0], sizes = [2, 48], strides = [1, 1]} : vector<16x48xf32> to vector<2x48xf32>
    %729 = vector.extract_strided_slice %728 {offsets = [0, 0], sizes = [2, 16], strides = [1, 1]} : vector<2x48xf32> to vector<2x16xf32>
    %730 = vector.extract_strided_slice %727 {offsets = [0, 0], sizes = [2, 16], strides = [1, 1]} : vector<2x48xf32> to vector<2x16xf32>
    %731 = arith.addf %729, %730 : vector<2x16xf32>
    %732 = arith.negf %731 : vector<2x16xf32>
    %733 = math.exp %732 : vector<2x16xf32>
    %cst_413 = arith.constant 1.000000e+00 : f32
    %734 = vector.broadcast %cst_413 : f32 to vector<2x16xf32>
    %735 = arith.addf %734, %733 : vector<2x16xf32>
    %736 = arith.divf %734, %735 : vector<2x16xf32>
    %737 = vector.extract_strided_slice %728 {offsets = [0, 16], sizes = [2, 16], strides = [1, 1]} : vector<2x48xf32> to vector<2x16xf32>
    %738 = vector.extract_strided_slice %727 {offsets = [0, 16], sizes = [2, 16], strides = [1, 1]} : vector<2x48xf32> to vector<2x16xf32>
    %739 = arith.addf %737, %738 : vector<2x16xf32>
    %740 = arith.negf %739 : vector<2x16xf32>
    %741 = math.exp %740 : vector<2x16xf32>
    %cst_414 = arith.constant 1.000000e+00 : f32
    %742 = vector.broadcast %cst_414 : f32 to vector<2x16xf32>
    %743 = arith.addf %742, %741 : vector<2x16xf32>
    %744 = arith.divf %742, %743 : vector<2x16xf32>
    %745 = vector.extract_strided_slice %728 {offsets = [0, 32], sizes = [2, 16], strides = [1, 1]} : vector<2x48xf32> to vector<2x16xf32>
    %746 = vector.extract_strided_slice %727 {offsets = [0, 32], sizes = [2, 16], strides = [1, 1]} : vector<2x48xf32> to vector<2x16xf32>
    %747 = vector.broadcast %690 : vector<1x16xf32> to vector<2x16xf32>
    %748 = arith.addf %746, %747 : vector<2x16xf32>
    %749 = arith.mulf %736, %748 : vector<2x16xf32>
    %750 = arith.addf %745, %749 : vector<2x16xf32>
    %751 = math.tanh %750 : vector<2x16xf32>
    %cst_415 = arith.constant 1.000000e+00 : f32
    %752 = vector.broadcast %cst_415 : f32 to vector<2x16xf32>
    %753 = arith.subf %752, %744 : vector<2x16xf32>
    %754 = arith.mulf %753, %751 : vector<2x16xf32>
    %755 = arith.mulf %744, %722 : vector<2x16xf32>
    %756 = arith.addf %754, %755 : vector<2x16xf32>
    %c1_416 = arith.constant 1 : index
    %c2_417 = arith.constant 2 : index
    %c0_418 = arith.constant 0 : index
    %757 = vector.load %arg25[%c1_416, %c2_417, %c0_418] : memref<2x16x16xf32, #tpu.memory_space<vmem>>, vector<1x2x16xf32>
    %758 = vector.shape_cast %757 : vector<1x2x16xf32> to vector<2x16xf32>
    %759 = vector.shape_cast %756 : vector<2x16xf32> to vector<1x2x16xf32>
    tpu.vector_store %arg25[%c1_416, %c2_417, %c0_418], %759 {strides = array<i32>} : memref<2x16x16xf32, #tpu.memory_space<vmem>>, vector<1x2x16xf32>,
    %760 = arith.truncf %756 : vector<2x16xf32> to vector<2x16xbf16>
    %cst_419 = arith.constant dense<0.000000e+00> : vector<2x48xf32>
    %761 = tpu.matmul %760, %688, %cst_419 {dimension_numbers = #tpu.dot_dimension_numbers<[1], [0], [0], [1], [0, 0, 1, 1], [], []>} : vector<2x16xbf16>, vector<16x48xbf16>, vector<2x48xf32> -> vector<2x48xf32>
    %762 = vector.extract_strided_slice %686 {offsets = [4, 0], sizes = [2, 48], strides = [1, 1]} : vector<16x48xf32> to vector<2x48xf32>
    %763 = vector.extract_strided_slice %762 {offsets = [0, 0], sizes = [2, 16], strides = [1, 1]} : vector<2x48xf32> to vector<2x16xf32>
    %764 = vector.extract_strided_slice %761 {offsets = [0, 0], sizes = [2, 16], strides = [1, 1]} : vector<2x48xf32> to vector<2x16xf32>
    %765 = arith.addf %763, %764 : vector<2x16xf32>
    %766 = arith.negf %765 : vector<2x16xf32>
    %767 = math.exp %766 : vector<2x16xf32>
    %cst_420 = arith.constant 1.000000e+00 : f32
    %768 = vector.broadcast %cst_420 : f32 to vector<2x16xf32>
    %769 = arith.addf %768, %767 : vector<2x16xf32>
    %770 = arith.divf %768, %769 : vector<2x16xf32>
    %771 = vector.extract_strided_slice %762 {offsets = [0, 16], sizes = [2, 16], strides = [1, 1]} : vector<2x48xf32> to vector<2x16xf32>
    %772 = vector.extract_strided_slice %761 {offsets = [0, 16], sizes = [2, 16], strides = [1, 1]} : vector<2x48xf32> to vector<2x16xf32>
    %773 = arith.addf %771, %772 : vector<2x16xf32>
    %774 = arith.negf %773 : vector<2x16xf32>
    %775 = math.exp %774 : vector<2x16xf32>
    %cst_421 = arith.constant 1.000000e+00 : f32
    %776 = vector.broadcast %cst_421 : f32 to vector<2x16xf32>
    %777 = arith.addf %776, %775 : vector<2x16xf32>
    %778 = arith.divf %776, %777 : vector<2x16xf32>
    %779 = vector.extract_strided_slice %762 {offsets = [0, 32], sizes = [2, 16], strides = [1, 1]} : vector<2x48xf32> to vector<2x16xf32>
    %780 = vector.extract_strided_slice %761 {offsets = [0, 32], sizes = [2, 16], strides = [1, 1]} : vector<2x48xf32> to vector<2x16xf32>
    %781 = vector.broadcast %690 : vector<1x16xf32> to vector<2x16xf32>
    %782 = arith.addf %780, %781 : vector<2x16xf32>
    %783 = arith.mulf %770, %782 : vector<2x16xf32>
    %784 = arith.addf %779, %783 : vector<2x16xf32>
    %785 = math.tanh %784 : vector<2x16xf32>
    %cst_422 = arith.constant 1.000000e+00 : f32
    %786 = vector.broadcast %cst_422 : f32 to vector<2x16xf32>
    %787 = arith.subf %786, %778 : vector<2x16xf32>
    %788 = arith.mulf %787, %785 : vector<2x16xf32>
    %789 = arith.mulf %778, %756 : vector<2x16xf32>
    %790 = arith.addf %788, %789 : vector<2x16xf32>
    %c1_423 = arith.constant 1 : index
    %c4_424 = arith.constant 4 : index
    %c0_425 = arith.constant 0 : index
    %791 = vector.load %arg25[%c1_423, %c4_424, %c0_425] : memref<2x16x16xf32, #tpu.memory_space<vmem>>, vector<1x2x16xf32>
    %792 = vector.shape_cast %791 : vector<1x2x16xf32> to vector<2x16xf32>
    %793 = vector.shape_cast %790 : vector<2x16xf32> to vector<1x2x16xf32>
    tpu.vector_store %arg25[%c1_423, %c4_424, %c0_425], %793 {strides = array<i32>} : memref<2x16x16xf32, #tpu.memory_space<vmem>>, vector<1x2x16xf32>,
    %794 = arith.truncf %790 : vector<2x16xf32> to vector<2x16xbf16>
    %cst_426 = arith.constant dense<0.000000e+00> : vector<2x48xf32>
    %795 = tpu.matmul %794, %688, %cst_426 {dimension_numbers = #tpu.dot_dimension_numbers<[1], [0], [0], [1], [0, 0, 1, 1], [], []>} : vector<2x16xbf16>, vector<16x48xbf16>, vector<2x48xf32> -> vector<2x48xf32>
    %796 = vector.extract_strided_slice %686 {offsets = [6, 0], sizes = [2, 48], strides = [1, 1]} : vector<16x48xf32> to vector<2x48xf32>
    %797 = vector.extract_strided_slice %796 {offsets = [0, 0], sizes = [2, 16], strides = [1, 1]} : vector<2x48xf32> to vector<2x16xf32>
    %798 = vector.extract_strided_slice %795 {offsets = [0, 0], sizes = [2, 16], strides = [1, 1]} : vector<2x48xf32> to vector<2x16xf32>
    %799 = arith.addf %797, %798 : vector<2x16xf32>
    %800 = arith.negf %799 : vector<2x16xf32>
    %801 = math.exp %800 : vector<2x16xf32>
    %cst_427 = arith.constant 1.000000e+00 : f32
    %802 = vector.broadcast %cst_427 : f32 to vector<2x16xf32>
    %803 = arith.addf %802, %801 : vector<2x16xf32>
    %804 = arith.divf %802, %803 : vector<2x16xf32>
    %805 = vector.extract_strided_slice %796 {offsets = [0, 16], sizes = [2, 16], strides = [1, 1]} : vector<2x48xf32> to vector<2x16xf32>
    %806 = vector.extract_strided_slice %795 {offsets = [0, 16], sizes = [2, 16], strides = [1, 1]} : vector<2x48xf32> to vector<2x16xf32>
    %807 = arith.addf %805, %806 : vector<2x16xf32>
    %808 = arith.negf %807 : vector<2x16xf32>
    %809 = math.exp %808 : vector<2x16xf32>
    %cst_428 = arith.constant 1.000000e+00 : f32
    %810 = vector.broadcast %cst_428 : f32 to vector<2x16xf32>
    %811 = arith.addf %810, %809 : vector<2x16xf32>
    %812 = arith.divf %810, %811 : vector<2x16xf32>
    %813 = vector.extract_strided_slice %796 {offsets = [0, 32], sizes = [2, 16], strides = [1, 1]} : vector<2x48xf32> to vector<2x16xf32>
    %814 = vector.extract_strided_slice %795 {offsets = [0, 32], sizes = [2, 16], strides = [1, 1]} : vector<2x48xf32> to vector<2x16xf32>
    %815 = vector.broadcast %690 : vector<1x16xf32> to vector<2x16xf32>
    %816 = arith.addf %814, %815 : vector<2x16xf32>
    %817 = arith.mulf %804, %816 : vector<2x16xf32>
    %818 = arith.addf %813, %817 : vector<2x16xf32>
    %819 = math.tanh %818 : vector<2x16xf32>
    %cst_429 = arith.constant 1.000000e+00 : f32
    %820 = vector.broadcast %cst_429 : f32 to vector<2x16xf32>
    %821 = arith.subf %820, %812 : vector<2x16xf32>
    %822 = arith.mulf %821, %819 : vector<2x16xf32>
    %823 = arith.mulf %812, %790 : vector<2x16xf32>
    %824 = arith.addf %822, %823 : vector<2x16xf32>
    %c1_430 = arith.constant 1 : index
    %c6_431 = arith.constant 6 : index
    %c0_432 = arith.constant 0 : index
    %825 = vector.load %arg25[%c1_430, %c6_431, %c0_432] : memref<2x16x16xf32, #tpu.memory_space<vmem>>, vector<1x2x16xf32>
    %826 = vector.shape_cast %825 : vector<1x2x16xf32> to vector<2x16xf32>
    %827 = vector.shape_cast %824 : vector<2x16xf32> to vector<1x2x16xf32>
    tpu.vector_store %arg25[%c1_430, %c6_431, %c0_432], %827 {strides = array<i32>} : memref<2x16x16xf32, #tpu.memory_space<vmem>>, vector<1x2x16xf32>,
    %828 = arith.truncf %824 : vector<2x16xf32> to vector<2x16xbf16>
    %cst_433 = arith.constant dense<0.000000e+00> : vector<2x48xf32>
    %829 = tpu.matmul %828, %688, %cst_433 {dimension_numbers = #tpu.dot_dimension_numbers<[1], [0], [0], [1], [0, 0, 1, 1], [], []>} : vector<2x16xbf16>, vector<16x48xbf16>, vector<2x48xf32> -> vector<2x48xf32>
    %830 = vector.extract_strided_slice %686 {offsets = [8, 0], sizes = [2, 48], strides = [1, 1]} : vector<16x48xf32> to vector<2x48xf32>
    %831 = vector.extract_strided_slice %830 {offsets = [0, 0], sizes = [2, 16], strides = [1, 1]} : vector<2x48xf32> to vector<2x16xf32>
    %832 = vector.extract_strided_slice %829 {offsets = [0, 0], sizes = [2, 16], strides = [1, 1]} : vector<2x48xf32> to vector<2x16xf32>
    %833 = arith.addf %831, %832 : vector<2x16xf32>
    %834 = arith.negf %833 : vector<2x16xf32>
    %835 = math.exp %834 : vector<2x16xf32>
    %cst_434 = arith.constant 1.000000e+00 : f32
    %836 = vector.broadcast %cst_434 : f32 to vector<2x16xf32>
    %837 = arith.addf %836, %835 : vector<2x16xf32>
    %838 = arith.divf %836, %837 : vector<2x16xf32>
    %839 = vector.extract_strided_slice %830 {offsets = [0, 16], sizes = [2, 16], strides = [1, 1]} : vector<2x48xf32> to vector<2x16xf32>
    %840 = vector.extract_strided_slice %829 {offsets = [0, 16], sizes = [2, 16], strides = [1, 1]} : vector<2x48xf32> to vector<2x16xf32>
    %841 = arith.addf %839, %840 : vector<2x16xf32>
    %842 = arith.negf %841 : vector<2x16xf32>
    %843 = math.exp %842 : vector<2x16xf32>
    %cst_435 = arith.constant 1.000000e+00 : f32
    %844 = vector.broadcast %cst_435 : f32 to vector<2x16xf32>
    %845 = arith.addf %844, %843 : vector<2x16xf32>
    %846 = arith.divf %844, %845 : vector<2x16xf32>
    %847 = vector.extract_strided_slice %830 {offsets = [0, 32], sizes = [2, 16], strides = [1, 1]} : vector<2x48xf32> to vector<2x16xf32>
    %848 = vector.extract_strided_slice %829 {offsets = [0, 32], sizes = [2, 16], strides = [1, 1]} : vector<2x48xf32> to vector<2x16xf32>
    %849 = vector.broadcast %690 : vector<1x16xf32> to vector<2x16xf32>
    %850 = arith.addf %848, %849 : vector<2x16xf32>
    %851 = arith.mulf %838, %850 : vector<2x16xf32>
    %852 = arith.addf %847, %851 : vector<2x16xf32>
    %853 = math.tanh %852 : vector<2x16xf32>
    %cst_436 = arith.constant 1.000000e+00 : f32
    %854 = vector.broadcast %cst_436 : f32 to vector<2x16xf32>
    %855 = arith.subf %854, %846 : vector<2x16xf32>
    %856 = arith.mulf %855, %853 : vector<2x16xf32>
    %857 = arith.mulf %846, %824 : vector<2x16xf32>
    %858 = arith.addf %856, %857 : vector<2x16xf32>
    %c1_437 = arith.constant 1 : index
    %c8_438 = arith.constant 8 : index
    %c0_439 = arith.constant 0 : index
    %859 = vector.load %arg25[%c1_437, %c8_438, %c0_439] : memref<2x16x16xf32, #tpu.memory_space<vmem>>, vector<1x2x16xf32>
    %860 = vector.shape_cast %859 : vector<1x2x16xf32> to vector<2x16xf32>
    %861 = vector.shape_cast %858 : vector<2x16xf32> to vector<1x2x16xf32>
    tpu.vector_store %arg25[%c1_437, %c8_438, %c0_439], %861 {strides = array<i32>} : memref<2x16x16xf32, #tpu.memory_space<vmem>>, vector<1x2x16xf32>,
    %862 = arith.truncf %858 : vector<2x16xf32> to vector<2x16xbf16>
    %cst_440 = arith.constant dense<0.000000e+00> : vector<2x48xf32>
    %863 = tpu.matmul %862, %688, %cst_440 {dimension_numbers = #tpu.dot_dimension_numbers<[1], [0], [0], [1], [0, 0, 1, 1], [], []>} : vector<2x16xbf16>, vector<16x48xbf16>, vector<2x48xf32> -> vector<2x48xf32>
    %864 = vector.extract_strided_slice %686 {offsets = [10, 0], sizes = [2, 48], strides = [1, 1]} : vector<16x48xf32> to vector<2x48xf32>
    %865 = vector.extract_strided_slice %864 {offsets = [0, 0], sizes = [2, 16], strides = [1, 1]} : vector<2x48xf32> to vector<2x16xf32>
    %866 = vector.extract_strided_slice %863 {offsets = [0, 0], sizes = [2, 16], strides = [1, 1]} : vector<2x48xf32> to vector<2x16xf32>
    %867 = arith.addf %865, %866 : vector<2x16xf32>
    %868 = arith.negf %867 : vector<2x16xf32>
    %869 = math.exp %868 : vector<2x16xf32>
    %cst_441 = arith.constant 1.000000e+00 : f32
    %870 = vector.broadcast %cst_441 : f32 to vector<2x16xf32>
    %871 = arith.addf %870, %869 : vector<2x16xf32>
    %872 = arith.divf %870, %871 : vector<2x16xf32>
    %873 = vector.extract_strided_slice %864 {offsets = [0, 16], sizes = [2, 16], strides = [1, 1]} : vector<2x48xf32> to vector<2x16xf32>
    %874 = vector.extract_strided_slice %863 {offsets = [0, 16], sizes = [2, 16], strides = [1, 1]} : vector<2x48xf32> to vector<2x16xf32>
    %875 = arith.addf %873, %874 : vector<2x16xf32>
    %876 = arith.negf %875 : vector<2x16xf32>
    %877 = math.exp %876 : vector<2x16xf32>
    %cst_442 = arith.constant 1.000000e+00 : f32
    %878 = vector.broadcast %cst_442 : f32 to vector<2x16xf32>
    %879 = arith.addf %878, %877 : vector<2x16xf32>
    %880 = arith.divf %878, %879 : vector<2x16xf32>
    %881 = vector.extract_strided_slice %864 {offsets = [0, 32], sizes = [2, 16], strides = [1, 1]} : vector<2x48xf32> to vector<2x16xf32>
    %882 = vector.extract_strided_slice %863 {offsets = [0, 32], sizes = [2, 16], strides = [1, 1]} : vector<2x48xf32> to vector<2x16xf32>
    %883 = vector.broadcast %690 : vector<1x16xf32> to vector<2x16xf32>
    %884 = arith.addf %882, %883 : vector<2x16xf32>
    %885 = arith.mulf %872, %884 : vector<2x16xf32>
    %886 = arith.addf %881, %885 : vector<2x16xf32>
    %887 = math.tanh %886 : vector<2x16xf32>
    %cst_443 = arith.constant 1.000000e+00 : f32
    %888 = vector.broadcast %cst_443 : f32 to vector<2x16xf32>
    %889 = arith.subf %888, %880 : vector<2x16xf32>
    %890 = arith.mulf %889, %887 : vector<2x16xf32>
    %891 = arith.mulf %880, %858 : vector<2x16xf32>
    %892 = arith.addf %890, %891 : vector<2x16xf32>
    %c1_444 = arith.constant 1 : index
    %c10_445 = arith.constant 10 : index
    %c0_446 = arith.constant 0 : index
    %893 = vector.load %arg25[%c1_444, %c10_445, %c0_446] : memref<2x16x16xf32, #tpu.memory_space<vmem>>, vector<1x2x16xf32>
    %894 = vector.shape_cast %893 : vector<1x2x16xf32> to vector<2x16xf32>
    %895 = vector.shape_cast %892 : vector<2x16xf32> to vector<1x2x16xf32>
    tpu.vector_store %arg25[%c1_444, %c10_445, %c0_446], %895 {strides = array<i32>} : memref<2x16x16xf32, #tpu.memory_space<vmem>>, vector<1x2x16xf32>,
    %896 = arith.truncf %892 : vector<2x16xf32> to vector<2x16xbf16>
    %cst_447 = arith.constant dense<0.000000e+00> : vector<2x48xf32>
    %897 = tpu.matmul %896, %688, %cst_447 {dimension_numbers = #tpu.dot_dimension_numbers<[1], [0], [0], [1], [0, 0, 1, 1], [], []>} : vector<2x16xbf16>, vector<16x48xbf16>, vector<2x48xf32> -> vector<2x48xf32>
    %898 = vector.extract_strided_slice %686 {offsets = [12, 0], sizes = [2, 48], strides = [1, 1]} : vector<16x48xf32> to vector<2x48xf32>
    %899 = vector.extract_strided_slice %898 {offsets = [0, 0], sizes = [2, 16], strides = [1, 1]} : vector<2x48xf32> to vector<2x16xf32>
    %900 = vector.extract_strided_slice %897 {offsets = [0, 0], sizes = [2, 16], strides = [1, 1]} : vector<2x48xf32> to vector<2x16xf32>
    %901 = arith.addf %899, %900 : vector<2x16xf32>
    %902 = arith.negf %901 : vector<2x16xf32>
    %903 = math.exp %902 : vector<2x16xf32>
    %cst_448 = arith.constant 1.000000e+00 : f32
    %904 = vector.broadcast %cst_448 : f32 to vector<2x16xf32>
    %905 = arith.addf %904, %903 : vector<2x16xf32>
    %906 = arith.divf %904, %905 : vector<2x16xf32>
    %907 = vector.extract_strided_slice %898 {offsets = [0, 16], sizes = [2, 16], strides = [1, 1]} : vector<2x48xf32> to vector<2x16xf32>
    %908 = vector.extract_strided_slice %897 {offsets = [0, 16], sizes = [2, 16], strides = [1, 1]} : vector<2x48xf32> to vector<2x16xf32>
    %909 = arith.addf %907, %908 : vector<2x16xf32>
    %910 = arith.negf %909 : vector<2x16xf32>
    %911 = math.exp %910 : vector<2x16xf32>
    %cst_449 = arith.constant 1.000000e+00 : f32
    %912 = vector.broadcast %cst_449 : f32 to vector<2x16xf32>
    %913 = arith.addf %912, %911 : vector<2x16xf32>
    %914 = arith.divf %912, %913 : vector<2x16xf32>
    %915 = vector.extract_strided_slice %898 {offsets = [0, 32], sizes = [2, 16], strides = [1, 1]} : vector<2x48xf32> to vector<2x16xf32>
    %916 = vector.extract_strided_slice %897 {offsets = [0, 32], sizes = [2, 16], strides = [1, 1]} : vector<2x48xf32> to vector<2x16xf32>
    %917 = vector.broadcast %690 : vector<1x16xf32> to vector<2x16xf32>
    %918 = arith.addf %916, %917 : vector<2x16xf32>
    %919 = arith.mulf %906, %918 : vector<2x16xf32>
    %920 = arith.addf %915, %919 : vector<2x16xf32>
    %921 = math.tanh %920 : vector<2x16xf32>
    %cst_450 = arith.constant 1.000000e+00 : f32
    %922 = vector.broadcast %cst_450 : f32 to vector<2x16xf32>
    %923 = arith.subf %922, %914 : vector<2x16xf32>
    %924 = arith.mulf %923, %921 : vector<2x16xf32>
    %925 = arith.mulf %914, %892 : vector<2x16xf32>
    %926 = arith.addf %924, %925 : vector<2x16xf32>
    %c1_451 = arith.constant 1 : index
    %c12_452 = arith.constant 12 : index
    %c0_453 = arith.constant 0 : index
    %927 = vector.load %arg25[%c1_451, %c12_452, %c0_453] : memref<2x16x16xf32, #tpu.memory_space<vmem>>, vector<1x2x16xf32>
    %928 = vector.shape_cast %927 : vector<1x2x16xf32> to vector<2x16xf32>
    %929 = vector.shape_cast %926 : vector<2x16xf32> to vector<1x2x16xf32>
    tpu.vector_store %arg25[%c1_451, %c12_452, %c0_453], %929 {strides = array<i32>} : memref<2x16x16xf32, #tpu.memory_space<vmem>>, vector<1x2x16xf32>,
    %930 = arith.truncf %926 : vector<2x16xf32> to vector<2x16xbf16>
    %cst_454 = arith.constant dense<0.000000e+00> : vector<2x48xf32>
    %931 = tpu.matmul %930, %688, %cst_454 {dimension_numbers = #tpu.dot_dimension_numbers<[1], [0], [0], [1], [0, 0, 1, 1], [], []>} : vector<2x16xbf16>, vector<16x48xbf16>, vector<2x48xf32> -> vector<2x48xf32>
    %932 = vector.extract_strided_slice %686 {offsets = [14, 0], sizes = [2, 48], strides = [1, 1]} : vector<16x48xf32> to vector<2x48xf32>
    %933 = vector.extract_strided_slice %932 {offsets = [0, 0], sizes = [2, 16], strides = [1, 1]} : vector<2x48xf32> to vector<2x16xf32>
    %934 = vector.extract_strided_slice %931 {offsets = [0, 0], sizes = [2, 16], strides = [1, 1]} : vector<2x48xf32> to vector<2x16xf32>
    %935 = arith.addf %933, %934 : vector<2x16xf32>
    %936 = arith.negf %935 : vector<2x16xf32>
    %937 = math.exp %936 : vector<2x16xf32>
    %cst_455 = arith.constant 1.000000e+00 : f32
    %938 = vector.broadcast %cst_455 : f32 to vector<2x16xf32>
    %939 = arith.addf %938, %937 : vector<2x16xf32>
    %940 = arith.divf %938, %939 : vector<2x16xf32>
    %941 = vector.extract_strided_slice %932 {offsets = [0, 16], sizes = [2, 16], strides = [1, 1]} : vector<2x48xf32> to vector<2x16xf32>
    %942 = vector.extract_strided_slice %931 {offsets = [0, 16], sizes = [2, 16], strides = [1, 1]} : vector<2x48xf32> to vector<2x16xf32>
    %943 = arith.addf %941, %942 : vector<2x16xf32>
    %944 = arith.negf %943 : vector<2x16xf32>
    %945 = math.exp %944 : vector<2x16xf32>
    %cst_456 = arith.constant 1.000000e+00 : f32
    %946 = vector.broadcast %cst_456 : f32 to vector<2x16xf32>
    %947 = arith.addf %946, %945 : vector<2x16xf32>
    %948 = arith.divf %946, %947 : vector<2x16xf32>
    %949 = vector.extract_strided_slice %932 {offsets = [0, 32], sizes = [2, 16], strides = [1, 1]} : vector<2x48xf32> to vector<2x16xf32>
    %950 = vector.extract_strided_slice %931 {offsets = [0, 32], sizes = [2, 16], strides = [1, 1]} : vector<2x48xf32> to vector<2x16xf32>
    %951 = vector.broadcast %690 : vector<1x16xf32> to vector<2x16xf32>
    %952 = arith.addf %950, %951 : vector<2x16xf32>
    %953 = arith.mulf %940, %952 : vector<2x16xf32>
    %954 = arith.addf %949, %953 : vector<2x16xf32>
    %955 = math.tanh %954 : vector<2x16xf32>
    %cst_457 = arith.constant 1.000000e+00 : f32
    %956 = vector.broadcast %cst_457 : f32 to vector<2x16xf32>
    %957 = arith.subf %956, %948 : vector<2x16xf32>
    %958 = arith.mulf %957, %955 : vector<2x16xf32>
    %959 = arith.mulf %948, %926 : vector<2x16xf32>
    %960 = arith.addf %958, %959 : vector<2x16xf32>
    %c1_458 = arith.constant 1 : index
    %c14_459 = arith.constant 14 : index
    %c0_460 = arith.constant 0 : index
    %961 = vector.load %arg25[%c1_458, %c14_459, %c0_460] : memref<2x16x16xf32, #tpu.memory_space<vmem>>, vector<1x2x16xf32>
    %962 = vector.shape_cast %961 : vector<1x2x16xf32> to vector<2x16xf32>
    %963 = vector.shape_cast %960 : vector<2x16xf32> to vector<1x2x16xf32>
    tpu.vector_store %arg25[%c1_458, %c14_459, %c0_460], %963 {strides = array<i32>} : memref<2x16x16xf32, #tpu.memory_space<vmem>>, vector<1x2x16xf32>,
    %c1_461 = arith.constant 1 : index
    %c0_462 = arith.constant 0 : index
    %c0_463 = arith.constant 0 : index
    %964 = vector.load %arg25[%c1_461, %c0_462, %c0_463] : memref<2x16x16xf32, #tpu.memory_space<vmem>>, vector<1x16x16xf32>
    %965 = vector.shape_cast %964 : vector<1x16x16xf32> to vector<16x16xf32>
    %c1_464 = arith.constant 1 : index
    %c0_465 = arith.constant 0 : index
    %c0_466 = arith.constant 0 : index
    %966 = vector.load %arg23[%c1_464, %c0_465, %c0_466] : memref<2x16x16xbf16, #tpu.memory_space<vmem>>, vector<1x16x16xbf16>
    %967 = vector.shape_cast %966 : vector<1x16x16xbf16> to vector<16x16xbf16>
    %968 = arith.truncf %965 : vector<16x16xf32> to vector<16x16xbf16>
    %cst_467 = arith.constant dense<0.000000e+00> : vector<16x16xf32>
    %969 = tpu.matmul %968, %967, %cst_467 {dimension_numbers = #tpu.dot_dimension_numbers<[1], [0], [0], [1], [0, 0, 1, 1], [], []>} : vector<16x16xbf16>, vector<16x16xbf16>, vector<16x16xf32> -> vector<16x16xf32>
    %970 = tpu.concatenate %670, %969 in 1 : vector<16x16xf32>, vector<16x16xf32> -> vector<16x32xf32>
    %c0_468 = arith.constant 0 : index
    %c0_469 = arith.constant 0 : index
    %971 = vector.load %arg24[%c0_468, %c0_469] : memref<16x32xf32, #tpu.memory_space<vmem>>, vector<16x32xf32>
    tpu.vector_store %arg24[%c0_468, %c0_469], %970 {strides = array<i32>} : memref<16x32xf32, #tpu.memory_space<vmem>>, vector<16x32xf32>,
    return
  }
}

</mosaic_0001>

<llo_original>
// kernel: collaborative_post_processing.1
$region0: #{collaborative_post_processing.1}
  #allocation0 [shape = 'u32[]', space=smem, size = 0x4, offset = 0x4, fixed_abs, tag = 'smem constant byte address 0x4 - core index']
  #allocation1 [shape = 'u32[144,128]{1,0:T(1,128)}', space=vmem, size = 0x12000, scoped, tag = 'internal scratch']
  #allocation2 [shape = 'f32[2,16,16]{2,1,0:T(8,128)}', space=vmem, size = 0x4000, scoped, tag = 'scratch operand']
  %s0 = inlined_call_operand.vmem [shape: f32[16,64], index: 0, kind: input, shape index: {}]
  %s1 = inlined_call_operand.vmem [shape: f32[2,16,16], index: 1, kind: input, shape index: {}]
  %s2 = inlined_call_operand.vmem [shape: f32[2,16,16], index: 2, kind: input, shape index: {}]
  %s3 = inlined_call_operand.vmem [shape: bf16[64,32], index: 3, kind: input, shape index: {}]
  %s4 = inlined_call_operand.vmem [shape: f32[1,32], index: 4, kind: input, shape index: {}]
  %s5 = inlined_call_operand.vmem [shape: bf16[32,64], index: 5, kind: input, shape index: {}]
  %s6 = inlined_call_operand.vmem [shape: f32[1,64], index: 6, kind: input, shape index: {}]
  %s7 = inlined_call_operand.vmem [shape: bf16[16,32], index: 7, kind: input, shape index: {}]
  %s8 = inlined_call_operand.vmem [shape: bf16[32,32], index: 8, kind: input, shape index: {}]
  %s9 = inlined_call_operand.vmem [shape: bf16[2,4,32,16], index: 9, kind: input, shape index: {}]
  %s10 = inlined_call_operand.vmem [shape: f32[2,4,1,16], index: 10, kind: input, shape index: {}]
  %s11 = inlined_call_operand.vmem [shape: bf16[2,4,48,16], index: 11, kind: input, shape index: {}]
  %s12 = inlined_call_operand.vmem [shape: f32[2,4,1,16], index: 12, kind: input, shape index: {}]
  %s13 = inlined_call_operand.vmem [shape: bf16[2,4,16,32], index: 13, kind: input, shape index: {}]
  %s14 = inlined_call_operand.vmem [shape: f32[2,4,1,32], index: 14, kind: input, shape index: {}]
  %s15 = inlined_call_operand.vmem [shape: bf16[32,16], index: 15, kind: input, shape index: {}]
  %s16 = inlined_call_operand.vmem [shape: f32[1,16], index: 16, kind: input, shape index: {}]
  %s17 = inlined_call_operand.vmem [shape: bf16[32,32], index: 17, kind: input, shape index: {}]
  %s18 = inlined_call_operand.vmem [shape: f32[1,32], index: 18, kind: input, shape index: {}]
  %s19 = inlined_call_operand.vmem [shape: bf16[2,32,48], index: 19, kind: input, shape index: {}]
  %s20 = inlined_call_operand.vmem [shape: f32[2,1,48], index: 20, kind: input, shape index: {}]
  %s21 = inlined_call_operand.vmem [shape: bf16[2,16,48], index: 21, kind: input, shape index: {}]
  %s22 = inlined_call_operand.vmem [shape: f32[2,1,16], index: 22, kind: input, shape index: {}]
  %s23 = inlined_call_operand.vmem [shape: bf16[2,16,16], index: 23, kind: input, shape index: {}]
  %s24 = inlined_call_operand.vmem [shape: f32[16,32], index: 24, kind: output, shape index: {}]
  %s25 = sld [smem:[#allocation0]]
  $region106: #{collaborative_post_processing.1} parent=0
    _
  %s27 = ssub.s32 1, %s25
  %s28 = scalar_select 0, %s27, %s25
  // Predicated region
  $region2: #{collaborative_post_processing.1} parent=0 // pred_check
    _
  $region3: #{collaborative_post_processing.1} parent=0 // pred_check_branch
    %30 = sbr.rel (0) target = $region5
  $region4: #{collaborative_post_processing.1} parent=0 // pred_region
    _
  $region5: #{collaborative_post_processing.1} parent=0 // pred_fallthru
    _
  // Predicated region
  $region6: #{collaborative_post_processing.1} parent=0 // pred_check
    _
  $region7: #{collaborative_post_processing.1} parent=0 // pred_check_branch
    %32 = sbr.rel (0) target = $region9
  $region8: #{collaborative_post_processing.1} parent=0 // pred_region
    _
  $region9: #{collaborative_post_processing.1} parent=0 // pred_fallthru
    _
  // Predicated region
  $region10: #{collaborative_post_processing.1} parent=0 // pred_check
    _
  $region11: #{collaborative_post_processing.1} parent=0 // pred_check_branch
    %34 = sbr.rel (0) target = $region13
  $region12: #{collaborative_post_processing.1} parent=0 // pred_region
    _
  $region13: #{collaborative_post_processing.1} parent=0 // pred_fallthru
    _
  // Predicated region
  $region14: #{collaborative_post_processing.1} parent=0 // pred_check
    _
  $region15: #{collaborative_post_processing.1} parent=0 // pred_check_branch
    %36 = sbr.rel (0) target = $region17
  $region16: #{collaborative_post_processing.1} parent=0 // pred_region
    _
  $region17: #{collaborative_post_processing.1} parent=0 // pred_fallthru
    _
  // Predicated region
  $region18: #{collaborative_post_processing.1} parent=0 // pred_check
    _
  $region19: #{collaborative_post_processing.1} parent=0 // pred_check_branch
    %38 = sbr.rel (0) target = $region21
  $region20: #{collaborative_post_processing.1} parent=0 // pred_region
    _
  $region21: #{collaborative_post_processing.1} parent=0 // pred_fallthru
    _
  // Predicated region
  $region22: #{collaborative_post_processing.1} parent=0 // pred_check
    _
  $region23: #{collaborative_post_processing.1} parent=0 // pred_check_branch
    %40 = sbr.rel (0) target = $region25
  $region24: #{collaborative_post_processing.1} parent=0 // pred_region
    _
  $region25: #{collaborative_post_processing.1} parent=0 // pred_fallthru
    _
  // Predicated region
  $region26: #{collaborative_post_processing.1} parent=0 // pred_check
    _
  $region27: #{collaborative_post_processing.1} parent=0 // pred_check_branch
    %42 = sbr.rel (0) target = $region29
  $region28: #{collaborative_post_processing.1} parent=0 // pred_region
    _
  $region29: #{collaborative_post_processing.1} parent=0 // pred_fallthru
    _
  // Predicated region
  $region30: #{collaborative_post_processing.1} parent=0 // pred_check
    _
  $region31: #{collaborative_post_processing.1} parent=0 // pred_check_branch
    %44 = sbr.rel (0) target = $region33
  $region32: #{collaborative_post_processing.1} parent=0 // pred_region
    _
  $region33: #{collaborative_post_processing.1} parent=0 // pred_fallthru
    _
  // Predicated region
  $region34: #{collaborative_post_processing.1} parent=0 // pred_check
    _
  $region35: #{collaborative_post_processing.1} parent=0 // pred_check_branch
    %46 = sbr.rel (0) target = $region37
  $region36: #{collaborative_post_processing.1} parent=0 // pred_region
    _
  $region37: #{collaborative_post_processing.1} parent=0 // pred_fallthru
    _
  // Predicated region
  $region38: #{collaborative_post_processing.1} parent=0 // pred_check
    _
  $region39: #{collaborative_post_processing.1} parent=0 // pred_check_branch
    %48 = sbr.rel (0) target = $region41
  $region40: #{collaborative_post_processing.1} parent=0 // pred_region
    _
  $region41: #{collaborative_post_processing.1} parent=0 // pred_fallthru
    _
  // Predicated region
  $region42: #{collaborative_post_processing.1} parent=0 // pred_check
    _
  $region43: #{collaborative_post_processing.1} parent=0 // pred_check_branch
    %50 = sbr.rel (0) target = $region45
  $region44: #{collaborative_post_processing.1} parent=0 // pred_region
    _
  $region45: #{collaborative_post_processing.1} parent=0 // pred_fallthru
    _
  // Predicated region
  $region46: #{collaborative_post_processing.1} parent=0 // pred_check
    _
  $region47: #{collaborative_post_processing.1} parent=0 // pred_check_branch
    %52 = sbr.rel (0) target = $region49
  $region48: #{collaborative_post_processing.1} parent=0 // pred_region
    _
  $region49: #{collaborative_post_processing.1} parent=0 // pred_fallthru
    _
  // Predicated region
  $region50: #{collaborative_post_processing.1} parent=0 // pred_check
    _
  $region51: #{collaborative_post_processing.1} parent=0 // pred_check_branch
    %54 = sbr.rel (0) target = $region53
  $region52: #{collaborative_post_processing.1} parent=0 // pred_region
    _
  $region53: #{collaborative_post_processing.1} parent=0 // pred_fallthru
    _
  // Predicated region
  $region54: #{collaborative_post_processing.1} parent=0 // pred_check
    _
  $region55: #{collaborative_post_processing.1} parent=0 // pred_check_branch
    %56 = sbr.rel (0) target = $region57
  $region56: #{collaborative_post_processing.1} parent=0 // pred_region
    _
  $region57: #{collaborative_post_processing.1} parent=0 // pred_fallthru
    _
  // Predicated region
  $region58: #{collaborative_post_processing.1} parent=0 // pred_check
    _
  $region59: #{collaborative_post_processing.1} parent=0 // pred_check_branch
    %58 = sbr.rel (0) target = $region61
  $region60: #{collaborative_post_processing.1} parent=0 // pred_region
    _
  $region61: #{collaborative_post_processing.1} parent=0 // pred_fallthru
    _
  // Predicated region
  $region62: #{collaborative_post_processing.1} parent=0 // pred_check
    _
  $region63: #{collaborative_post_processing.1} parent=0 // pred_check_branch
    %60 = sbr.rel (0) target = $region65
  $region64: #{collaborative_post_processing.1} parent=0 // pred_region
    _
  $region65: #{collaborative_post_processing.1} parent=0 // pred_fallthru
    _
  // Predicated region
  $region66: #{collaborative_post_processing.1} parent=0 // pred_check
    _
  $region67: #{collaborative_post_processing.1} parent=0 // pred_check_branch
    %62 = sbr.rel (0) target = $region69
  $region68: #{collaborative_post_processing.1} parent=0 // pred_region
    _
  $region69: #{collaborative_post_processing.1} parent=0 // pred_fallthru
    _
  // Predicated region
  $region70: #{collaborative_post_processing.1} parent=0 // pred_check
    _
  $region71: #{collaborative_post_processing.1} parent=0 // pred_check_branch
    %64 = sbr.rel (0) target = $region73
  $region72: #{collaborative_post_processing.1} parent=0 // pred_region
    _
  $region73: #{collaborative_post_processing.1} parent=0 // pred_fallthru
    _
  // Predicated region
  $region74: #{collaborative_post_processing.1} parent=0 // pred_check
    _
  $region75: #{collaborative_post_processing.1} parent=0 // pred_check_branch
    %66 = sbr.rel (0) target = $region77
  $region76: #{collaborative_post_processing.1} parent=0 // pred_region
    _
  $region77: #{collaborative_post_processing.1} parent=0 // pred_fallthru
    _
  // Predicated region
  $region78: #{collaborative_post_processing.1} parent=0 // pred_check
    _
  $region79: #{collaborative_post_processing.1} parent=0 // pred_check_branch
    %68 = sbr.rel (0) target = $region81
  $region80: #{collaborative_post_processing.1} parent=0 // pred_region
    _
  $region81: #{collaborative_post_processing.1} parent=0 // pred_fallthru
    _
  // Predicated region
  $region82: #{collaborative_post_processing.1} parent=0 // pred_check
    _
  $region83: #{collaborative_post_processing.1} parent=0 // pred_check_branch
    %70 = sbr.rel (0) target = $region85
  $region84: #{collaborative_post_processing.1} parent=0 // pred_region
    _
  $region85: #{collaborative_post_processing.1} parent=0 // pred_fallthru
    _
  // Predicated region
  $region86: #{collaborative_post_processing.1} parent=0 // pred_check
    _
  $region87: #{collaborative_post_processing.1} parent=0 // pred_check_branch
    %72 = sbr.rel (0) target = $region89
  $region88: #{collaborative_post_processing.1} parent=0 // pred_region
    _
  $region89: #{collaborative_post_processing.1} parent=0 // pred_fallthru
    _
  // Predicated region
  $region90: #{collaborative_post_processing.1} parent=0 // pred_check
    _
  $region91: #{collaborative_post_processing.1} parent=0 // pred_check_branch
    %74 = sbr.rel (0) target = $region93
  $region92: #{collaborative_post_processing.1} parent=0 // pred_region
    _
  $region93: #{collaborative_post_processing.1} parent=0 // pred_fallthru
    _
  // Predicated region
  $region94: #{collaborative_post_processing.1} parent=0 // pred_check
    _
  $region95: #{collaborative_post_processing.1} parent=0 // pred_check_branch
    %76 = sbr.rel (0) target = $region97
  $region96: #{collaborative_post_processing.1} parent=0 // pred_region
    _
  $region97: #{collaborative_post_processing.1} parent=0 // pred_fallthru
    _
  %v78 = vld [vmem:[%s0] sm:$0xff]
  %v79 = vld [vmem:[%s0 + $0x8] sm:$0xff]
  %v80 = vld [vmem:[%s3] sm:$0xf]
  %v81 = vld [vmem:[%s3 + $0x4] sm:$0xf]
  %v82 = vld [vmem:[%s3 + $0x8] sm:$0xf]
  %v83 = vld [vmem:[%s3 + $0xc] sm:$0xf]
  %v84 = vld [vmem:[%s3 + $0x10] sm:$0xf]
  %v85 = vld [vmem:[%s3 + $0x14] sm:$0xf]
  %v86 = vld [vmem:[%s3 + $0x18] sm:$0xf]
  %v87 = vld [vmem:[%s3 + $0x1c] sm:$0xf]
  %v88 = vpack.c.bf16 %v79, %v78
  %v89 = vld [vmem:[%s4] sm:$0x1]
  %v91 = vlaneseq
  %v92 = vshrl.u32 %v91, 7
  %v93 = vsub.s32 0, %v92
  %v94 = vrot.slane %v89, %v93
  %v104 = vunpack.c.l.b16 %v80
  %v105 = vunpack.c.l.b16 %v81
  %v106 = vunpack.c.l.b16 %v82
  %v107 = vunpack.c.l.b16 %v83
  %v108 = vunpack.c.l.b16 %v84
  %v109 = vunpack.c.l.b16 %v85
  %v110 = vunpack.c.l.b16 %v86
  %v111 = vunpack.c.l.b16 %v87
  %v112 = vpack.c.b16 %v105, %v104
  %v113 = vpack.c.b16 %v107, %v106
  %v114 = vpack.c.b16 %v109, %v108
  %v115 = vpack.c.b16 %v111, %v110
  %vm120 = vcmask 523264
  %v122 = vsel %vm120, %v88, 0
  %124 = vmatprep.subr.bf16.mxu0 0
  %125 = vmatpush1.bf16.msra.mxu0 %v112
  %126 = vmatprep.subr.bf16.mxu0 0
  %127 = vmatpush1.bf16.msra.mxu0 %v113
  %128 = vmatprep.subr.bf16.mxu0 0
  %129 = vmatpush1.bf16.msra.mxu0 %v114
  %130 = vmatprep.subr.bf16.mxu0 0
  %131 = vmatpush1.bf16.msra.mxu0 %v115
  %132 = vmatprep.subr.bf16.mxu0 0
  %133 = vmatpush1.bf16.msra.mxu0 0
  %134 = vmatprep.subr.bf16.mxu0 0
  %135 = vmatpush1.bf16.msra.mxu0 0
  %136 = vmatprep.subr.bf16.mxu0 0
  %137 = vmatpush1.bf16.msra.mxu0 0
  %138 = vmatprep.subr.bf16.mxu0 0
  %139 = vmatpush1.bf16.msra.mxu0 0
  %140 = vmatprep.subr.bf16.mxu0 0
  %141 = vmatpush1.bf16.msra.mxu0 0
  %142 = vmatprep.subr.bf16.mxu0 0
  %143 = vmatpush1.bf16.msra.mxu0 0
  %144 = vmatprep.subr.bf16.mxu0 0
  %145 = vmatpush1.bf16.msra.mxu0 0
  %146 = vmatprep.subr.bf16.mxu0 0
  %147 = vmatpush1.bf16.msra.mxu0 0
  %148 = vmatprep.subr.bf16.mxu0 0
  %149 = vmatpush1.bf16.msra.mxu0 0
  %150 = vmatprep.subr.bf16.mxu0 0
  %151 = vmatpush1.bf16.msra.mxu0 0
  %152 = vmatprep.subr.bf16.mxu0 0
  %153 = vmatpush1.bf16.msra.mxu0 0
  %154 = vmatprep.subr.bf16.mxu0 0
  %155 = vmatpush1.bf16.msra.mxu0 0
  %156 = vmatprep.mubr.bf16.mxu0 0
  %157 = vmatmul.mubr.bf16.gmra.mrb[0].mxu0 %v122
  %v158 = vpop.f32.mrb[0].mxu0
  %v159 = vadd.f32 %v94, %v158
  %v160 = vpop.f32.mrb[0].mxu0
  %v161 = vpop.f32.mrb[0].mxu0
  %v162 = vadd.f32 %v94, %v161
  %v163 = vpop.f32.mrb[0].mxu0
  %164 = vdwg.mxu0
  %v165 = vmax.f32 %v159, 0.0
  %v166 = vmax.f32 %v162, 0.0
  %v167 = vld [vmem:[%s1] sm:$0xff]
  %v168 = vld [vmem:[%s1 + $0x8] sm:$0xff]
  %s169 = scalar_lea.vmem %s1, 16
  %v170 = vld [vmem:[%s169] sm:$0xff]
  %v171 = vld [vmem:[%s169 + $0x8] sm:$0xff]
  %v172 = vmul.f32 %v167, %v167
  %v173 = vmul.f32 %v168, %v168
  %v174 = vmul.f32 %v170, %v170
  %v175 = vmul.f32 %v171, %v171
  %v176 = vadd.f32 %v172, %v174
  %v177 = vadd.f32 %v173, %v175
  %v178 = vrsqrt.pop %v176
  %v179 = vmul.f32 %v176, %v178
  %vm180 = vcmp.eq.f32.partialorder %v176, inf
  %v181 = vsel %vm180, %v176, %v179
  %vm182 = vcmp.eq.f32.partialorder %v176, 0.0
  %v183 = vand.u32 %v176, 2147483648
  %v184 = vsel %vm182, %v183, %v181
  %v185 = vrsqrt.pop %v177
  %v186 = vmul.f32 %v177, %v185
  %vm187 = vcmp.eq.f32.partialorder %v177, inf
  %v188 = vsel %vm187, %v177, %v186
  %vm189 = vcmp.eq.f32.partialorder %v177, 0.0
  %v190 = vand.u32 %v177, 2147483648
  %v191 = vsel %vm189, %v190, %v188
  %v192 = vld [vmem:[%s5] sm:$0xf]
  %v193 = vld [vmem:[%s5 + $0x4] sm:$0xf]
  %v194 = vld [vmem:[%s5 + $0x8] sm:$0xf]
  %v195 = vld [vmem:[%s5 + $0xc] sm:$0xf]
  %v196 = vpack.c.bf16 %v166, %v165
  %v197 = vld [vmem:[%s6] sm:$0x1]
  %v199 = vlaneseq
  %v200 = vshrl.u32 %v199, 7
  %v201 = vsub.s32 0, %v200
  %v202 = vrot.slane %v197, %v201
  %v208 = vunpack.c.l.b16 %v192
  %v209 = vunpack.c.l.b16 %v193
  %v210 = vunpack.c.l.b16 %v194
  %v211 = vunpack.c.l.b16 %v195
  %v212 = vpack.c.b16 %v209, %v208
  %v213 = vpack.c.b16 %v211, %v210
  %vm216 = vcmask 261120
  %v218 = vsel %vm216, %v196, 0
  %220 = vmatprep.subr.bf16.mxu0 0
  %221 = vmatpush1.bf16.msra.mxu0 %v212
  %222 = vmatprep.subr.bf16.mxu0 0
  %223 = vmatpush1.bf16.msra.mxu0 %v213
  %224 = vmatprep.subr.bf16.mxu0 0
  %225 = vmatpush1.bf16.msra.mxu0 0
  %226 = vmatprep.subr.bf16.mxu0 0
  %227 = vmatpush1.bf16.msra.mxu0 0
  %228 = vmatprep.subr.bf16.mxu0 0
  %229 = vmatpush1.bf16.msra.mxu0 0
  %230 = vmatprep.subr.bf16.mxu0 0
  %231 = vmatpush1.bf16.msra.mxu0 0
  %232 = vmatprep.subr.bf16.mxu0 0
  %233 = vmatpush1.bf16.msra.mxu0 0
  %234 = vmatprep.subr.bf16.mxu0 0
  %235 = vmatpush1.bf16.msra.mxu0 0
  %236 = vmatprep.subr.bf16.mxu0 0
  %237 = vmatpush1.bf16.msra.mxu0 0
  %238 = vmatprep.subr.bf16.mxu0 0
  %239 = vmatpush1.bf16.msra.mxu0 0
  %240 = vmatprep.subr.bf16.mxu0 0
  %241 = vmatpush1.bf16.msra.mxu0 0
  %242 = vmatprep.subr.bf16.mxu0 0
  %243 = vmatpush1.bf16.msra.mxu0 0
  %244 = vmatprep.subr.bf16.mxu0 0
  %245 = vmatpush1.bf16.msra.mxu0 0
  %246 = vmatprep.subr.bf16.mxu0 0
  %247 = vmatpush1.bf16.msra.mxu0 0
  %248 = vmatprep.subr.bf16.mxu0 0
  %249 = vmatpush1.bf16.msra.mxu0 0
  %250 = vmatprep.subr.bf16.mxu0 0
  %251 = vmatpush1.bf16.msra.mxu0 0
  %252 = vmatprep.mubr.bf16.mxu0 0
  %253 = vmatmul.mubr.bf16.gmra.mrb[0].mxu0 %v218
  %v254 = vpop.f32.mrb[0].mxu0
  %v255 = vadd.f32 %v202, %v254
  %v256 = vpop.f32.mrb[0].mxu0
  %v257 = vpop.f32.mrb[0].mxu0
  %v258 = vadd.f32 %v202, %v257
  %v259 = vpop.f32.mrb[0].mxu0
  %260 = vdwg.mxu0
  %v261 = vld [vmem:[%s7] sm:$0xf]
  %v262 = vld [vmem:[%s7 + $0x4] sm:$0xf]
  %v263 = vpack.c.bf16 %v191, %v184
  %v266 = vunpack.c.l.b16 %v261
  %v267 = vunpack.c.l.b16 %v262
  %v268 = vpack.c.b16 %v267, %v266
  %vm270 = vcmask 130048
  %v272 = vsel %vm270, %v263, 0
  %274 = vmatprep.subr.bf16.mxu0 0
  %275 = vmatpush1.bf16.msra.mxu0 %v268
  %276 = vmatprep.subr.bf16.mxu0 0
  %277 = vmatpush1.bf16.msra.mxu0 0
  %278 = vmatprep.subr.bf16.mxu0 0
  %279 = vmatpush1.bf16.msra.mxu0 0
  %280 = vmatprep.subr.bf16.mxu0 0
  %281 = vmatpush1.bf16.msra.mxu0 0
  %282 = vmatprep.subr.bf16.mxu0 0
  %283 = vmatpush1.bf16.msra.mxu0 0
  %284 = vmatprep.subr.bf16.mxu0 0
  %285 = vmatpush1.bf16.msra.mxu0 0
  %286 = vmatprep.subr.bf16.mxu0 0
  %287 = vmatpush1.bf16.msra.mxu0 0
  %288 = vmatprep.subr.bf16.mxu0 0
  %289 = vmatpush1.bf16.msra.mxu0 0
  %290 = vmatprep.subr.bf16.mxu0 0
  %291 = vmatpush1.bf16.msra.mxu0 0
  %292 = vmatprep.subr.bf16.mxu0 0
  %293 = vmatpush1.bf16.msra.mxu0 0
  %294 = vmatprep.subr.bf16.mxu0 0
  %295 = vmatpush1.bf16.msra.mxu0 0
  %296 = vmatprep.subr.bf16.mxu0 0
  %297 = vmatpush1.bf16.msra.mxu0 0
  %298 = vmatprep.subr.bf16.mxu0 0
  %299 = vmatpush1.bf16.msra.mxu0 0
  %300 = vmatprep.subr.bf16.mxu0 0
  %301 = vmatpush1.bf16.msra.mxu0 0
  %302 = vmatprep.subr.bf16.mxu0 0
  %303 = vmatpush1.bf16.msra.mxu0 0
  %304 = vmatprep.subr.bf16.mxu0 0
  %305 = vmatpush1.bf16.msra.mxu0 0
  %306 = vmatprep.mubr.bf16.mxu0 0
  %307 = vmatmul.mubr.bf16.gmra.mrb[0].mxu0 %v272
  %v308 = vpop.f32.mrb[0].mxu0
  %v309 = vadd.f32 0.0, %v308
  %v310 = vpop.f32.mrb[0].mxu0
  %v311 = vpop.f32.mrb[0].mxu0
  %v312 = vadd.f32 0.0, %v311
  %v313 = vpop.f32.mrb[0].mxu0
  %314 = vdwg.mxu0
  %v315 = vadd.f32 %v255, %v309
  %v316 = vadd.f32 %v258, %v312
  %v317 = vld [vmem:[%s8] sm:$0xf]
  %v318 = vld [vmem:[%s8 + $0x4] sm:$0xf]
  %v319 = vld [vmem:[%s8 + $0x8] sm:$0xf]
  %v320 = vld [vmem:[%s8 + $0xc] sm:$0xf]
  %322 = vrot.lane.b32.xlu0 %v88, 96
  %v323 = vpop.permute.xlu0 %322
  %v328 = vunpack.c.l.b16 %v317
  %v329 = vunpack.c.l.b16 %v318
  %v330 = vunpack.c.l.b16 %v319
  %v331 = vunpack.c.l.b16 %v320
  %v332 = vpack.c.b16 %v329, %v328
  %v333 = vpack.c.b16 %v331, %v330
  %v337 = vsel %vm216, %v323, 0
  %339 = vmatprep.subr.bf16.mxu0 0
  %340 = vmatpush1.bf16.msra.mxu0 %v332
  %341 = vmatprep.subr.bf16.mxu0 0
  %342 = vmatpush1.bf16.msra.mxu0 %v333
  %343 = vmatprep.subr.bf16.mxu0 0
  %344 = vmatpush1.bf16.msra.mxu0 0
  %345 = vmatprep.subr.bf16.mxu0 0
  %346 = vmatpush1.bf16.msra.mxu0 0
  %347 = vmatprep.subr.bf16.mxu0 0
  %348 = vmatpush1.bf16.msra.mxu0 0
  %349 = vmatprep.subr.bf16.mxu0 0
  %350 = vmatpush1.bf16.msra.mxu0 0
  %351 = vmatprep.subr.bf16.mxu0 0
  %352 = vmatpush1.bf16.msra.mxu0 0
  %353 = vmatprep.subr.bf16.mxu0 0
  %354 = vmatpush1.bf16.msra.mxu0 0
  %355 = vmatprep.subr.bf16.mxu0 0
  %356 = vmatpush1.bf16.msra.mxu0 0
  %357 = vmatprep.subr.bf16.mxu0 0
  %358 = vmatpush1.bf16.msra.mxu0 0
  %359 = vmatprep.subr.bf16.mxu0 0
  %360 = vmatpush1.bf16.msra.mxu0 0
  %361 = vmatprep.subr.bf16.mxu0 0
  %362 = vmatpush1.bf16.msra.mxu0 0
  %363 = vmatprep.subr.bf16.mxu0 0
  %364 = vmatpush1.bf16.msra.mxu0 0
  %365 = vmatprep.subr.bf16.mxu0 0
  %366 = vmatpush1.bf16.msra.mxu0 0
  %367 = vmatprep.subr.bf16.mxu0 0
  %368 = vmatpush1.bf16.msra.mxu0 0
  %369 = vmatprep.subr.bf16.mxu0 0
  %370 = vmatpush1.bf16.msra.mxu0 0
  %371 = vmatprep.mubr.bf16.mxu0 0
  %372 = vmatmul.mubr.bf16.gmra.mrb[0].mxu0 %v337
  %v373 = vpop.f32.mrb[0].mxu0
  %v374 = vadd.f32 0.0, %v373
  %v375 = vpop.f32.mrb[0].mxu0
  %v376 = vpop.f32.mrb[0].mxu0
  %v377 = vadd.f32 0.0, %v376
  %v378 = vpop.f32.mrb[0].mxu0
  %379 = vdwg.mxu0
  %382 = vrot.lane.b32.xlu0 %v374, 32
  %v383 = vpop.permute.xlu0 %382
  %384 = vrot.lane.b32.xlu0 %v377, 32
  %v385 = vpop.permute.xlu0 %384
  %v388 = vadd.f32 %v255, %v383
  %v389 = vadd.f32 %v258, %v385
  %v390 = vlaneseq
  %v391 = vshrl.u32 %v390, 7
  %v392 = vadd.s32 %v391, 8
  %v393 = vld [vmem:[%s9] sm:$0xf]
  %v394 = vld [vmem:[%s9 + $0x4] sm:$0xf]
  %v395 = vld [vmem:[%s9 + $0x8] sm:$0xf]
  %v396 = vld [vmem:[%s9 + $0xc] sm:$0xf]
  %v397 = vpack.c.bf16 %v316, %v315
  %v398 = vld [vmem:[%s10] sm:$0x1]
  %v400 = vlaneseq
  %v401 = vshrl.u32 %v400, 7
  %v402 = vsub.s32 0, %v401
  %v403 = vrot.slane %v398, %v402
  %v409 = vunpack.c.l.b16 %v393
  %v410 = vunpack.c.l.b16 %v394
  %v411 = vunpack.c.l.b16 %v395
  %v412 = vunpack.c.l.b16 %v396
  %v413 = vpack.c.b16 %v410, %v409
  %v414 = vpack.c.b16 %v412, %v411
  %v418 = vsel %vm216, %v397, 0
  %420 = vmatprep.subr.bf16.mxu0 0
  %421 = vmatpush1.bf16.msra.mxu0 %v413
  %422 = vmatprep.subr.bf16.mxu0 0
  %423 = vmatpush1.bf16.msra.mxu0 %v414
  %424 = vmatprep.subr.bf16.mxu0 0
  %425 = vmatpush1.bf16.msra.mxu0 0
  %426 = vmatprep.subr.bf16.mxu0 0
  %427 = vmatpush1.bf16.msra.mxu0 0
  %428 = vmatprep.subr.bf16.mxu0 0
  %429 = vmatpush1.bf16.msra.mxu0 0
  %430 = vmatprep.subr.bf16.mxu0 0
  %431 = vmatpush1.bf16.msra.mxu0 0
  %432 = vmatprep.subr.bf16.mxu0 0
  %433 = vmatpush1.bf16.msra.mxu0 0
  %434 = vmatprep.subr.bf16.mxu0 0
  %435 = vmatpush1.bf16.msra.mxu0 0
  %436 = vmatprep.subr.bf16.mxu0 0
  %437 = vmatpush1.bf16.msra.mxu0 0
  %438 = vmatprep.subr.bf16.mxu0 0
  %439 = vmatpush1.bf16.msra.mxu0 0
  %440 = vmatprep.subr.bf16.mxu0 0
  %441 = vmatpush1.bf16.msra.mxu0 0
  %442 = vmatprep.subr.bf16.mxu0 0
  %443 = vmatpush1.bf16.msra.mxu0 0
  %444 = vmatprep.subr.bf16.mxu0 0
  %445 = vmatpush1.bf16.msra.mxu0 0
  %446 = vmatprep.subr.bf16.mxu0 0
  %447 = vmatpush1.bf16.msra.mxu0 0
  %448 = vmatprep.subr.bf16.mxu0 0
  %449 = vmatpush1.bf16.msra.mxu0 0
  %450 = vmatprep.subr.bf16.mxu0 0
  %451 = vmatpush1.bf16.msra.mxu0 0
  %452 = vmatprep.mubr.bf16.mxu0 0
  %453 = vmatmul.mubr.bf16.gmra.mrb[0].mxu0 %v418
  %v454 = vpop.f32.mrb[0].mxu0
  %v455 = vadd.f32 %v403, %v454
  %v456 = vpop.f32.mrb[0].mxu0
  %v457 = vpop.f32.mrb[0].mxu0
  %v458 = vadd.f32 %v403, %v457
  %v459 = vpop.f32.mrb[0].mxu0
  %460 = vdwg.mxu0
  %v461 = vmax.f32 %v455, 0.0
  %v462 = vmax.f32 %v458, 0.0
  %vm463 = vcmp.ge.s32.totalorder %v391, 4
  %vm464 = vcmp.ge.s32.totalorder %v392, 4
  %v465 = vrot.slane %v461, 4
  %v466 = vrot.slane %v462, 4
  %vm467 = vcmp.lt.s32.totalorder %v391, 4
  %v468 = vsel %vm467, %v465, %v466
  %v469 = vsel %vm467, %v466, %v465
  %v470 = vsel %vm463, %v469, 0.0
  %v471 = vsel %vm464, %v468, 0.0
  %vm472 = vcmp.ge.s32.totalorder %v391, 2
  %vm473 = vcmp.ge.s32.totalorder %v392, 2
  %v474 = vrot.slane %v461, 6
  %v475 = vrot.slane %v462, 6
  %vm476 = vcmp.lt.s32.totalorder %v391, 2
  %v477 = vsel %vm476, %v474, %v475
  %v478 = vsel %vm476, %v475, %v474
  %v479 = vsel %vm472, %v478, 0.0
  %v480 = vsel %vm473, %v477, 0.0
  %483 = vrot.lane.b32.xlu0 %v479, 16
  %v484 = vpop.permute.xlu0 %483
  %485 = vrot.lane.b32.xlu0 %v480, 16
  %v486 = vpop.permute.xlu0 %485
  %491 = vrot.lane.b32.xlu0 %v461, 32
  %v492 = vpop.permute.xlu0 %491
  %493 = vrot.lane.b32.xlu0 %v462, 32
  %v494 = vpop.permute.xlu0 %493
  %v497 = vsel %vm270, %v470, %v484
  %v498 = vsel %vm270, %v471, %v486
  %v499 = vsel %vm216, %v497, %v492
  %v500 = vsel %vm216, %v498, %v494
  %v501 = vld [vmem:[%s11] sm:$0xf]
  %v502 = vld [vmem:[%s11 + $0x4] sm:$0xf]
  %v503 = vld [vmem:[%s11 + $0x8] sm:$0xf]
  %v504 = vld [vmem:[%s11 + $0xc] sm:$0xf]
  %v505 = vld [vmem:[%s11 + $0x10] sm:$0xf]
  %v506 = vld [vmem:[%s11 + $0x14] sm:$0xf]
  %v507 = vpack.c.bf16 %v500, %v499
  %v508 = vld [vmem:[%s12] sm:$0x1]
  %v510 = vlaneseq
  %v511 = vshrl.u32 %v510, 7
  %v512 = vsub.s32 0, %v511
  %v513 = vrot.slane %v508, %v512
  %v521 = vunpack.c.l.b16 %v501
  %v522 = vunpack.c.l.b16 %v502
  %v523 = vunpack.c.l.b16 %v503
  %v524 = vunpack.c.l.b16 %v504
  %v525 = vunpack.c.l.b16 %v505
  %v526 = vunpack.c.l.b16 %v506
  %v527 = vpack.c.b16 %v522, %v521
  %v528 = vpack.c.b16 %v524, %v523
  %v529 = vpack.c.b16 %v526, %v525
  %vm533 = vcmask 392192
  %v535 = vsel %vm533, %v507, 0
  %537 = vmatprep.subr.bf16.mxu0 0
  %538 = vmatpush1.bf16.msra.mxu0 %v527
  %539 = vmatprep.subr.bf16.mxu0 0
  %540 = vmatpush1.bf16.msra.mxu0 %v528
  %541 = vmatprep.subr.bf16.mxu0 0
  %542 = vmatpush1.bf16.msra.mxu0 %v529
  %543 = vmatprep.subr.bf16.mxu0 0
  %544 = vmatpush1.bf16.msra.mxu0 0
  %545 = vmatprep.subr.bf16.mxu0 0
  %546 = vmatpush1.bf16.msra.mxu0 0
  %547 = vmatprep.subr.bf16.mxu0 0
  %548 = vmatpush1.bf16.msra.mxu0 0
  %549 = vmatprep.subr.bf16.mxu0 0
  %550 = vmatpush1.bf16.msra.mxu0 0
  %551 = vmatprep.subr.bf16.mxu0 0
  %552 = vmatpush1.bf16.msra.mxu0 0
  %553 = vmatprep.subr.bf16.mxu0 0
  %554 = vmatpush1.bf16.msra.mxu0 0
  %555 = vmatprep.subr.bf16.mxu0 0
  %556 = vmatpush1.bf16.msra.mxu0 0
  %557 = vmatprep.subr.bf16.mxu0 0
  %558 = vmatpush1.bf16.msra.mxu0 0
  %559 = vmatprep.subr.bf16.mxu0 0
  %560 = vmatpush1.bf16.msra.mxu0 0
  %561 = vmatprep.subr.bf16.mxu0 0
  %562 = vmatpush1.bf16.msra.mxu0 0
  %563 = vmatprep.subr.bf16.mxu0 0
  %564 = vmatpush1.bf16.msra.mxu0 0
  %565 = vmatprep.subr.bf16.mxu0 0
  %566 = vmatpush1.bf16.msra.mxu0 0
  %567 = vmatprep.subr.bf16.mxu0 0
  %568 = vmatpush1.bf16.msra.mxu0 0
  %569 = vmatprep.mubr.bf16.mxu0 0
  %570 = vmatmul.mubr.bf16.gmra.mrb[0].mxu0 %v535
  %v571 = vpop.f32.mrb[0].mxu0
  %v572 = vadd.f32 %v513, %v571
  %v573 = vpop.f32.mrb[0].mxu0
  %v574 = vpop.f32.mrb[0].mxu0
  %v575 = vadd.f32 %v513, %v574
  %v576 = vpop.f32.mrb[0].mxu0
  %577 = vdwg.mxu0
  %v578 = vmax.f32 %v572, 0.0
  %v579 = vmax.f32 %v575, 0.0
  %v580 = vld [vmem:[%s13] sm:$0xf]
  %v581 = vld [vmem:[%s13 + $0x4] sm:$0xf]
  %v582 = vpack.c.bf16 %v579, %v578
  %v585 = vunpack.c.l.b16 %v580
  %v586 = vunpack.c.l.b16 %v581
  %v587 = vpack.c.b16 %v586, %v585
  %v590 = vsel %vm270, %v582, 0
  %592 = vmatprep.subr.bf16.mxu0 0
  %593 = vmatpush1.bf16.msra.mxu0 %v587
  %594 = vmatprep.subr.bf16.mxu0 0
  %595 = vmatpush1.bf16.msra.mxu0 0
  %596 = vmatprep.subr.bf16.mxu0 0
  %597 = vmatpush1.bf16.msra.mxu0 0
  %598 = vmatprep.subr.bf16.mxu0 0
  %599 = vmatpush1.bf16.msra.mxu0 0
  %600 = vmatprep.subr.bf16.mxu0 0
  %601 = vmatpush1.bf16.msra.mxu0 0
  %602 = vmatprep.subr.bf16.mxu0 0
  %603 = vmatpush1.bf16.msra.mxu0 0
  %604 = vmatprep.subr.bf16.mxu0 0
  %605 = vmatpush1.bf16.msra.mxu0 0
  %606 = vmatprep.subr.bf16.mxu0 0
  %607 = vmatpush1.bf16.msra.mxu0 0
  %608 = vmatprep.subr.bf16.mxu0 0
  %609 = vmatpush1.bf16.msra.mxu0 0
  %610 = vmatprep.subr.bf16.mxu0 0
  %611 = vmatpush1.bf16.msra.mxu0 0
  %612 = vmatprep.subr.bf16.mxu0 0
  %613 = vmatpush1.bf16.msra.mxu0 0
  %614 = vmatprep.subr.bf16.mxu0 0
  %615 = vmatpush1.bf16.msra.mxu0 0
  %616 = vmatprep.subr.bf16.mxu0 0
  %617 = vmatpush1.bf16.msra.mxu0 0
  %618 = vmatprep.subr.bf16.mxu0 0
  %619 = vmatpush1.bf16.msra.mxu0 0
  %620 = vmatprep.subr.bf16.mxu0 0
  %621 = vmatpush1.bf16.msra.mxu0 0
  %622 = vmatprep.subr.bf16.mxu0 0
  %623 = vmatpush1.bf16.msra.mxu0 0
  %624 = vmatprep.mubr.bf16.mxu0 0
  %625 = vmatmul.mubr.bf16.gmra.mrb[0].mxu0 %v590
  %v626 = vpop.f32.mrb[0].mxu0
  %v627 = vadd.f32 0.0, %v626
  %v628 = vpop.f32.mrb[0].mxu0
  %v629 = vpop.f32.mrb[0].mxu0
  %v630 = vadd.f32 0.0, %v629
  %v631 = vpop.f32.mrb[0].mxu0
  %632 = vdwg.mxu0
  %v633 = vadd.f32 %v315, %v627
  %v634 = vadd.f32 %v316, %v630
  %v635 = vld [vmem:[%s14] sm:$0x1]
  %v637 = vlaneseq
  %v638 = vshrl.u32 %v637, 7
  %v639 = vsub.s32 0, %v638
  %v640 = vrot.slane %v635, %v639
  %v642 = vadd.f32 %v633, %v640
  %v643 = vadd.f32 %v634, %v640
  %s644 = scalar_lea.vmem %s9, 16
  %v645 = vld [vmem:[%s644] sm:$0xf]
  %v646 = vld [vmem:[%s644 + $0x4] sm:$0xf]
  %v647 = vld [vmem:[%s644 + $0x8] sm:$0xf]
  %v648 = vld [vmem:[%s644 + $0xc] sm:$0xf]
  %v649 = vpack.c.bf16 %v643, %v642
  %s650 = scalar_lea.vmem %s10, 1
  %v651 = vld [vmem:[%s650] sm:$0x1]
  %v653 = vlaneseq
  %v654 = vshrl.u32 %v653, 7
  %v655 = vsub.s32 0, %v654
  %v656 = vrot.slane %v651, %v655
  %v662 = vunpack.c.l.b16 %v645
  %v663 = vunpack.c.l.b16 %v646
  %v664 = vunpack.c.l.b16 %v647
  %v665 = vunpack.c.l.b16 %v648
  %v666 = vpack.c.b16 %v663, %v662
  %v667 = vpack.c.b16 %v665, %v664
  %v671 = vsel %vm216, %v649, 0
  %673 = vmatprep.subr.bf16.mxu0 0
  %674 = vmatpush1.bf16.msra.mxu0 %v666
  %675 = vmatprep.subr.bf16.mxu0 0
  %676 = vmatpush1.bf16.msra.mxu0 %v667
  %677 = vmatprep.subr.bf16.mxu0 0
  %678 = vmatpush1.bf16.msra.mxu0 0
  %679 = vmatprep.subr.bf16.mxu0 0
  %680 = vmatpush1.bf16.msra.mxu0 0
  %681 = vmatprep.subr.bf16.mxu0 0
  %682 = vmatpush1.bf16.msra.mxu0 0
  %683 = vmatprep.subr.bf16.mxu0 0
  %684 = vmatpush1.bf16.msra.mxu0 0
  %685 = vmatprep.subr.bf16.mxu0 0
  %686 = vmatpush1.bf16.msra.mxu0 0
  %687 = vmatprep.subr.bf16.mxu0 0
  %688 = vmatpush1.bf16.msra.mxu0 0
  %689 = vmatprep.subr.bf16.mxu0 0
  %690 = vmatpush1.bf16.msra.mxu0 0
  %691 = vmatprep.subr.bf16.mxu0 0
  %692 = vmatpush1.bf16.msra.mxu0 0
  %693 = vmatprep.subr.bf16.mxu0 0
  %694 = vmatpush1.bf16.msra.mxu0 0
  %695 = vmatprep.subr.bf16.mxu0 0
  %696 = vmatpush1.bf16.msra.mxu0 0
  %697 = vmatprep.subr.bf16.mxu0 0
  %698 = vmatpush1.bf16.msra.mxu0 0
  %699 = vmatprep.subr.bf16.mxu0 0
  %700 = vmatpush1.bf16.msra.mxu0 0
  %701 = vmatprep.subr.bf16.mxu0 0
  %702 = vmatpush1.bf16.msra.mxu0 0
  %703 = vmatprep.subr.bf16.mxu0 0
  %704 = vmatpush1.bf16.msra.mxu0 0
  %705 = vmatprep.mubr.bf16.mxu0 0
  %706 = vmatmul.mubr.bf16.gmra.mrb[0].mxu0 %v671
  %v707 = vpop.f32.mrb[0].mxu0
  %v708 = vadd.f32 %v656, %v707
  %v709 = vpop.f32.mrb[0].mxu0
  %v710 = vpop.f32.mrb[0].mxu0
  %v711 = vadd.f32 %v656, %v710
  %v712 = vpop.f32.mrb[0].mxu0
  %713 = vdwg.mxu0
  %v714 = vmax.f32 %v708, 0.0
  %v715 = vmax.f32 %v711, 0.0
  %vm716 = vcmp.ge.s32.totalorder %v391, 8
  %vm717 = vcmp.ge.s32.totalorder %v392, 8
  %v718 = vsel %vm716, %v715, 0.0
  %v719 = vsel %vm717, %v714, 0.0
  %v720 = vrot.slane %v714, 4
  %v721 = vrot.slane %v715, 4
  %v722 = vsel %vm467, %v720, %v721
  %v723 = vsel %vm467, %v721, %v720
  %v724 = vsel %vm463, %v723, 0.0
  %v725 = vsel %vm464, %v722, 0.0
  %728 = vrot.lane.b32.xlu0 %v724, 16
  %v729 = vpop.permute.xlu0 %728
  %730 = vrot.lane.b32.xlu0 %v725, 16
  %v731 = vpop.permute.xlu0 %730
  %736 = vrot.lane.b32.xlu0 %v714, 32
  %v737 = vpop.permute.xlu0 %736
  %738 = vrot.lane.b32.xlu0 %v715, 32
  %v739 = vpop.permute.xlu0 %738
  %v742 = vsel %vm270, %v718, %v729
  %v743 = vsel %vm270, %v719, %v731
  %v744 = vsel %vm216, %v742, %v737
  %v745 = vsel %vm216, %v743, %v739
  %s746 = scalar_lea.vmem %s11, 24
  %v747 = vld [vmem:[%s746] sm:$0xf]
  %v748 = vld [vmem:[%s746 + $0x4] sm:$0xf]
  %v749 = vld [vmem:[%s746 + $0x8] sm:$0xf]
  %v750 = vld [vmem:[%s746 + $0xc] sm:$0xf]
  %v751 = vld [vmem:[%s746 + $0x10] sm:$0xf]
  %v752 = vld [vmem:[%s746 + $0x14] sm:$0xf]
  %v753 = vpack.c.bf16 %v745, %v744
  %s754 = scalar_lea.vmem %s12, 1
  %v755 = vld [vmem:[%s754] sm:$0x1]
  %v757 = vlaneseq
  %v758 = vshrl.u32 %v757, 7
  %v759 = vsub.s32 0, %v758
  %v760 = vrot.slane %v755, %v759
  %v768 = vunpack.c.l.b16 %v747
  %v769 = vunpack.c.l.b16 %v748
  %v770 = vunpack.c.l.b16 %v749
  %v771 = vunpack.c.l.b16 %v750
  %v772 = vunpack.c.l.b16 %v751
  %v773 = vunpack.c.l.b16 %v752
  %v774 = vpack.c.b16 %v769, %v768
  %v775 = vpack.c.b16 %v771, %v770
  %v776 = vpack.c.b16 %v773, %v772
  %v781 = vsel %vm533, %v753, 0
  %783 = vmatprep.subr.bf16.mxu0 0
  %784 = vmatpush1.bf16.msra.mxu0 %v774
  %785 = vmatprep.subr.bf16.mxu0 0
  %786 = vmatpush1.bf16.msra.mxu0 %v775
  %787 = vmatprep.subr.bf16.mxu0 0
  %788 = vmatpush1.bf16.msra.mxu0 %v776
  %789 = vmatprep.subr.bf16.mxu0 0
  %790 = vmatpush1.bf16.msra.mxu0 0
  %791 = vmatprep.subr.bf16.mxu0 0
  %792 = vmatpush1.bf16.msra.mxu0 0
  %793 = vmatprep.subr.bf16.mxu0 0
  %794 = vmatpush1.bf16.msra.mxu0 0
  %795 = vmatprep.subr.bf16.mxu0 0
  %796 = vmatpush1.bf16.msra.mxu0 0
  %797 = vmatprep.subr.bf16.mxu0 0
  %798 = vmatpush1.bf16.msra.mxu0 0
  %799 = vmatprep.subr.bf16.mxu0 0
  %800 = vmatpush1.bf16.msra.mxu0 0
  %801 = vmatprep.subr.bf16.mxu0 0
  %802 = vmatpush1.bf16.msra.mxu0 0
  %803 = vmatprep.subr.bf16.mxu0 0
  %804 = vmatpush1.bf16.msra.mxu0 0
  %805 = vmatprep.subr.bf16.mxu0 0
  %806 = vmatpush1.bf16.msra.mxu0 0
  %807 = vmatprep.subr.bf16.mxu0 0
  %808 = vmatpush1.bf16.msra.mxu0 0
  %809 = vmatprep.subr.bf16.mxu0 0
  %810 = vmatpush1.bf16.msra.mxu0 0
  %811 = vmatprep.subr.bf16.mxu0 0
  %812 = vmatpush1.bf16.msra.mxu0 0
  %813 = vmatprep.subr.bf16.mxu0 0
  %814 = vmatpush1.bf16.msra.mxu0 0
  %815 = vmatprep.mubr.bf16.mxu0 0
  %816 = vmatmul.mubr.bf16.gmra.mrb[0].mxu0 %v781
  %v817 = vpop.f32.mrb[0].mxu0
  %v818 = vadd.f32 %v760, %v817
  %v819 = vpop.f32.mrb[0].mxu0
  %v820 = vpop.f32.mrb[0].mxu0
  %v821 = vadd.f32 %v760, %v820
  %v822 = vpop.f32.mrb[0].mxu0
  %823 = vdwg.mxu0
  %v824 = vmax.f32 %v818, 0.0
  %v825 = vmax.f32 %v821, 0.0
  %s826 = scalar_lea.vmem %s13, 8
  %v827 = vld [vmem:[%s826] sm:$0xf]
  %v828 = vld [vmem:[%s826 + $0x4] sm:$0xf]
  %v829 = vpack.c.bf16 %v825, %v824
  %v832 = vunpack.c.l.b16 %v827
  %v833 = vunpack.c.l.b16 %v828
  %v834 = vpack.c.b16 %v833, %v832
  %v837 = vsel %vm270, %v829, 0
  %839 = vmatprep.subr.bf16.mxu0 0
  %840 = vmatpush1.bf16.msra.mxu0 %v834
  %841 = vmatprep.subr.bf16.mxu0 0
  %842 = vmatpush1.bf16.msra.mxu0 0
  %843 = vmatprep.subr.bf16.mxu0 0
  %844 = vmatpush1.bf16.msra.mxu0 0
  %845 = vmatprep.subr.bf16.mxu0 0
  %846 = vmatpush1.bf16.msra.mxu0 0
  %847 = vmatprep.subr.bf16.mxu0 0
  %848 = vmatpush1.bf16.msra.mxu0 0
  %849 = vmatprep.subr.bf16.mxu0 0
  %850 = vmatpush1.bf16.msra.mxu0 0
  %851 = vmatprep.subr.bf16.mxu0 0
  %852 = vmatpush1.bf16.msra.mxu0 0
  %853 = vmatprep.subr.bf16.mxu0 0
  %854 = vmatpush1.bf16.msra.mxu0 0
  %855 = vmatprep.subr.bf16.mxu0 0
  %856 = vmatpush1.bf16.msra.mxu0 0
  %857 = vmatprep.subr.bf16.mxu0 0
  %858 = vmatpush1.bf16.msra.mxu0 0
  %859 = vmatprep.subr.bf16.mxu0 0
  %860 = vmatpush1.bf16.msra.mxu0 0
  %861 = vmatprep.subr.bf16.mxu0 0
  %862 = vmatpush1.bf16.msra.mxu0 0
  %863 = vmatprep.subr.bf16.mxu0 0
  %864 = vmatpush1.bf16.msra.mxu0 0
  %865 = vmatprep.subr.bf16.mxu0 0
  %866 = vmatpush1.bf16.msra.mxu0 0
  %867 = vmatprep.subr.bf16.mxu0 0
  %868 = vmatpush1.bf16.msra.mxu0 0
  %869 = vmatprep.subr.bf16.mxu0 0
  %870 = vmatpush1.bf16.msra.mxu0 0
  %871 = vmatprep.mubr.bf16.mxu0 0
  %872 = vmatmul.mubr.bf16.gmra.mrb[0].mxu0 %v837
  %v873 = vpop.f32.mrb[0].mxu0
  %v874 = vadd.f32 0.0, %v873
  %v875 = vpop.f32.mrb[0].mxu0
  %v876 = vpop.f32.mrb[0].mxu0
  %v877 = vadd.f32 0.0, %v876
  %v878 = vpop.f32.mrb[0].mxu0
  %879 = vdwg.mxu0
  %v880 = vadd.f32 %v642, %v874
  %v881 = vadd.f32 %v643, %v877
  %s882 = scalar_lea.vmem %s14, 1
  %v883 = vld [vmem:[%s882] sm:$0x1]
  %v885 = vlaneseq
  %v886 = vshrl.u32 %v885, 7
  %v887 = vsub.s32 0, %v886
  %v888 = vrot.slane %v883, %v887
  %v890 = vadd.f32 %v880, %v888
  %v891 = vadd.f32 %v881, %v888
  %s892 = scalar_lea.vmem %s9, 32
  %v893 = vld [vmem:[%s892] sm:$0xf]
  %v894 = vld [vmem:[%s892 + $0x4] sm:$0xf]
  %v895 = vld [vmem:[%s892 + $0x8] sm:$0xf]
  %v896 = vld [vmem:[%s892 + $0xc] sm:$0xf]
  %v897 = vpack.c.bf16 %v891, %v890
  %s898 = scalar_lea.vmem %s10, 2
  %v899 = vld [vmem:[%s898] sm:$0x1]
  %v901 = vlaneseq
  %v902 = vshrl.u32 %v901, 7
  %v903 = vsub.s32 0, %v902
  %v904 = vrot.slane %v899, %v903
  %v910 = vunpack.c.l.b16 %v893
  %v911 = vunpack.c.l.b16 %v894
  %v912 = vunpack.c.l.b16 %v895
  %v913 = vunpack.c.l.b16 %v896
  %v914 = vpack.c.b16 %v911, %v910
  %v915 = vpack.c.b16 %v913, %v912
  %v919 = vsel %vm216, %v897, 0
  %921 = vmatprep.subr.bf16.mxu0 0
  %922 = vmatpush1.bf16.msra.mxu0 %v914
  %923 = vmatprep.subr.bf16.mxu0 0
  %924 = vmatpush1.bf16.msra.mxu0 %v915
  %925 = vmatprep.subr.bf16.mxu0 0
  %926 = vmatpush1.bf16.msra.mxu0 0
  %927 = vmatprep.subr.bf16.mxu0 0
  %928 = vmatpush1.bf16.msra.mxu0 0
  %929 = vmatprep.subr.bf16.mxu0 0
  %930 = vmatpush1.bf16.msra.mxu0 0
  %931 = vmatprep.subr.bf16.mxu0 0
  %932 = vmatpush1.bf16.msra.mxu0 0
  %933 = vmatprep.subr.bf16.mxu0 0
  %934 = vmatpush1.bf16.msra.mxu0 0
  %935 = vmatprep.subr.bf16.mxu0 0
  %936 = vmatpush1.bf16.msra.mxu0 0
  %937 = vmatprep.subr.bf16.mxu0 0
  %938 = vmatpush1.bf16.msra.mxu0 0
  %939 = vmatprep.subr.bf16.mxu0 0
  %940 = vmatpush1.bf16.msra.mxu0 0
  %941 = vmatprep.subr.bf16.mxu0 0
  %942 = vmatpush1.bf16.msra.mxu0 0
  %943 = vmatprep.subr.bf16.mxu0 0
  %944 = vmatpush1.bf16.msra.mxu0 0
  %945 = vmatprep.subr.bf16.mxu0 0
  %946 = vmatpush1.bf16.msra.mxu0 0
  %947 = vmatprep.subr.bf16.mxu0 0
  %948 = vmatpush1.bf16.msra.mxu0 0
  %949 = vmatprep.subr.bf16.mxu0 0
  %950 = vmatpush1.bf16.msra.mxu0 0
  %951 = vmatprep.subr.bf16.mxu0 0
  %952 = vmatpush1.bf16.msra.mxu0 0
  %953 = vmatprep.mubr.bf16.mxu0 0
  %954 = vmatmul.mubr.bf16.gmra.mrb[0].mxu0 %v919
  %v955 = vpop.f32.mrb[0].mxu0
  %v956 = vadd.f32 %v904, %v955
  %v957 = vpop.f32.mrb[0].mxu0
  %v958 = vpop.f32.mrb[0].mxu0
  %v959 = vadd.f32 %v904, %v958
  %v960 = vpop.f32.mrb[0].mxu0
  %961 = vdwg.mxu0
  %v962 = vmax.f32 %v956, 0.0
  %v963 = vmax.f32 %v959, 0.0
  %v964 = vrot.slane %v962, 4
  %v965 = vrot.slane %v963, 4
  %v966 = vsel %vm467, %v964, %v965
  %v967 = vsel %vm467, %v965, %v964
  %v968 = vsel %vm463, %v967, 0.0
  %v969 = vsel %vm464, %v966, 0.0
  %v970 = vrot.slane %v962, 6
  %v971 = vrot.slane %v963, 6
  %v972 = vsel %vm476, %v970, %v971
  %v973 = vsel %vm476, %v971, %v970
  %v974 = vsel %vm472, %v973, 0.0
  %v975 = vsel %vm473, %v972, 0.0
  %978 = vrot.lane.b32.xlu0 %v974, 16
  %v979 = vpop.permute.xlu0 %978
  %980 = vrot.lane.b32.xlu0 %v975, 16
  %v981 = vpop.permute.xlu0 %980
  %986 = vrot.lane.b32.xlu0 %v962, 32
  %v987 = vpop.permute.xlu0 %986
  %988 = vrot.lane.b32.xlu0 %v963, 32
  %v989 = vpop.permute.xlu0 %988
  %v992 = vsel %vm270, %v968, %v979
  %v993 = vsel %vm270, %v969, %v981
  %v994 = vsel %vm216, %v992, %v987
  %v995 = vsel %vm216, %v993, %v989
  %s996 = scalar_lea.vmem %s11, 48
  %v997 = vld [vmem:[%s996] sm:$0xf]
  %v998 = vld [vmem:[%s996 + $0x4] sm:$0xf]
  %v999 = vld [vmem:[%s996 + $0x8] sm:$0xf]
  %v1000 = vld [vmem:[%s996 + $0xc] sm:$0xf]
  %v1001 = vld [vmem:[%s996 + $0x10] sm:$0xf]
  %v1002 = vld [vmem:[%s996 + $0x14] sm:$0xf]
  %v1003 = vpack.c.bf16 %v995, %v994
  %s1004 = scalar_lea.vmem %s12, 2
  %v1005 = vld [vmem:[%s1004] sm:$0x1]
  %v1007 = vlaneseq
  %v1008 = vshrl.u32 %v1007, 7
  %v1009 = vsub.s32 0, %v1008
  %v1010 = vrot.slane %v1005, %v1009
  %v1018 = vunpack.c.l.b16 %v997
  %v1019 = vunpack.c.l.b16 %v998
  %v1020 = vunpack.c.l.b16 %v999
  %v1021 = vunpack.c.l.b16 %v1000
  %v1022 = vunpack.c.l.b16 %v1001
  %v1023 = vunpack.c.l.b16 %v1002
  %v1024 = vpack.c.b16 %v1019, %v1018
  %v1025 = vpack.c.b16 %v1021, %v1020
  %v1026 = vpack.c.b16 %v1023, %v1022
  %v1031 = vsel %vm533, %v1003, 0
  %1033 = vmatprep.subr.bf16.mxu0 0
  %1034 = vmatpush1.bf16.msra.mxu0 %v1024
  %1035 = vmatprep.subr.bf16.mxu0 0
  %1036 = vmatpush1.bf16.msra.mxu0 %v1025
  %1037 = vmatprep.subr.bf16.mxu0 0
  %1038 = vmatpush1.bf16.msra.mxu0 %v1026
  %1039 = vmatprep.subr.bf16.mxu0 0
  %1040 = vmatpush1.bf16.msra.mxu0 0
  %1041 = vmatprep.subr.bf16.mxu0 0
  %1042 = vmatpush1.bf16.msra.mxu0 0
  %1043 = vmatprep.subr.bf16.mxu0 0
  %1044 = vmatpush1.bf16.msra.mxu0 0
  %1045 = vmatprep.subr.bf16.mxu0 0
  %1046 = vmatpush1.bf16.msra.mxu0 0
  %1047 = vmatprep.subr.bf16.mxu0 0
  %1048 = vmatpush1.bf16.msra.mxu0 0
  %1049 = vmatprep.subr.bf16.mxu0 0
  %1050 = vmatpush1.bf16.msra.mxu0 0
  %1051 = vmatprep.subr.bf16.mxu0 0
  %1052 = vmatpush1.bf16.msra.mxu0 0
  %1053 = vmatprep.subr.bf16.mxu0 0
  %1054 = vmatpush1.bf16.msra.mxu0 0
  %1055 = vmatprep.subr.bf16.mxu0 0
  %1056 = vmatpush1.bf16.msra.mxu0 0
  %1057 = vmatprep.subr.bf16.mxu0 0
  %1058 = vmatpush1.bf16.msra.mxu0 0
  %1059 = vmatprep.subr.bf16.mxu0 0
  %1060 = vmatpush1.bf16.msra.mxu0 0
  %1061 = vmatprep.subr.bf16.mxu0 0
  %1062 = vmatpush1.bf16.msra.mxu0 0
  %1063 = vmatprep.subr.bf16.mxu0 0
  %1064 = vmatpush1.bf16.msra.mxu0 0
  %1065 = vmatprep.mubr.bf16.mxu0 0
  %1066 = vmatmul.mubr.bf16.gmra.mrb[0].mxu0 %v1031
  %v1067 = vpop.f32.mrb[0].mxu0
  %v1068 = vadd.f32 %v1010, %v1067
  %v1069 = vpop.f32.mrb[0].mxu0
  %v1070 = vpop.f32.mrb[0].mxu0
  %v1071 = vadd.f32 %v1010, %v1070
  %v1072 = vpop.f32.mrb[0].mxu0
  %1073 = vdwg.mxu0
  %v1074 = vmax.f32 %v1068, 0.0
  %v1075 = vmax.f32 %v1071, 0.0
  %s1076 = scalar_lea.vmem %s13, 16
  %v1077 = vld [vmem:[%s1076] sm:$0xf]
  %v1078 = vld [vmem:[%s1076 + $0x4] sm:$0xf]
  %v1079 = vpack.c.bf16 %v1075, %v1074
  %v1082 = vunpack.c.l.b16 %v1077
  %v1083 = vunpack.c.l.b16 %v1078
  %v1084 = vpack.c.b16 %v1083, %v1082
  %v1087 = vsel %vm270, %v1079, 0
  %1089 = vmatprep.subr.bf16.mxu0 0
  %1090 = vmatpush1.bf16.msra.mxu0 %v1084
  %1091 = vmatprep.subr.bf16.mxu0 0
  %1092 = vmatpush1.bf16.msra.mxu0 0
  %1093 = vmatprep.subr.bf16.mxu0 0
  %1094 = vmatpush1.bf16.msra.mxu0 0
  %1095 = vmatprep.subr.bf16.mxu0 0
  %1096 = vmatpush1.bf16.msra.mxu0 0
  %1097 = vmatprep.subr.bf16.mxu0 0
  %1098 = vmatpush1.bf16.msra.mxu0 0
  %1099 = vmatprep.subr.bf16.mxu0 0
  %1100 = vmatpush1.bf16.msra.mxu0 0
  %1101 = vmatprep.subr.bf16.mxu0 0
  %1102 = vmatpush1.bf16.msra.mxu0 0
  %1103 = vmatprep.subr.bf16.mxu0 0
  %1104 = vmatpush1.bf16.msra.mxu0 0
  %1105 = vmatprep.subr.bf16.mxu0 0
  %1106 = vmatpush1.bf16.msra.mxu0 0
  %1107 = vmatprep.subr.bf16.mxu0 0
  %1108 = vmatpush1.bf16.msra.mxu0 0
  %1109 = vmatprep.subr.bf16.mxu0 0
  %1110 = vmatpush1.bf16.msra.mxu0 0
  %1111 = vmatprep.subr.bf16.mxu0 0
  %1112 = vmatpush1.bf16.msra.mxu0 0
  %1113 = vmatprep.subr.bf16.mxu0 0
  %1114 = vmatpush1.bf16.msra.mxu0 0
  %1115 = vmatprep.subr.bf16.mxu0 0
  %1116 = vmatpush1.bf16.msra.mxu0 0
  %1117 = vmatprep.subr.bf16.mxu0 0
  %1118 = vmatpush1.bf16.msra.mxu0 0
  %1119 = vmatprep.subr.bf16.mxu0 0
  %1120 = vmatpush1.bf16.msra.mxu0 0
  %1121 = vmatprep.mubr.bf16.mxu0 0
  %1122 = vmatmul.mubr.bf16.gmra.mrb[0].mxu0 %v1087
  %v1123 = vpop.f32.mrb[0].mxu0
  %v1124 = vadd.f32 0.0, %v1123
  %v1125 = vpop.f32.mrb[0].mxu0
  %v1126 = vpop.f32.mrb[0].mxu0
  %v1127 = vadd.f32 0.0, %v1126
  %v1128 = vpop.f32.mrb[0].mxu0
  %1129 = vdwg.mxu0
  %v1130 = vadd.f32 %v890, %v1124
  %v1131 = vadd.f32 %v891, %v1127
  %s1132 = scalar_lea.vmem %s14, 2
  %v1133 = vld [vmem:[%s1132] sm:$0x1]
  %v1135 = vlaneseq
  %v1136 = vshrl.u32 %v1135, 7
  %v1137 = vsub.s32 0, %v1136
  %v1138 = vrot.slane %v1133, %v1137
  %v1140 = vadd.f32 %v1130, %v1138
  %v1141 = vadd.f32 %v1131, %v1138
  %s1142 = scalar_lea.vmem %s9, 48
  %v1143 = vld [vmem:[%s1142] sm:$0xf]
  %v1144 = vld [vmem:[%s1142 + $0x4] sm:$0xf]
  %v1145 = vld [vmem:[%s1142 + $0x8] sm:$0xf]
  %v1146 = vld [vmem:[%s1142 + $0xc] sm:$0xf]
  %v1147 = vpack.c.bf16 %v1141, %v1140
  %s1148 = scalar_lea.vmem %s10, 3
  %v1149 = vld [vmem:[%s1148] sm:$0x1]
  %v1151 = vlaneseq
  %v1152 = vshrl.u32 %v1151, 7
  %v1153 = vsub.s32 0, %v1152
  %v1154 = vrot.slane %v1149, %v1153
  %v1160 = vunpack.c.l.b16 %v1143
  %v1161 = vunpack.c.l.b16 %v1144
  %v1162 = vunpack.c.l.b16 %v1145
  %v1163 = vunpack.c.l.b16 %v1146
  %v1164 = vpack.c.b16 %v1161, %v1160
  %v1165 = vpack.c.b16 %v1163, %v1162
  %v1169 = vsel %vm216, %v1147, 0
  %1171 = vmatprep.subr.bf16.mxu0 0
  %1172 = vmatpush1.bf16.msra.mxu0 %v1164
  %1173 = vmatprep.subr.bf16.mxu0 0
  %1174 = vmatpush1.bf16.msra.mxu0 %v1165
  %1175 = vmatprep.subr.bf16.mxu0 0
  %1176 = vmatpush1.bf16.msra.mxu0 0
  %1177 = vmatprep.subr.bf16.mxu0 0
  %1178 = vmatpush1.bf16.msra.mxu0 0
  %1179 = vmatprep.subr.bf16.mxu0 0
  %1180 = vmatpush1.bf16.msra.mxu0 0
  %1181 = vmatprep.subr.bf16.mxu0 0
  %1182 = vmatpush1.bf16.msra.mxu0 0
  %1183 = vmatprep.subr.bf16.mxu0 0
  %1184 = vmatpush1.bf16.msra.mxu0 0
  %1185 = vmatprep.subr.bf16.mxu0 0
  %1186 = vmatpush1.bf16.msra.mxu0 0
  %1187 = vmatprep.subr.bf16.mxu0 0
  %1188 = vmatpush1.bf16.msra.mxu0 0
  %1189 = vmatprep.subr.bf16.mxu0 0
  %1190 = vmatpush1.bf16.msra.mxu0 0
  %1191 = vmatprep.subr.bf16.mxu0 0
  %1192 = vmatpush1.bf16.msra.mxu0 0
  %1193 = vmatprep.subr.bf16.mxu0 0
  %1194 = vmatpush1.bf16.msra.mxu0 0
  %1195 = vmatprep.subr.bf16.mxu0 0
  %1196 = vmatpush1.bf16.msra.mxu0 0
  %1197 = vmatprep.subr.bf16.mxu0 0
  %1198 = vmatpush1.bf16.msra.mxu0 0
  %1199 = vmatprep.subr.bf16.mxu0 0
  %1200 = vmatpush1.bf16.msra.mxu0 0
  %1201 = vmatprep.subr.bf16.mxu0 0
  %1202 = vmatpush1.bf16.msra.mxu0 0
  %1203 = vmatprep.mubr.bf16.mxu0 0
  %1204 = vmatmul.mubr.bf16.gmra.mrb[0].mxu0 %v1169
  %v1205 = vpop.f32.mrb[0].mxu0
  %v1206 = vadd.f32 %v1154, %v1205
  %v1207 = vpop.f32.mrb[0].mxu0
  %v1208 = vpop.f32.mrb[0].mxu0
  %v1209 = vadd.f32 %v1154, %v1208
  %v1210 = vpop.f32.mrb[0].mxu0
  %1211 = vdwg.mxu0
  %v1212 = vmax.f32 %v1206, 0.0
  %v1213 = vmax.f32 %v1209, 0.0
  %v1214 = vsel %vm716, %v1213, 0.0
  %v1215 = vsel %vm717, %v1212, 0.0
  %v1216 = vrot.slane %v1212, 4
  %v1217 = vrot.slane %v1213, 4
  %v1218 = vsel %vm467, %v1216, %v1217
  %v1219 = vsel %vm467, %v1217, %v1216
  %v1220 = vsel %vm463, %v1219, 0.0
  %v1221 = vsel %vm464, %v1218, 0.0
  %1224 = vrot.lane.b32.xlu0 %v1220, 16
  %v1225 = vpop.permute.xlu0 %1224
  %1226 = vrot.lane.b32.xlu0 %v1221, 16
  %v1227 = vpop.permute.xlu0 %1226
  %1232 = vrot.lane.b32.xlu0 %v1212, 32
  %v1233 = vpop.permute.xlu0 %1232
  %1234 = vrot.lane.b32.xlu0 %v1213, 32
  %v1235 = vpop.permute.xlu0 %1234
  %v1238 = vsel %vm270, %v1214, %v1225
  %v1239 = vsel %vm270, %v1215, %v1227
  %v1240 = vsel %vm216, %v1238, %v1233
  %v1241 = vsel %vm216, %v1239, %v1235
  %s1242 = scalar_lea.vmem %s11, 72
  %v1243 = vld [vmem:[%s1242] sm:$0xf]
  %v1244 = vld [vmem:[%s1242 + $0x4] sm:$0xf]
  %v1245 = vld [vmem:[%s1242 + $0x8] sm:$0xf]
  %v1246 = vld [vmem:[%s1242 + $0xc] sm:$0xf]
  %v1247 = vld [vmem:[%s1242 + $0x10] sm:$0xf]
  %v1248 = vld [vmem:[%s1242 + $0x14] sm:$0xf]
  %v1249 = vpack.c.bf16 %v1241, %v1240
  %s1250 = scalar_lea.vmem %s12, 3
  %v1251 = vld [vmem:[%s1250] sm:$0x1]
  %v1253 = vlaneseq
  %v1254 = vshrl.u32 %v1253, 7
  %v1255 = vsub.s32 0, %v1254
  %v1256 = vrot.slane %v1251, %v1255
  %v1264 = vunpack.c.l.b16 %v1243
  %v1265 = vunpack.c.l.b16 %v1244
  %v1266 = vunpack.c.l.b16 %v1245
  %v1267 = vunpack.c.l.b16 %v1246
  %v1268 = vunpack.c.l.b16 %v1247
  %v1269 = vunpack.c.l.b16 %v1248
  %v1270 = vpack.c.b16 %v1265, %v1264
  %v1271 = vpack.c.b16 %v1267, %v1266
  %v1272 = vpack.c.b16 %v1269, %v1268
  %v1277 = vsel %vm533, %v1249, 0
  %1279 = vmatprep.subr.bf16.mxu0 0
  %1280 = vmatpush1.bf16.msra.mxu0 %v1270
  %1281 = vmatprep.subr.bf16.mxu0 0
  %1282 = vmatpush1.bf16.msra.mxu0 %v1271
  %1283 = vmatprep.subr.bf16.mxu0 0
  %1284 = vmatpush1.bf16.msra.mxu0 %v1272
  %1285 = vmatprep.subr.bf16.mxu0 0
  %1286 = vmatpush1.bf16.msra.mxu0 0
  %1287 = vmatprep.subr.bf16.mxu0 0
  %1288 = vmatpush1.bf16.msra.mxu0 0
  %1289 = vmatprep.subr.bf16.mxu0 0
  %1290 = vmatpush1.bf16.msra.mxu0 0
  %1291 = vmatprep.subr.bf16.mxu0 0
  %1292 = vmatpush1.bf16.msra.mxu0 0
  %1293 = vmatprep.subr.bf16.mxu0 0
  %1294 = vmatpush1.bf16.msra.mxu0 0
  %1295 = vmatprep.subr.bf16.mxu0 0
  %1296 = vmatpush1.bf16.msra.mxu0 0
  %1297 = vmatprep.subr.bf16.mxu0 0
  %1298 = vmatpush1.bf16.msra.mxu0 0
  %1299 = vmatprep.subr.bf16.mxu0 0
  %1300 = vmatpush1.bf16.msra.mxu0 0
  %1301 = vmatprep.subr.bf16.mxu0 0
  %1302 = vmatpush1.bf16.msra.mxu0 0
  %1303 = vmatprep.subr.bf16.mxu0 0
  %1304 = vmatpush1.bf16.msra.mxu0 0
  %1305 = vmatprep.subr.bf16.mxu0 0
  %1306 = vmatpush1.bf16.msra.mxu0 0
  %1307 = vmatprep.subr.bf16.mxu0 0
  %1308 = vmatpush1.bf16.msra.mxu0 0
  %1309 = vmatprep.subr.bf16.mxu0 0
  %1310 = vmatpush1.bf16.msra.mxu0 0
  %1311 = vmatprep.mubr.bf16.mxu0 0
  %1312 = vmatmul.mubr.bf16.gmra.mrb[0].mxu0 %v1277
  %v1313 = vpop.f32.mrb[0].mxu0
  %v1314 = vadd.f32 %v1256, %v1313
  %v1315 = vpop.f32.mrb[0].mxu0
  %v1316 = vpop.f32.mrb[0].mxu0
  %v1317 = vadd.f32 %v1256, %v1316
  %v1318 = vpop.f32.mrb[0].mxu0
  %1319 = vdwg.mxu0
  %v1320 = vmax.f32 %v1314, 0.0
  %v1321 = vmax.f32 %v1317, 0.0
  %s1322 = scalar_lea.vmem %s13, 24
  %v1323 = vld [vmem:[%s1322] sm:$0xf]
  %v1324 = vld [vmem:[%s1322 + $0x4] sm:$0xf]
  %v1325 = vpack.c.bf16 %v1321, %v1320
  %v1328 = vunpack.c.l.b16 %v1323
  %v1329 = vunpack.c.l.b16 %v1324
  %v1330 = vpack.c.b16 %v1329, %v1328
  %v1333 = vsel %vm270, %v1325, 0
  %1335 = vmatprep.subr.bf16.mxu0 0
  %1336 = vmatpush1.bf16.msra.mxu0 %v1330
  %1337 = vmatprep.subr.bf16.mxu0 0
  %1338 = vmatpush1.bf16.msra.mxu0 0
  %1339 = vmatprep.subr.bf16.mxu0 0
  %1340 = vmatpush1.bf16.msra.mxu0 0
  %1341 = vmatprep.subr.bf16.mxu0 0
  %1342 = vmatpush1.bf16.msra.mxu0 0
  %1343 = vmatprep.subr.bf16.mxu0 0
  %1344 = vmatpush1.bf16.msra.mxu0 0
  %1345 = vmatprep.subr.bf16.mxu0 0
  %1346 = vmatpush1.bf16.msra.mxu0 0
  %1347 = vmatprep.subr.bf16.mxu0 0
  %1348 = vmatpush1.bf16.msra.mxu0 0
  %1349 = vmatprep.subr.bf16.mxu0 0
  %1350 = vmatpush1.bf16.msra.mxu0 0
  %1351 = vmatprep.subr.bf16.mxu0 0
  %1352 = vmatpush1.bf16.msra.mxu0 0
  %1353 = vmatprep.subr.bf16.mxu0 0
  %1354 = vmatpush1.bf16.msra.mxu0 0
  %1355 = vmatprep.subr.bf16.mxu0 0
  %1356 = vmatpush1.bf16.msra.mxu0 0
  %1357 = vmatprep.subr.bf16.mxu0 0
  %1358 = vmatpush1.bf16.msra.mxu0 0
  %1359 = vmatprep.subr.bf16.mxu0 0
  %1360 = vmatpush1.bf16.msra.mxu0 0
  %1361 = vmatprep.subr.bf16.mxu0 0
  %1362 = vmatpush1.bf16.msra.mxu0 0
  %1363 = vmatprep.subr.bf16.mxu0 0
  %1364 = vmatpush1.bf16.msra.mxu0 0
  %1365 = vmatprep.subr.bf16.mxu0 0
  %1366 = vmatpush1.bf16.msra.mxu0 0
  %1367 = vmatprep.mubr.bf16.mxu0 0
  %1368 = vmatmul.mubr.bf16.gmra.mrb[0].mxu0 %v1333
  %v1369 = vpop.f32.mrb[0].mxu0
  %v1370 = vadd.f32 0.0, %v1369
  %v1371 = vpop.f32.mrb[0].mxu0
  %v1372 = vpop.f32.mrb[0].mxu0
  %v1373 = vadd.f32 0.0, %v1372
  %v1374 = vpop.f32.mrb[0].mxu0
  %1375 = vdwg.mxu0
  %v1376 = vadd.f32 %v1140, %v1370
  %v1377 = vadd.f32 %v1141, %v1373
  %s1378 = scalar_lea.vmem %s14, 3
  %v1379 = vld [vmem:[%s1378] sm:$0x1]
  %v1381 = vlaneseq
  %v1382 = vshrl.u32 %v1381, 7
  %v1383 = vsub.s32 0, %v1382
  %v1384 = vrot.slane %v1379, %v1383
  %v1386 = vadd.f32 %v1376, %v1384
  %v1387 = vadd.f32 %v1377, %v1384
  %s1388 = scalar_lea.vmem %s9, 64
  %v1389 = vld [vmem:[%s1388] sm:$0xf]
  %v1390 = vld [vmem:[%s1388 + $0x4] sm:$0xf]
  %v1391 = vld [vmem:[%s1388 + $0x8] sm:$0xf]
  %v1392 = vld [vmem:[%s1388 + $0xc] sm:$0xf]
  %v1393 = vpack.c.bf16 %v389, %v388
  %s1394 = scalar_lea.vmem %s10, 4
  %v1395 = vld [vmem:[%s1394] sm:$0x1]
  %v1397 = vlaneseq
  %v1398 = vshrl.u32 %v1397, 7
  %v1399 = vsub.s32 0, %v1398
  %v1400 = vrot.slane %v1395, %v1399
  %1403 = vrot.lane.b32.xlu0 %v1393, 96
  %v1404 = vpop.permute.xlu0 %1403
  %v1409 = vunpack.c.l.b16 %v1389
  %v1410 = vunpack.c.l.b16 %v1390
  %v1411 = vunpack.c.l.b16 %v1391
  %v1412 = vunpack.c.l.b16 %v1392
  %v1413 = vpack.c.b16 %v1410, %v1409
  %v1414 = vpack.c.b16 %v1412, %v1411
  %v1418 = vsel %vm216, %v1404, 0
  %1420 = vmatprep.subr.bf16.mxu0 0
  %1421 = vmatpush1.bf16.msra.mxu0 %v1413
  %1422 = vmatprep.subr.bf16.mxu0 0
  %1423 = vmatpush1.bf16.msra.mxu0 %v1414
  %1424 = vmatprep.subr.bf16.mxu0 0
  %1425 = vmatpush1.bf16.msra.mxu0 0
  %1426 = vmatprep.subr.bf16.mxu0 0
  %1427 = vmatpush1.bf16.msra.mxu0 0
  %1428 = vmatprep.subr.bf16.mxu0 0
  %1429 = vmatpush1.bf16.msra.mxu0 0
  %1430 = vmatprep.subr.bf16.mxu0 0
  %1431 = vmatpush1.bf16.msra.mxu0 0
  %1432 = vmatprep.subr.bf16.mxu0 0
  %1433 = vmatpush1.bf16.msra.mxu0 0
  %1434 = vmatprep.subr.bf16.mxu0 0
  %1435 = vmatpush1.bf16.msra.mxu0 0
  %1436 = vmatprep.subr.bf16.mxu0 0
  %1437 = vmatpush1.bf16.msra.mxu0 0
  %1438 = vmatprep.subr.bf16.mxu0 0
  %1439 = vmatpush1.bf16.msra.mxu0 0
  %1440 = vmatprep.subr.bf16.mxu0 0
  %1441 = vmatpush1.bf16.msra.mxu0 0
  %1442 = vmatprep.subr.bf16.mxu0 0
  %1443 = vmatpush1.bf16.msra.mxu0 0
  %1444 = vmatprep.subr.bf16.mxu0 0
  %1445 = vmatpush1.bf16.msra.mxu0 0
  %1446 = vmatprep.subr.bf16.mxu0 0
  %1447 = vmatpush1.bf16.msra.mxu0 0
  %1448 = vmatprep.subr.bf16.mxu0 0
  %1449 = vmatpush1.bf16.msra.mxu0 0
  %1450 = vmatprep.subr.bf16.mxu0 0
  %1451 = vmatpush1.bf16.msra.mxu0 0
  %1452 = vmatprep.mubr.bf16.mxu0 0
  %1453 = vmatmul.mubr.bf16.gmra.mrb[0].mxu0 %v1418
  %v1454 = vpop.f32.mrb[0].mxu0
  %v1455 = vadd.f32 %v1400, %v1454
  %v1456 = vpop.f32.mrb[0].mxu0
  %v1457 = vpop.f32.mrb[0].mxu0
  %v1458 = vadd.f32 %v1400, %v1457
  %v1459 = vpop.f32.mrb[0].mxu0
  %1460 = vdwg.mxu0
  %v1461 = vmax.f32 %v1455, 0.0
  %v1462 = vmax.f32 %v1458, 0.0
  %v1463 = vrot.slane %v1461, 4
  %v1464 = vrot.slane %v1462, 4
  %v1465 = vsel %vm467, %v1463, %v1464
  %v1466 = vsel %vm467, %v1464, %v1463
  %v1467 = vsel %vm463, %v1466, 0.0
  %v1468 = vsel %vm464, %v1465, 0.0
  %v1469 = vrot.slane %v1461, 6
  %v1470 = vrot.slane %v1462, 6
  %v1471 = vsel %vm476, %v1469, %v1470
  %v1472 = vsel %vm476, %v1470, %v1469
  %v1473 = vsel %vm472, %v1472, 0.0
  %v1474 = vsel %vm473, %v1471, 0.0
  %1477 = vrot.lane.b32.xlu0 %v1473, 16
  %v1478 = vpop.permute.xlu0 %1477
  %1479 = vrot.lane.b32.xlu0 %v1474, 16
  %v1480 = vpop.permute.xlu0 %1479
  %1485 = vrot.lane.b32.xlu0 %v1461, 32
  %v1486 = vpop.permute.xlu0 %1485
  %1487 = vrot.lane.b32.xlu0 %v1462, 32
  %v1488 = vpop.permute.xlu0 %1487
  %v1491 = vsel %vm270, %v1467, %v1478
  %v1492 = vsel %vm270, %v1468, %v1480
  %v1493 = vsel %vm216, %v1491, %v1486
  %v1494 = vsel %vm216, %v1492, %v1488
  %s1495 = scalar_lea.vmem %s11, 96
  %v1496 = vld [vmem:[%s1495] sm:$0xf]
  %v1497 = vld [vmem:[%s1495 + $0x4] sm:$0xf]
  %v1498 = vld [vmem:[%s1495 + $0x8] sm:$0xf]
  %v1499 = vld [vmem:[%s1495 + $0xc] sm:$0xf]
  %v1500 = vld [vmem:[%s1495 + $0x10] sm:$0xf]
  %v1501 = vld [vmem:[%s1495 + $0x14] sm:$0xf]
  %v1502 = vpack.c.bf16 %v1494, %v1493
  %s1503 = scalar_lea.vmem %s12, 4
  %v1504 = vld [vmem:[%s1503] sm:$0x1]
  %v1506 = vlaneseq
  %v1507 = vshrl.u32 %v1506, 7
  %v1508 = vsub.s32 0, %v1507
  %v1509 = vrot.slane %v1504, %v1508
  %v1517 = vunpack.c.l.b16 %v1496
  %v1518 = vunpack.c.l.b16 %v1497
  %v1519 = vunpack.c.l.b16 %v1498
  %v1520 = vunpack.c.l.b16 %v1499
  %v1521 = vunpack.c.l.b16 %v1500
  %v1522 = vunpack.c.l.b16 %v1501
  %v1523 = vpack.c.b16 %v1518, %v1517
  %v1524 = vpack.c.b16 %v1520, %v1519
  %v1525 = vpack.c.b16 %v1522, %v1521
  %v1530 = vsel %vm533, %v1502, 0
  %1532 = vmatprep.subr.bf16.mxu0 0
  %1533 = vmatpush1.bf16.msra.mxu0 %v1523
  %1534 = vmatprep.subr.bf16.mxu0 0
  %1535 = vmatpush1.bf16.msra.mxu0 %v1524
  %1536 = vmatprep.subr.bf16.mxu0 0
  %1537 = vmatpush1.bf16.msra.mxu0 %v1525
  %1538 = vmatprep.subr.bf16.mxu0 0
  %1539 = vmatpush1.bf16.msra.mxu0 0
  %1540 = vmatprep.subr.bf16.mxu0 0
  %1541 = vmatpush1.bf16.msra.mxu0 0
  %1542 = vmatprep.subr.bf16.mxu0 0
  %1543 = vmatpush1.bf16.msra.mxu0 0
  %1544 = vmatprep.subr.bf16.mxu0 0
  %1545 = vmatpush1.bf16.msra.mxu0 0
  %1546 = vmatprep.subr.bf16.mxu0 0
  %1547 = vmatpush1.bf16.msra.mxu0 0
  %1548 = vmatprep.subr.bf16.mxu0 0
  %1549 = vmatpush1.bf16.msra.mxu0 0
  %1550 = vmatprep.subr.bf16.mxu0 0
  %1551 = vmatpush1.bf16.msra.mxu0 0
  %1552 = vmatprep.subr.bf16.mxu0 0
  %1553 = vmatpush1.bf16.msra.mxu0 0
  %1554 = vmatprep.subr.bf16.mxu0 0
  %1555 = vmatpush1.bf16.msra.mxu0 0
  %1556 = vmatprep.subr.bf16.mxu0 0
  %1557 = vmatpush1.bf16.msra.mxu0 0
  %1558 = vmatprep.subr.bf16.mxu0 0
  %1559 = vmatpush1.bf16.msra.mxu0 0
  %1560 = vmatprep.subr.bf16.mxu0 0
  %1561 = vmatpush1.bf16.msra.mxu0 0
  %1562 = vmatprep.subr.bf16.mxu0 0
  %1563 = vmatpush1.bf16.msra.mxu0 0
  %1564 = vmatprep.mubr.bf16.mxu0 0
  %1565 = vmatmul.mubr.bf16.gmra.mrb[0].mxu0 %v1530
  %v1566 = vpop.f32.mrb[0].mxu0
  %v1567 = vadd.f32 %v1509, %v1566
  %v1568 = vpop.f32.mrb[0].mxu0
  %v1569 = vpop.f32.mrb[0].mxu0
  %v1570 = vadd.f32 %v1509, %v1569
  %v1571 = vpop.f32.mrb[0].mxu0
  %1572 = vdwg.mxu0
  %v1573 = vmax.f32 %v1567, 0.0
  %v1574 = vmax.f32 %v1570, 0.0
  %s1575 = scalar_lea.vmem %s13, 32
  %v1576 = vld [vmem:[%s1575] sm:$0xf]
  %v1577 = vld [vmem:[%s1575 + $0x4] sm:$0xf]
  %v1578 = vpack.c.bf16 %v1574, %v1573
  %v1581 = vunpack.c.l.b16 %v1576
  %v1582 = vunpack.c.l.b16 %v1577
  %v1583 = vpack.c.b16 %v1582, %v1581
  %v1586 = vsel %vm270, %v1578, 0
  %1588 = vmatprep.subr.bf16.mxu0 0
  %1589 = vmatpush1.bf16.msra.mxu0 %v1583
  %1590 = vmatprep.subr.bf16.mxu0 0
  %1591 = vmatpush1.bf16.msra.mxu0 0
  %1592 = vmatprep.subr.bf16.mxu0 0
  %1593 = vmatpush1.bf16.msra.mxu0 0
  %1594 = vmatprep.subr.bf16.mxu0 0
  %1595 = vmatpush1.bf16.msra.mxu0 0
  %1596 = vmatprep.subr.bf16.mxu0 0
  %1597 = vmatpush1.bf16.msra.mxu0 0
  %1598 = vmatprep.subr.bf16.mxu0 0
  %1599 = vmatpush1.bf16.msra.mxu0 0
  %1600 = vmatprep.subr.bf16.mxu0 0
  %1601 = vmatpush1.bf16.msra.mxu0 0
  %1602 = vmatprep.subr.bf16.mxu0 0
  %1603 = vmatpush1.bf16.msra.mxu0 0
  %1604 = vmatprep.subr.bf16.mxu0 0
  %1605 = vmatpush1.bf16.msra.mxu0 0
  %1606 = vmatprep.subr.bf16.mxu0 0
  %1607 = vmatpush1.bf16.msra.mxu0 0
  %1608 = vmatprep.subr.bf16.mxu0 0
  %1609 = vmatpush1.bf16.msra.mxu0 0
  %1610 = vmatprep.subr.bf16.mxu0 0
  %1611 = vmatpush1.bf16.msra.mxu0 0
  %1612 = vmatprep.subr.bf16.mxu0 0
  %1613 = vmatpush1.bf16.msra.mxu0 0
  %1614 = vmatprep.subr.bf16.mxu0 0
  %1615 = vmatpush1.bf16.msra.mxu0 0
  %1616 = vmatprep.subr.bf16.mxu0 0
  %1617 = vmatpush1.bf16.msra.mxu0 0
  %1618 = vmatprep.subr.bf16.mxu0 0
  %1619 = vmatpush1.bf16.msra.mxu0 0
  %1620 = vmatprep.mubr.bf16.mxu0 0
  %1621 = vmatmul.mubr.bf16.gmra.mrb[0].mxu0 %v1586
  %v1622 = vpop.f32.mrb[0].mxu0
  %v1623 = vadd.f32 0.0, %v1622
  %v1624 = vpop.f32.mrb[0].mxu0
  %v1625 = vpop.f32.mrb[0].mxu0
  %v1626 = vadd.f32 0.0, %v1625
  %v1627 = vpop.f32.mrb[0].mxu0
  %1628 = vdwg.mxu0
  %1631 = vrot.lane.b32.xlu0 %v1623, 32
  %v1632 = vpop.permute.xlu0 %1631
  %1633 = vrot.lane.b32.xlu0 %v1626, 32
  %v1634 = vpop.permute.xlu0 %1633
  %v1637 = vadd.f32 %v388, %v1632
  %v1638 = vadd.f32 %v389, %v1634
  %s1639 = scalar_lea.vmem %s14, 4
  %v1640 = vld [vmem:[%s1639] sm:$0x1]
  %v1642 = vlaneseq
  %v1643 = vshrl.u32 %v1642, 7
  %v1644 = vsub.s32 0, %v1643
  %v1645 = vrot.slane %v1640, %v1644
  %1646 = vrot.lane.b32.xlu0 %v1645, 32
  %v1647 = vpop.permute.xlu0 %1646
  %v1649 = vadd.f32 %v1637, %v1647
  %v1650 = vadd.f32 %v1638, %v1647
  %s1651 = scalar_lea.vmem %s9, 80
  %v1652 = vld [vmem:[%s1651] sm:$0xf]
  %v1653 = vld [vmem:[%s1651 + $0x4] sm:$0xf]
  %v1654 = vld [vmem:[%s1651 + $0x8] sm:$0xf]
  %v1655 = vld [vmem:[%s1651 + $0xc] sm:$0xf]
  %v1656 = vpack.c.bf16 %v1650, %v1649
  %s1657 = scalar_lea.vmem %s10, 5
  %v1658 = vld [vmem:[%s1657] sm:$0x1]
  %v1660 = vlaneseq
  %v1661 = vshrl.u32 %v1660, 7
  %v1662 = vsub.s32 0, %v1661
  %v1663 = vrot.slane %v1658, %v1662
  %1666 = vrot.lane.b32.xlu0 %v1656, 96
  %v1667 = vpop.permute.xlu0 %1666
  %v1672 = vunpack.c.l.b16 %v1652
  %v1673 = vunpack.c.l.b16 %v1653
  %v1674 = vunpack.c.l.b16 %v1654
  %v1675 = vunpack.c.l.b16 %v1655
  %v1676 = vpack.c.b16 %v1673, %v1672
  %v1677 = vpack.c.b16 %v1675, %v1674
  %v1681 = vsel %vm216, %v1667, 0
  %1683 = vmatprep.subr.bf16.mxu0 0
  %1684 = vmatpush1.bf16.msra.mxu0 %v1676
  %1685 = vmatprep.subr.bf16.mxu0 0
  %1686 = vmatpush1.bf16.msra.mxu0 %v1677
  %1687 = vmatprep.subr.bf16.mxu0 0
  %1688 = vmatpush1.bf16.msra.mxu0 0
  %1689 = vmatprep.subr.bf16.mxu0 0
  %1690 = vmatpush1.bf16.msra.mxu0 0
  %1691 = vmatprep.subr.bf16.mxu0 0
  %1692 = vmatpush1.bf16.msra.mxu0 0
  %1693 = vmatprep.subr.bf16.mxu0 0
  %1694 = vmatpush1.bf16.msra.mxu0 0
  %1695 = vmatprep.subr.bf16.mxu0 0
  %1696 = vmatpush1.bf16.msra.mxu0 0
  %1697 = vmatprep.subr.bf16.mxu0 0
  %1698 = vmatpush1.bf16.msra.mxu0 0
  %1699 = vmatprep.subr.bf16.mxu0 0
  %1700 = vmatpush1.bf16.msra.mxu0 0
  %1701 = vmatprep.subr.bf16.mxu0 0
  %1702 = vmatpush1.bf16.msra.mxu0 0
  %1703 = vmatprep.subr.bf16.mxu0 0
  %1704 = vmatpush1.bf16.msra.mxu0 0
  %1705 = vmatprep.subr.bf16.mxu0 0
  %1706 = vmatpush1.bf16.msra.mxu0 0
  %1707 = vmatprep.subr.bf16.mxu0 0
  %1708 = vmatpush1.bf16.msra.mxu0 0
  %1709 = vmatprep.subr.bf16.mxu0 0
  %1710 = vmatpush1.bf16.msra.mxu0 0
  %1711 = vmatprep.subr.bf16.mxu0 0
  %1712 = vmatpush1.bf16.msra.mxu0 0
  %1713 = vmatprep.subr.bf16.mxu0 0
  %1714 = vmatpush1.bf16.msra.mxu0 0
  %1715 = vmatprep.mubr.bf16.mxu0 0
  %1716 = vmatmul.mubr.bf16.gmra.mrb[0].mxu0 %v1681
  %v1717 = vpop.f32.mrb[0].mxu0
  %v1718 = vadd.f32 %v1663, %v1717
  %v1719 = vpop.f32.mrb[0].mxu0
  %v1720 = vpop.f32.mrb[0].mxu0
  %v1721 = vadd.f32 %v1663, %v1720
  %v1722 = vpop.f32.mrb[0].mxu0
  %1723 = vdwg.mxu0
  %v1724 = vmax.f32 %v1718, 0.0
  %v1725 = vmax.f32 %v1721, 0.0
  %v1726 = vsel %vm716, %v1725, 0.0
  %v1727 = vsel %vm717, %v1724, 0.0
  %v1728 = vrot.slane %v1724, 4
  %v1729 = vrot.slane %v1725, 4
  %v1730 = vsel %vm467, %v1728, %v1729
  %v1731 = vsel %vm467, %v1729, %v1728
  %v1732 = vsel %vm463, %v1731, 0.0
  %v1733 = vsel %vm464, %v1730, 0.0
  %1736 = vrot.lane.b32.xlu0 %v1732, 16
  %v1737 = vpop.permute.xlu0 %1736
  %1738 = vrot.lane.b32.xlu0 %v1733, 16
  %v1739 = vpop.permute.xlu0 %1738
  %1744 = vrot.lane.b32.xlu0 %v1724, 32
  %v1745 = vpop.permute.xlu0 %1744
  %1746 = vrot.lane.b32.xlu0 %v1725, 32
  %v1747 = vpop.permute.xlu0 %1746
  %v1750 = vsel %vm270, %v1726, %v1737
  %v1751 = vsel %vm270, %v1727, %v1739
  %v1752 = vsel %vm216, %v1750, %v1745
  %v1753 = vsel %vm216, %v1751, %v1747
  %s1754 = scalar_lea.vmem %s11, 120
  %v1755 = vld [vmem:[%s1754] sm:$0xf]
  %v1756 = vld [vmem:[%s1754 + $0x4] sm:$0xf]
  %v1757 = vld [vmem:[%s1754 + $0x8] sm:$0xf]
  %v1758 = vld [vmem:[%s1754 + $0xc] sm:$0xf]
  %v1759 = vld [vmem:[%s1754 + $0x10] sm:$0xf]
  %v1760 = vld [vmem:[%s1754 + $0x14] sm:$0xf]
  %v1761 = vpack.c.bf16 %v1753, %v1752
  %s1762 = scalar_lea.vmem %s12, 5
  %v1763 = vld [vmem:[%s1762] sm:$0x1]
  %v1765 = vlaneseq
  %v1766 = vshrl.u32 %v1765, 7
  %v1767 = vsub.s32 0, %v1766
  %v1768 = vrot.slane %v1763, %v1767
  %v1776 = vunpack.c.l.b16 %v1755
  %v1777 = vunpack.c.l.b16 %v1756
  %v1778 = vunpack.c.l.b16 %v1757
  %v1779 = vunpack.c.l.b16 %v1758
  %v1780 = vunpack.c.l.b16 %v1759
  %v1781 = vunpack.c.l.b16 %v1760
  %v1782 = vpack.c.b16 %v1777, %v1776
  %v1783 = vpack.c.b16 %v1779, %v1778
  %v1784 = vpack.c.b16 %v1781, %v1780
  %v1789 = vsel %vm533, %v1761, 0
  %1791 = vmatprep.subr.bf16.mxu0 0
  %1792 = vmatpush1.bf16.msra.mxu0 %v1782
  %1793 = vmatprep.subr.bf16.mxu0 0
  %1794 = vmatpush1.bf16.msra.mxu0 %v1783
  %1795 = vmatprep.subr.bf16.mxu0 0
  %1796 = vmatpush1.bf16.msra.mxu0 %v1784
  %1797 = vmatprep.subr.bf16.mxu0 0
  %1798 = vmatpush1.bf16.msra.mxu0 0
  %1799 = vmatprep.subr.bf16.mxu0 0
  %1800 = vmatpush1.bf16.msra.mxu0 0
  %1801 = vmatprep.subr.bf16.mxu0 0
  %1802 = vmatpush1.bf16.msra.mxu0 0
  %1803 = vmatprep.subr.bf16.mxu0 0
  %1804 = vmatpush1.bf16.msra.mxu0 0
  %1805 = vmatprep.subr.bf16.mxu0 0
  %1806 = vmatpush1.bf16.msra.mxu0 0
  %1807 = vmatprep.subr.bf16.mxu0 0
  %1808 = vmatpush1.bf16.msra.mxu0 0
  %1809 = vmatprep.subr.bf16.mxu0 0
  %1810 = vmatpush1.bf16.msra.mxu0 0
  %1811 = vmatprep.subr.bf16.mxu0 0
  %1812 = vmatpush1.bf16.msra.mxu0 0
  %1813 = vmatprep.subr.bf16.mxu0 0
  %1814 = vmatpush1.bf16.msra.mxu0 0
  %1815 = vmatprep.subr.bf16.mxu0 0
  %1816 = vmatpush1.bf16.msra.mxu0 0
  %1817 = vmatprep.subr.bf16.mxu0 0
  %1818 = vmatpush1.bf16.msra.mxu0 0
  %1819 = vmatprep.subr.bf16.mxu0 0
  %1820 = vmatpush1.bf16.msra.mxu0 0
  %1821 = vmatprep.subr.bf16.mxu0 0
  %1822 = vmatpush1.bf16.msra.mxu0 0
  %1823 = vmatprep.mubr.bf16.mxu0 0
  %1824 = vmatmul.mubr.bf16.gmra.mrb[0].mxu0 %v1789
  %v1825 = vpop.f32.mrb[0].mxu0
  %v1826 = vadd.f32 %v1768, %v1825
  %v1827 = vpop.f32.mrb[0].mxu0
  %v1828 = vpop.f32.mrb[0].mxu0
  %v1829 = vadd.f32 %v1768, %v1828
  %v1830 = vpop.f32.mrb[0].mxu0
  %1831 = vdwg.mxu0
  %v1832 = vmax.f32 %v1826, 0.0
  %v1833 = vmax.f32 %v1829, 0.0
  %s1834 = scalar_lea.vmem %s13, 40
  %v1835 = vld [vmem:[%s1834] sm:$0xf]
  %v1836 = vld [vmem:[%s1834 + $0x4] sm:$0xf]
  %v1837 = vpack.c.bf16 %v1833, %v1832
  %v1840 = vunpack.c.l.b16 %v1835
  %v1841 = vunpack.c.l.b16 %v1836
  %v1842 = vpack.c.b16 %v1841, %v1840
  %v1845 = vsel %vm270, %v1837, 0
  %1847 = vmatprep.subr.bf16.mxu0 0
  %1848 = vmatpush1.bf16.msra.mxu0 %v1842
  %1849 = vmatprep.subr.bf16.mxu0 0
  %1850 = vmatpush1.bf16.msra.mxu0 0
  %1851 = vmatprep.subr.bf16.mxu0 0
  %1852 = vmatpush1.bf16.msra.mxu0 0
  %1853 = vmatprep.subr.bf16.mxu0 0
  %1854 = vmatpush1.bf16.msra.mxu0 0
  %1855 = vmatprep.subr.bf16.mxu0 0
  %1856 = vmatpush1.bf16.msra.mxu0 0
  %1857 = vmatprep.subr.bf16.mxu0 0
  %1858 = vmatpush1.bf16.msra.mxu0 0
  %1859 = vmatprep.subr.bf16.mxu0 0
  %1860 = vmatpush1.bf16.msra.mxu0 0
  %1861 = vmatprep.subr.bf16.mxu0 0
  %1862 = vmatpush1.bf16.msra.mxu0 0
  %1863 = vmatprep.subr.bf16.mxu0 0
  %1864 = vmatpush1.bf16.msra.mxu0 0
  %1865 = vmatprep.subr.bf16.mxu0 0
  %1866 = vmatpush1.bf16.msra.mxu0 0
  %1867 = vmatprep.subr.bf16.mxu0 0
  %1868 = vmatpush1.bf16.msra.mxu0 0
  %1869 = vmatprep.subr.bf16.mxu0 0
  %1870 = vmatpush1.bf16.msra.mxu0 0
  %1871 = vmatprep.subr.bf16.mxu0 0
  %1872 = vmatpush1.bf16.msra.mxu0 0
  %1873 = vmatprep.subr.bf16.mxu0 0
  %1874 = vmatpush1.bf16.msra.mxu0 0
  %1875 = vmatprep.subr.bf16.mxu0 0
  %1876 = vmatpush1.bf16.msra.mxu0 0
  %1877 = vmatprep.subr.bf16.mxu0 0
  %1878 = vmatpush1.bf16.msra.mxu0 0
  %1879 = vmatprep.mubr.bf16.mxu0 0
  %1880 = vmatmul.mubr.bf16.gmra.mrb[0].mxu0 %v1845
  %v1881 = vpop.f32.mrb[0].mxu0
  %v1882 = vadd.f32 0.0, %v1881
  %v1883 = vpop.f32.mrb[0].mxu0
  %v1884 = vpop.f32.mrb[0].mxu0
  %v1885 = vadd.f32 0.0, %v1884
  %v1886 = vpop.f32.mrb[0].mxu0
  %1887 = vdwg.mxu0
  %1890 = vrot.lane.b32.xlu0 %v1882, 32
  %v1891 = vpop.permute.xlu0 %1890
  %1892 = vrot.lane.b32.xlu0 %v1885, 32
  %v1893 = vpop.permute.xlu0 %1892
  %v1896 = vadd.f32 %v1649, %v1891
  %v1897 = vadd.f32 %v1650, %v1893
  %s1898 = scalar_lea.vmem %s14, 5
  %v1899 = vld [vmem:[%s1898] sm:$0x1]
  %v1901 = vlaneseq
  %v1902 = vshrl.u32 %v1901, 7
  %v1903 = vsub.s32 0, %v1902
  %v1904 = vrot.slane %v1899, %v1903
  %1905 = vrot.lane.b32.xlu0 %v1904, 32
  %v1906 = vpop.permute.xlu0 %1905
  %v1908 = vadd.f32 %v1896, %v1906
  %v1909 = vadd.f32 %v1897, %v1906
  %s1910 = scalar_lea.vmem %s9, 96
  %v1911 = vld [vmem:[%s1910] sm:$0xf]
  %v1912 = vld [vmem:[%s1910 + $0x4] sm:$0xf]
  %v1913 = vld [vmem:[%s1910 + $0x8] sm:$0xf]
  %v1914 = vld [vmem:[%s1910 + $0xc] sm:$0xf]
  %v1915 = vpack.c.bf16 %v1909, %v1908
  %s1916 = scalar_lea.vmem %s10, 6
  %v1917 = vld [vmem:[%s1916] sm:$0x1]
  %v1919 = vlaneseq
  %v1920 = vshrl.u32 %v1919, 7
  %v1921 = vsub.s32 0, %v1920
  %v1922 = vrot.slane %v1917, %v1921
  %1925 = vrot.lane.b32.xlu0 %v1915, 96
  %v1926 = vpop.permute.xlu0 %1925
  %v1931 = vunpack.c.l.b16 %v1911
  %v1932 = vunpack.c.l.b16 %v1912
  %v1933 = vunpack.c.l.b16 %v1913
  %v1934 = vunpack.c.l.b16 %v1914
  %v1935 = vpack.c.b16 %v1932, %v1931
  %v1936 = vpack.c.b16 %v1934, %v1933
  %v1940 = vsel %vm216, %v1926, 0
  %1942 = vmatprep.subr.bf16.mxu0 0
  %1943 = vmatpush1.bf16.msra.mxu0 %v1935
  %1944 = vmatprep.subr.bf16.mxu0 0
  %1945 = vmatpush1.bf16.msra.mxu0 %v1936
  %1946 = vmatprep.subr.bf16.mxu0 0
  %1947 = vmatpush1.bf16.msra.mxu0 0
  %1948 = vmatprep.subr.bf16.mxu0 0
  %1949 = vmatpush1.bf16.msra.mxu0 0
  %1950 = vmatprep.subr.bf16.mxu0 0
  %1951 = vmatpush1.bf16.msra.mxu0 0
  %1952 = vmatprep.subr.bf16.mxu0 0
  %1953 = vmatpush1.bf16.msra.mxu0 0
  %1954 = vmatprep.subr.bf16.mxu0 0
  %1955 = vmatpush1.bf16.msra.mxu0 0
  %1956 = vmatprep.subr.bf16.mxu0 0
  %1957 = vmatpush1.bf16.msra.mxu0 0
  %1958 = vmatprep.subr.bf16.mxu0 0
  %1959 = vmatpush1.bf16.msra.mxu0 0
  %1960 = vmatprep.subr.bf16.mxu0 0
  %1961 = vmatpush1.bf16.msra.mxu0 0
  %1962 = vmatprep.subr.bf16.mxu0 0
  %1963 = vmatpush1.bf16.msra.mxu0 0
  %1964 = vmatprep.subr.bf16.mxu0 0
  %1965 = vmatpush1.bf16.msra.mxu0 0
  %1966 = vmatprep.subr.bf16.mxu0 0
  %1967 = vmatpush1.bf16.msra.mxu0 0
  %1968 = vmatprep.subr.bf16.mxu0 0
  %1969 = vmatpush1.bf16.msra.mxu0 0
  %1970 = vmatprep.subr.bf16.mxu0 0
  %1971 = vmatpush1.bf16.msra.mxu0 0
  %1972 = vmatprep.subr.bf16.mxu0 0
  %1973 = vmatpush1.bf16.msra.mxu0 0
  %1974 = vmatprep.mubr.bf16.mxu0 0
  %1975 = vmatmul.mubr.bf16.gmra.mrb[0].mxu0 %v1940
  %v1976 = vpop.f32.mrb[0].mxu0
  %v1977 = vadd.f32 %v1922, %v1976
  %v1978 = vpop.f32.mrb[0].mxu0
  %v1979 = vpop.f32.mrb[0].mxu0
  %v1980 = vadd.f32 %v1922, %v1979
  %v1981 = vpop.f32.mrb[0].mxu0
  %1982 = vdwg.mxu0
  %v1983 = vmax.f32 %v1977, 0.0
  %v1984 = vmax.f32 %v1980, 0.0
  %v1985 = vrot.slane %v1983, 4
  %v1986 = vrot.slane %v1984, 4
  %v1987 = vsel %vm467, %v1985, %v1986
  %v1988 = vsel %vm467, %v1986, %v1985
  %v1989 = vsel %vm463, %v1988, 0.0
  %v1990 = vsel %vm464, %v1987, 0.0
  %v1991 = vrot.slane %v1983, 6
  %v1992 = vrot.slane %v1984, 6
  %v1993 = vsel %vm476, %v1991, %v1992
  %v1994 = vsel %vm476, %v1992, %v1991
  %v1995 = vsel %vm472, %v1994, 0.0
  %v1996 = vsel %vm473, %v1993, 0.0
  %1999 = vrot.lane.b32.xlu0 %v1995, 16
  %v2000 = vpop.permute.xlu0 %1999
  %2001 = vrot.lane.b32.xlu0 %v1996, 16
  %v2002 = vpop.permute.xlu0 %2001
  %2007 = vrot.lane.b32.xlu0 %v1983, 32
  %v2008 = vpop.permute.xlu0 %2007
  %2009 = vrot.lane.b32.xlu0 %v1984, 32
  %v2010 = vpop.permute.xlu0 %2009
  %v2013 = vsel %vm270, %v1989, %v2000
  %v2014 = vsel %vm270, %v1990, %v2002
  %v2015 = vsel %vm216, %v2013, %v2008
  %v2016 = vsel %vm216, %v2014, %v2010
  %s2017 = scalar_lea.vmem %s11, 144
  %v2018 = vld [vmem:[%s2017] sm:$0xf]
  %v2019 = vld [vmem:[%s2017 + $0x4] sm:$0xf]
  %v2020 = vld [vmem:[%s2017 + $0x8] sm:$0xf]
  %v2021 = vld [vmem:[%s2017 + $0xc] sm:$0xf]
  %v2022 = vld [vmem:[%s2017 + $0x10] sm:$0xf]
  %v2023 = vld [vmem:[%s2017 + $0x14] sm:$0xf]
  %v2024 = vpack.c.bf16 %v2016, %v2015
  %s2025 = scalar_lea.vmem %s12, 6
  %v2026 = vld [vmem:[%s2025] sm:$0x1]
  %v2028 = vlaneseq
  %v2029 = vshrl.u32 %v2028, 7
  %v2030 = vsub.s32 0, %v2029
  %v2031 = vrot.slane %v2026, %v2030
  %v2039 = vunpack.c.l.b16 %v2018
  %v2040 = vunpack.c.l.b16 %v2019
  %v2041 = vunpack.c.l.b16 %v2020
  %v2042 = vunpack.c.l.b16 %v2021
  %v2043 = vunpack.c.l.b16 %v2022
  %v2044 = vunpack.c.l.b16 %v2023
  %v2045 = vpack.c.b16 %v2040, %v2039
  %v2046 = vpack.c.b16 %v2042, %v2041
  %v2047 = vpack.c.b16 %v2044, %v2043
  %v2052 = vsel %vm533, %v2024, 0
  %2054 = vmatprep.subr.bf16.mxu0 0
  %2055 = vmatpush1.bf16.msra.mxu0 %v2045
  %2056 = vmatprep.subr.bf16.mxu0 0
  %2057 = vmatpush1.bf16.msra.mxu0 %v2046
  %2058 = vmatprep.subr.bf16.mxu0 0
  %2059 = vmatpush1.bf16.msra.mxu0 %v2047
  %2060 = vmatprep.subr.bf16.mxu0 0
  %2061 = vmatpush1.bf16.msra.mxu0 0
  %2062 = vmatprep.subr.bf16.mxu0 0
  %2063 = vmatpush1.bf16.msra.mxu0 0
  %2064 = vmatprep.subr.bf16.mxu0 0
  %2065 = vmatpush1.bf16.msra.mxu0 0
  %2066 = vmatprep.subr.bf16.mxu0 0
  %2067 = vmatpush1.bf16.msra.mxu0 0
  %2068 = vmatprep.subr.bf16.mxu0 0
  %2069 = vmatpush1.bf16.msra.mxu0 0
  %2070 = vmatprep.subr.bf16.mxu0 0
  %2071 = vmatpush1.bf16.msra.mxu0 0
  %2072 = vmatprep.subr.bf16.mxu0 0
  %2073 = vmatpush1.bf16.msra.mxu0 0
  %2074 = vmatprep.subr.bf16.mxu0 0
  %2075 = vmatpush1.bf16.msra.mxu0 0
  %2076 = vmatprep.subr.bf16.mxu0 0
  %2077 = vmatpush1.bf16.msra.mxu0 0
  %2078 = vmatprep.subr.bf16.mxu0 0
  %2079 = vmatpush1.bf16.msra.mxu0 0
  %2080 = vmatprep.subr.bf16.mxu0 0
  %2081 = vmatpush1.bf16.msra.mxu0 0
  %2082 = vmatprep.subr.bf16.mxu0 0
  %2083 = vmatpush1.bf16.msra.mxu0 0
  %2084 = vmatprep.subr.bf16.mxu0 0
  %2085 = vmatpush1.bf16.msra.mxu0 0
  %2086 = vmatprep.mubr.bf16.mxu0 0
  %2087 = vmatmul.mubr.bf16.gmra.mrb[0].mxu0 %v2052
  %v2088 = vpop.f32.mrb[0].mxu0
  %v2089 = vadd.f32 %v2031, %v2088
  %v2090 = vpop.f32.mrb[0].mxu0
  %v2091 = vpop.f32.mrb[0].mxu0
  %v2092 = vadd.f32 %v2031, %v2091
  %v2093 = vpop.f32.mrb[0].mxu0
  %2094 = vdwg.mxu0
  %v2095 = vmax.f32 %v2089, 0.0
  %v2096 = vmax.f32 %v2092, 0.0
  %s2097 = scalar_lea.vmem %s13, 48
  %v2098 = vld [vmem:[%s2097] sm:$0xf]
  %v2099 = vld [vmem:[%s2097 + $0x4] sm:$0xf]
  %v2100 = vpack.c.bf16 %v2096, %v2095
  %v2103 = vunpack.c.l.b16 %v2098
  %v2104 = vunpack.c.l.b16 %v2099
  %v2105 = vpack.c.b16 %v2104, %v2103
  %v2108 = vsel %vm270, %v2100, 0
  %2110 = vmatprep.subr.bf16.mxu0 0
  %2111 = vmatpush1.bf16.msra.mxu0 %v2105
  %2112 = vmatprep.subr.bf16.mxu0 0
  %2113 = vmatpush1.bf16.msra.mxu0 0
  %2114 = vmatprep.subr.bf16.mxu0 0
  %2115 = vmatpush1.bf16.msra.mxu0 0
  %2116 = vmatprep.subr.bf16.mxu0 0
  %2117 = vmatpush1.bf16.msra.mxu0 0
  %2118 = vmatprep.subr.bf16.mxu0 0
  %2119 = vmatpush1.bf16.msra.mxu0 0
  %2120 = vmatprep.subr.bf16.mxu0 0
  %2121 = vmatpush1.bf16.msra.mxu0 0
  %2122 = vmatprep.subr.bf16.mxu0 0
  %2123 = vmatpush1.bf16.msra.mxu0 0
  %2124 = vmatprep.subr.bf16.mxu0 0
  %2125 = vmatpush1.bf16.msra.mxu0 0
  %2126 = vmatprep.subr.bf16.mxu0 0
  %2127 = vmatpush1.bf16.msra.mxu0 0
  %2128 = vmatprep.subr.bf16.mxu0 0
  %2129 = vmatpush1.bf16.msra.mxu0 0
  %2130 = vmatprep.subr.bf16.mxu0 0
  %2131 = vmatpush1.bf16.msra.mxu0 0
  %2132 = vmatprep.subr.bf16.mxu0 0
  %2133 = vmatpush1.bf16.msra.mxu0 0
  %2134 = vmatprep.subr.bf16.mxu0 0
  %2135 = vmatpush1.bf16.msra.mxu0 0
  %2136 = vmatprep.subr.bf16.mxu0 0
  %2137 = vmatpush1.bf16.msra.mxu0 0
  %2138 = vmatprep.subr.bf16.mxu0 0
  %2139 = vmatpush1.bf16.msra.mxu0 0
  %2140 = vmatprep.subr.bf16.mxu0 0
  %2141 = vmatpush1.bf16.msra.mxu0 0
  %2142 = vmatprep.mubr.bf16.mxu0 0
  %2143 = vmatmul.mubr.bf16.gmra.mrb[0].mxu0 %v2108
  %v2144 = vpop.f32.mrb[0].mxu0
  %v2145 = vadd.f32 0.0, %v2144
  %v2146 = vpop.f32.mrb[0].mxu0
  %v2147 = vpop.f32.mrb[0].mxu0
  %v2148 = vadd.f32 0.0, %v2147
  %v2149 = vpop.f32.mrb[0].mxu0
  %2150 = vdwg.mxu0
  %2153 = vrot.lane.b32.xlu0 %v2145, 32
  %v2154 = vpop.permute.xlu0 %2153
  %2155 = vrot.lane.b32.xlu0 %v2148, 32
  %v2156 = vpop.permute.xlu0 %2155
  %v2159 = vadd.f32 %v1908, %v2154
  %v2160 = vadd.f32 %v1909, %v2156
  %s2161 = scalar_lea.vmem %s14, 6
  %v2162 = vld [vmem:[%s2161] sm:$0x1]
  %v2164 = vlaneseq
  %v2165 = vshrl.u32 %v2164, 7
  %v2166 = vsub.s32 0, %v2165
  %v2167 = vrot.slane %v2162, %v2166
  %2168 = vrot.lane.b32.xlu0 %v2167, 32
  %v2169 = vpop.permute.xlu0 %2168
  %v2171 = vadd.f32 %v2159, %v2169
  %v2172 = vadd.f32 %v2160, %v2169
  %s2173 = scalar_lea.vmem %s9, 112
  %v2174 = vld [vmem:[%s2173] sm:$0xf]
  %v2175 = vld [vmem:[%s2173 + $0x4] sm:$0xf]
  %v2176 = vld [vmem:[%s2173 + $0x8] sm:$0xf]
  %v2177 = vld [vmem:[%s2173 + $0xc] sm:$0xf]
  %v2178 = vpack.c.bf16 %v2172, %v2171
  %s2179 = scalar_lea.vmem %s10, 7
  %v2180 = vld [vmem:[%s2179] sm:$0x1]
  %v2182 = vlaneseq
  %v2183 = vshrl.u32 %v2182, 7
  %v2184 = vsub.s32 0, %v2183
  %v2185 = vrot.slane %v2180, %v2184
  %2188 = vrot.lane.b32.xlu0 %v2178, 96
  %v2189 = vpop.permute.xlu0 %2188
  %v2194 = vunpack.c.l.b16 %v2174
  %v2195 = vunpack.c.l.b16 %v2175
  %v2196 = vunpack.c.l.b16 %v2176
  %v2197 = vunpack.c.l.b16 %v2177
  %v2198 = vpack.c.b16 %v2195, %v2194
  %v2199 = vpack.c.b16 %v2197, %v2196
  %v2203 = vsel %vm216, %v2189, 0
  %2205 = vmatprep.subr.bf16.mxu0 0
  %2206 = vmatpush1.bf16.msra.mxu0 %v2198
  %2207 = vmatprep.subr.bf16.mxu0 0
  %2208 = vmatpush1.bf16.msra.mxu0 %v2199
  %2209 = vmatprep.subr.bf16.mxu0 0
  %2210 = vmatpush1.bf16.msra.mxu0 0
  %2211 = vmatprep.subr.bf16.mxu0 0
  %2212 = vmatpush1.bf16.msra.mxu0 0
  %2213 = vmatprep.subr.bf16.mxu0 0
  %2214 = vmatpush1.bf16.msra.mxu0 0
  %2215 = vmatprep.subr.bf16.mxu0 0
  %2216 = vmatpush1.bf16.msra.mxu0 0
  %2217 = vmatprep.subr.bf16.mxu0 0
  %2218 = vmatpush1.bf16.msra.mxu0 0
  %2219 = vmatprep.subr.bf16.mxu0 0
  %2220 = vmatpush1.bf16.msra.mxu0 0
  %2221 = vmatprep.subr.bf16.mxu0 0
  %2222 = vmatpush1.bf16.msra.mxu0 0
  %2223 = vmatprep.subr.bf16.mxu0 0
  %2224 = vmatpush1.bf16.msra.mxu0 0
  %2225 = vmatprep.subr.bf16.mxu0 0
  %2226 = vmatpush1.bf16.msra.mxu0 0
  %2227 = vmatprep.subr.bf16.mxu0 0
  %2228 = vmatpush1.bf16.msra.mxu0 0
  %2229 = vmatprep.subr.bf16.mxu0 0
  %2230 = vmatpush1.bf16.msra.mxu0 0
  %2231 = vmatprep.subr.bf16.mxu0 0
  %2232 = vmatpush1.bf16.msra.mxu0 0
  %2233 = vmatprep.subr.bf16.mxu0 0
  %2234 = vmatpush1.bf16.msra.mxu0 0
  %2235 = vmatprep.subr.bf16.mxu0 0
  %2236 = vmatpush1.bf16.msra.mxu0 0
  %2237 = vmatprep.mubr.bf16.mxu0 0
  %2238 = vmatmul.mubr.bf16.gmra.mrb[0].mxu0 %v2203
  %v2239 = vpop.f32.mrb[0].mxu0
  %v2240 = vadd.f32 %v2185, %v2239
  %v2241 = vpop.f32.mrb[0].mxu0
  %v2242 = vpop.f32.mrb[0].mxu0
  %v2243 = vadd.f32 %v2185, %v2242
  %v2244 = vpop.f32.mrb[0].mxu0
  %2245 = vdwg.mxu0
  %v2246 = vmax.f32 %v2240, 0.0
  %v2247 = vmax.f32 %v2243, 0.0
  %v2248 = vsel %vm716, %v2247, 0.0
  %v2249 = vsel %vm717, %v2246, 0.0
  %v2250 = vrot.slane %v2246, 4
  %v2251 = vrot.slane %v2247, 4
  %v2252 = vsel %vm467, %v2250, %v2251
  %v2253 = vsel %vm467, %v2251, %v2250
  %v2254 = vsel %vm463, %v2253, 0.0
  %v2255 = vsel %vm464, %v2252, 0.0
  %2258 = vrot.lane.b32.xlu0 %v2254, 16
  %v2259 = vpop.permute.xlu0 %2258
  %2260 = vrot.lane.b32.xlu0 %v2255, 16
  %v2261 = vpop.permute.xlu0 %2260
  %2266 = vrot.lane.b32.xlu0 %v2246, 32
  %v2267 = vpop.permute.xlu0 %2266
  %2268 = vrot.lane.b32.xlu0 %v2247, 32
  %v2269 = vpop.permute.xlu0 %2268
  %v2272 = vsel %vm270, %v2248, %v2259
  %v2273 = vsel %vm270, %v2249, %v2261
  %v2274 = vsel %vm216, %v2272, %v2267
  %v2275 = vsel %vm216, %v2273, %v2269
  %s2276 = scalar_lea.vmem %s11, 168
  %v2277 = vld [vmem:[%s2276] sm:$0xf]
  %v2278 = vld [vmem:[%s2276 + $0x4] sm:$0xf]
  %v2279 = vld [vmem:[%s2276 + $0x8] sm:$0xf]
  %v2280 = vld [vmem:[%s2276 + $0xc] sm:$0xf]
  %v2281 = vld [vmem:[%s2276 + $0x10] sm:$0xf]
  %v2282 = vld [vmem:[%s2276 + $0x14] sm:$0xf]
  %v2283 = vpack.c.bf16 %v2275, %v2274
  %s2284 = scalar_lea.vmem %s12, 7
  %v2285 = vld [vmem:[%s2284] sm:$0x1]
  %v2287 = vlaneseq
  %v2288 = vshrl.u32 %v2287, 7
  %v2289 = vsub.s32 0, %v2288
  %v2290 = vrot.slane %v2285, %v2289
  %v2298 = vunpack.c.l.b16 %v2277
  %v2299 = vunpack.c.l.b16 %v2278
  %v2300 = vunpack.c.l.b16 %v2279
  %v2301 = vunpack.c.l.b16 %v2280
  %v2302 = vunpack.c.l.b16 %v2281
  %v2303 = vunpack.c.l.b16 %v2282
  %v2304 = vpack.c.b16 %v2299, %v2298
  %v2305 = vpack.c.b16 %v2301, %v2300
  %v2306 = vpack.c.b16 %v2303, %v2302
  %v2311 = vsel %vm533, %v2283, 0
  %2313 = vmatprep.subr.bf16.mxu0 0
  %2314 = vmatpush1.bf16.msra.mxu0 %v2304
  %2315 = vmatprep.subr.bf16.mxu0 0
  %2316 = vmatpush1.bf16.msra.mxu0 %v2305
  %2317 = vmatprep.subr.bf16.mxu0 0
  %2318 = vmatpush1.bf16.msra.mxu0 %v2306
  %2319 = vmatprep.subr.bf16.mxu0 0
  %2320 = vmatpush1.bf16.msra.mxu0 0
  %2321 = vmatprep.subr.bf16.mxu0 0
  %2322 = vmatpush1.bf16.msra.mxu0 0
  %2323 = vmatprep.subr.bf16.mxu0 0
  %2324 = vmatpush1.bf16.msra.mxu0 0
  %2325 = vmatprep.subr.bf16.mxu0 0
  %2326 = vmatpush1.bf16.msra.mxu0 0
  %2327 = vmatprep.subr.bf16.mxu0 0
  %2328 = vmatpush1.bf16.msra.mxu0 0
  %2329 = vmatprep.subr.bf16.mxu0 0
  %2330 = vmatpush1.bf16.msra.mxu0 0
  %2331 = vmatprep.subr.bf16.mxu0 0
  %2332 = vmatpush1.bf16.msra.mxu0 0
  %2333 = vmatprep.subr.bf16.mxu0 0
  %2334 = vmatpush1.bf16.msra.mxu0 0
  %2335 = vmatprep.subr.bf16.mxu0 0
  %2336 = vmatpush1.bf16.msra.mxu0 0
  %2337 = vmatprep.subr.bf16.mxu0 0
  %2338 = vmatpush1.bf16.msra.mxu0 0
  %2339 = vmatprep.subr.bf16.mxu0 0
  %2340 = vmatpush1.bf16.msra.mxu0 0
  %2341 = vmatprep.subr.bf16.mxu0 0
  %2342 = vmatpush1.bf16.msra.mxu0 0
  %2343 = vmatprep.subr.bf16.mxu0 0
  %2344 = vmatpush1.bf16.msra.mxu0 0
  %2345 = vmatprep.mubr.bf16.mxu0 0
  %2346 = vmatmul.mubr.bf16.gmra.mrb[0].mxu0 %v2311
  %v2347 = vpop.f32.mrb[0].mxu0
  %v2348 = vadd.f32 %v2290, %v2347
  %v2349 = vpop.f32.mrb[0].mxu0
  %v2350 = vpop.f32.mrb[0].mxu0
  %v2351 = vadd.f32 %v2290, %v2350
  %v2352 = vpop.f32.mrb[0].mxu0
  %2353 = vdwg.mxu0
  %v2354 = vmax.f32 %v2348, 0.0
  %v2355 = vmax.f32 %v2351, 0.0
  %s2356 = scalar_lea.vmem %s13, 56
  %v2357 = vld [vmem:[%s2356] sm:$0xf]
  %v2358 = vld [vmem:[%s2356 + $0x4] sm:$0xf]
  %v2359 = vpack.c.bf16 %v2355, %v2354
  %v2362 = vunpack.c.l.b16 %v2357
  %v2363 = vunpack.c.l.b16 %v2358
  %v2364 = vpack.c.b16 %v2363, %v2362
  %v2367 = vsel %vm270, %v2359, 0
  %2369 = vmatprep.subr.bf16.mxu0 0
  %2370 = vmatpush1.bf16.msra.mxu0 %v2364
  %2371 = vmatprep.subr.bf16.mxu0 0
  %2372 = vmatpush1.bf16.msra.mxu0 0
  %2373 = vmatprep.subr.bf16.mxu0 0
  %2374 = vmatpush1.bf16.msra.mxu0 0
  %2375 = vmatprep.subr.bf16.mxu0 0
  %2376 = vmatpush1.bf16.msra.mxu0 0
  %2377 = vmatprep.subr.bf16.mxu0 0
  %2378 = vmatpush1.bf16.msra.mxu0 0
  %2379 = vmatprep.subr.bf16.mxu0 0
  %2380 = vmatpush1.bf16.msra.mxu0 0
  %2381 = vmatprep.subr.bf16.mxu0 0
  %2382 = vmatpush1.bf16.msra.mxu0 0
  %2383 = vmatprep.subr.bf16.mxu0 0
  %2384 = vmatpush1.bf16.msra.mxu0 0
  %2385 = vmatprep.subr.bf16.mxu0 0
  %2386 = vmatpush1.bf16.msra.mxu0 0
  %2387 = vmatprep.subr.bf16.mxu0 0
  %2388 = vmatpush1.bf16.msra.mxu0 0
  %2389 = vmatprep.subr.bf16.mxu0 0
  %2390 = vmatpush1.bf16.msra.mxu0 0
  %2391 = vmatprep.subr.bf16.mxu0 0
  %2392 = vmatpush1.bf16.msra.mxu0 0
  %2393 = vmatprep.subr.bf16.mxu0 0
  %2394 = vmatpush1.bf16.msra.mxu0 0
  %2395 = vmatprep.subr.bf16.mxu0 0
  %2396 = vmatpush1.bf16.msra.mxu0 0
  %2397 = vmatprep.subr.bf16.mxu0 0
  %2398 = vmatpush1.bf16.msra.mxu0 0
  %2399 = vmatprep.subr.bf16.mxu0 0
  %2400 = vmatpush1.bf16.msra.mxu0 0
  %2401 = vmatprep.mubr.bf16.mxu0 0
  %2402 = vmatmul.mubr.bf16.gmra.mrb[0].mxu0 %v2367
  %v2403 = vpop.f32.mrb[0].mxu0
  %v2404 = vadd.f32 0.0, %v2403
  %v2405 = vpop.f32.mrb[0].mxu0
  %v2406 = vpop.f32.mrb[0].mxu0
  %v2407 = vadd.f32 0.0, %v2406
  %v2408 = vpop.f32.mrb[0].mxu0
  %2409 = vdwg.mxu0
  %2412 = vrot.lane.b32.xlu0 %v2404, 32
  %v2413 = vpop.permute.xlu0 %2412
  %2414 = vrot.lane.b32.xlu0 %v2407, 32
  %v2415 = vpop.permute.xlu0 %2414
  %v2418 = vadd.f32 %v2171, %v2413
  %v2419 = vadd.f32 %v2172, %v2415
  %s2420 = scalar_lea.vmem %s14, 7
  %v2421 = vld [vmem:[%s2420] sm:$0x1]
  %v2423 = vlaneseq
  %v2424 = vshrl.u32 %v2423, 7
  %v2425 = vsub.s32 0, %v2424
  %v2426 = vrot.slane %v2421, %v2425
  %2427 = vrot.lane.b32.xlu0 %v2426, 32
  %v2428 = vpop.permute.xlu0 %2427
  %v2430 = vadd.f32 %v2418, %v2428
  %v2431 = vadd.f32 %v2419, %v2428
  %v2432 = vld [vmem:[%s15] sm:$0xf]
  %v2433 = vld [vmem:[%s15 + $0x4] sm:$0xf]
  %v2434 = vld [vmem:[%s15 + $0x8] sm:$0xf]
  %v2435 = vld [vmem:[%s15 + $0xc] sm:$0xf]
  %v2436 = vpack.c.bf16 %v1387, %v1386
  %v2437 = vld [vmem:[%s16] sm:$0x1]
  %v2439 = vlaneseq
  %v2440 = vshrl.u32 %v2439, 7
  %v2441 = vsub.s32 0, %v2440
  %v2442 = vrot.slane %v2437, %v2441
  %v2448 = vunpack.c.l.b16 %v2432
  %v2449 = vunpack.c.l.b16 %v2433
  %v2450 = vunpack.c.l.b16 %v2434
  %v2451 = vunpack.c.l.b16 %v2435
  %v2452 = vpack.c.b16 %v2449, %v2448
  %v2453 = vpack.c.b16 %v2451, %v2450
  %v2457 = vsel %vm216, %v2436, 0
  %2459 = vmatprep.subr.bf16.mxu0 0
  %2460 = vmatpush1.bf16.msra.mxu0 %v2452
  %2461 = vmatprep.subr.bf16.mxu0 0
  %2462 = vmatpush1.bf16.msra.mxu0 %v2453
  %2463 = vmatprep.subr.bf16.mxu0 0
  %2464 = vmatpush1.bf16.msra.mxu0 0
  %2465 = vmatprep.subr.bf16.mxu0 0
  %2466 = vmatpush1.bf16.msra.mxu0 0
  %2467 = vmatprep.subr.bf16.mxu0 0
  %2468 = vmatpush1.bf16.msra.mxu0 0
  %2469 = vmatprep.subr.bf16.mxu0 0
  %2470 = vmatpush1.bf16.msra.mxu0 0
  %2471 = vmatprep.subr.bf16.mxu0 0
  %2472 = vmatpush1.bf16.msra.mxu0 0
  %2473 = vmatprep.subr.bf16.mxu0 0
  %2474 = vmatpush1.bf16.msra.mxu0 0
  %2475 = vmatprep.subr.bf16.mxu0 0
  %2476 = vmatpush1.bf16.msra.mxu0 0
  %2477 = vmatprep.subr.bf16.mxu0 0
  %2478 = vmatpush1.bf16.msra.mxu0 0
  %2479 = vmatprep.subr.bf16.mxu0 0
  %2480 = vmatpush1.bf16.msra.mxu0 0
  %2481 = vmatprep.subr.bf16.mxu0 0
  %2482 = vmatpush1.bf16.msra.mxu0 0
  %2483 = vmatprep.subr.bf16.mxu0 0
  %2484 = vmatpush1.bf16.msra.mxu0 0
  %2485 = vmatprep.subr.bf16.mxu0 0
  %2486 = vmatpush1.bf16.msra.mxu0 0
  %2487 = vmatprep.subr.bf16.mxu0 0
  %2488 = vmatpush1.bf16.msra.mxu0 0
  %2489 = vmatprep.subr.bf16.mxu0 0
  %2490 = vmatpush1.bf16.msra.mxu0 0
  %2491 = vmatprep.mubr.bf16.mxu0 0
  %2492 = vmatmul.mubr.bf16.gmra.mrb[0].mxu0 %v2457
  %v2493 = vpop.f32.mrb[0].mxu0
  %v2494 = vadd.f32 %v2442, %v2493
  %v2495 = vpop.f32.mrb[0].mxu0
  %v2496 = vpop.f32.mrb[0].mxu0
  %v2497 = vadd.f32 %v2442, %v2496
  %v2498 = vpop.f32.mrb[0].mxu0
  %2499 = vdwg.mxu0
  %v2500 = vxor.u32 %v2494, 2147483648
  %v2501 = vxor.u32 %v2497, 2147483648
  %v2502 = vmul.f32 %v2500, 1.442695
  %v2503 = vpow.pop %v2502
  %v2504 = vmul.f32 %v2501, 1.442695
  %v2505 = vpow.pop %v2504
  %v2506 = vadd.f32 %v2503, 1.0
  %v2507 = vadd.f32 %v2505, 1.0
  %v2508 = vrcp.pop %v2506
  %v2509 = vmul.f32 1.0, %v2508
  %v2510 = vrcp.pop %v2507
  %v2511 = vmul.f32 1.0, %v2510
  %v2512 = vld [vmem:[%s17] sm:$0xf]
  %v2513 = vld [vmem:[%s17 + $0x4] sm:$0xf]
  %v2514 = vld [vmem:[%s17 + $0x8] sm:$0xf]
  %v2515 = vld [vmem:[%s17 + $0xc] sm:$0xf]
  %v2516 = vpack.c.bf16 %v2431, %v2430
  %v2517 = vld [vmem:[%s18] sm:$0x1]
  %v2519 = vlaneseq
  %v2520 = vshrl.u32 %v2519, 7
  %v2521 = vsub.s32 0, %v2520
  %v2522 = vrot.slane %v2517, %v2521
  %2525 = vrot.lane.b32.xlu0 %v2516, 96
  %v2526 = vpop.permute.xlu0 %2525
  %v2531 = vunpack.c.l.b16 %v2512
  %v2532 = vunpack.c.l.b16 %v2513
  %v2533 = vunpack.c.l.b16 %v2514
  %v2534 = vunpack.c.l.b16 %v2515
  %v2535 = vpack.c.b16 %v2532, %v2531
  %v2536 = vpack.c.b16 %v2534, %v2533
  %v2540 = vsel %vm216, %v2526, 0
  %2542 = vmatprep.subr.bf16.mxu0 0
  %2543 = vmatpush1.bf16.msra.mxu0 %v2535
  %2544 = vmatprep.subr.bf16.mxu0 0
  %2545 = vmatpush1.bf16.msra.mxu0 %v2536
  %2546 = vmatprep.subr.bf16.mxu0 0
  %2547 = vmatpush1.bf16.msra.mxu0 0
  %2548 = vmatprep.subr.bf16.mxu0 0
  %2549 = vmatpush1.bf16.msra.mxu0 0
  %2550 = vmatprep.subr.bf16.mxu0 0
  %2551 = vmatpush1.bf16.msra.mxu0 0
  %2552 = vmatprep.subr.bf16.mxu0 0
  %2553 = vmatpush1.bf16.msra.mxu0 0
  %2554 = vmatprep.subr.bf16.mxu0 0
  %2555 = vmatpush1.bf16.msra.mxu0 0
  %2556 = vmatprep.subr.bf16.mxu0 0
  %2557 = vmatpush1.bf16.msra.mxu0 0
  %2558 = vmatprep.subr.bf16.mxu0 0
  %2559 = vmatpush1.bf16.msra.mxu0 0
  %2560 = vmatprep.subr.bf16.mxu0 0
  %2561 = vmatpush1.bf16.msra.mxu0 0
  %2562 = vmatprep.subr.bf16.mxu0 0
  %2563 = vmatpush1.bf16.msra.mxu0 0
  %2564 = vmatprep.subr.bf16.mxu0 0
  %2565 = vmatpush1.bf16.msra.mxu0 0
  %2566 = vmatprep.subr.bf16.mxu0 0
  %2567 = vmatpush1.bf16.msra.mxu0 0
  %2568 = vmatprep.subr.bf16.mxu0 0
  %2569 = vmatpush1.bf16.msra.mxu0 0
  %2570 = vmatprep.subr.bf16.mxu0 0
  %2571 = vmatpush1.bf16.msra.mxu0 0
  %2572 = vmatprep.subr.bf16.mxu0 0
  %2573 = vmatpush1.bf16.msra.mxu0 0
  %2574 = vmatprep.mubr.bf16.mxu0 0
  %2575 = vmatmul.mubr.bf16.gmra.mrb[0].mxu0 %v2540
  %v2576 = vpop.f32.mrb[0].mxu0
  %v2577 = vadd.f32 %v2522, %v2576
  %v2578 = vpop.f32.mrb[0].mxu0
  %v2579 = vpop.f32.mrb[0].mxu0
  %v2580 = vadd.f32 %v2522, %v2579
  %v2581 = vpop.f32.mrb[0].mxu0
  %2582 = vdwg.mxu0
  %v2583 = vld [vmem:[%s2] sm:$0xff]
  %v2584 = vld [vmem:[%s2 + $0x8] sm:$0xff]
  %v2585 = vmul.f32 %v2583, %v2509
  %v2586 = vmul.f32 %v2584, %v2511
  %v2587 = vadd.f32 %v167, %v2577
  %v2588 = vadd.f32 %v168, %v2580
  %2591 = vrot.lane.b32.xlu0 %v2587, 16
  %v2592 = vpop.permute.xlu0 %2591
  %2593 = vrot.lane.b32.xlu0 %v2588, 16
  %v2594 = vpop.permute.xlu0 %2593
  %v2597 = vsel %vm270, %v2585, %v2592
  %v2598 = vsel %vm270, %v2586, %v2594
  %v2599 = vld [vmem:[%s19] sm:$0xf]
  %v2600 = vld [vmem:[%s19 + $0x4] sm:$0xf]
  %v2601 = vld [vmem:[%s19 + $0x8] sm:$0xf]
  %v2602 = vld [vmem:[%s19 + $0xc] sm:$0xf]
  %v2603 = vpack.c.bf16 %v2598, %v2597
  %v2604 = vld [vmem:[%s20] sm:$0x1]
  %v2606 = vlaneseq
  %v2607 = vshrl.u32 %v2606, 7
  %v2608 = vsub.s32 0, %v2607
  %v2609 = vrot.slane %v2604, %v2608
  %v2615 = vunpack.c.l.b16 %v2599
  %v2616 = vunpack.c.l.b16 %v2600
  %v2617 = vunpack.c.l.b16 %v2601
  %v2618 = vunpack.c.l.b16 %v2602
  %v2619 = vpack.c.b16 %v2616, %v2615
  %v2620 = vpack.c.b16 %v2618, %v2617
  %v2624 = vsel %vm216, %v2603, 0
  %2626 = vmatprep.subr.bf16.mxu0 0
  %2627 = vmatpush1.bf16.msra.mxu0 %v2619
  %2628 = vmatprep.subr.bf16.mxu0 0
  %2629 = vmatpush1.bf16.msra.mxu0 %v2620
  %2630 = vmatprep.subr.bf16.mxu0 0
  %2631 = vmatpush1.bf16.msra.mxu0 0
  %2632 = vmatprep.subr.bf16.mxu0 0
  %2633 = vmatpush1.bf16.msra.mxu0 0
  %2634 = vmatprep.subr.bf16.mxu0 0
  %2635 = vmatpush1.bf16.msra.mxu0 0
  %2636 = vmatprep.subr.bf16.mxu0 0
  %2637 = vmatpush1.bf16.msra.mxu0 0
  %2638 = vmatprep.subr.bf16.mxu0 0
  %2639 = vmatpush1.bf16.msra.mxu0 0
  %2640 = vmatprep.subr.bf16.mxu0 0
  %2641 = vmatpush1.bf16.msra.mxu0 0
  %2642 = vmatprep.subr.bf16.mxu0 0
  %2643 = vmatpush1.bf16.msra.mxu0 0
  %2644 = vmatprep.subr.bf16.mxu0 0
  %2645 = vmatpush1.bf16.msra.mxu0 0
  %2646 = vmatprep.subr.bf16.mxu0 0
  %2647 = vmatpush1.bf16.msra.mxu0 0
  %2648 = vmatprep.subr.bf16.mxu0 0
  %2649 = vmatpush1.bf16.msra.mxu0 0
  %2650 = vmatprep.subr.bf16.mxu0 0
  %2651 = vmatpush1.bf16.msra.mxu0 0
  %2652 = vmatprep.subr.bf16.mxu0 0
  %2653 = vmatpush1.bf16.msra.mxu0 0
  %2654 = vmatprep.subr.bf16.mxu0 0
  %2655 = vmatpush1.bf16.msra.mxu0 0
  %2656 = vmatprep.subr.bf16.mxu0 0
  %2657 = vmatpush1.bf16.msra.mxu0 0
  %2658 = vmatprep.mubr.bf16.mxu0 0
  %2659 = vmatmul.mubr.bf16.gmra.mrb[0].mxu0 %v2624
  %v2660 = vpop.f32.mrb[0].mxu0
  %v2661 = vadd.f32 %v2609, %v2660
  %v2662 = vpop.f32.mrb[0].mxu0
  %v2663 = vpop.f32.mrb[0].mxu0
  %v2664 = vadd.f32 %v2609, %v2663
  %v2665 = vpop.f32.mrb[0].mxu0
  %2666 = vdwg.mxu0
  %v2667 = vld [vmem:[%s21] sm:$0xf]
  %v2668 = vld [vmem:[%s21 + $0x4] sm:$0xf]
  %v2669 = vld [vmem:[%s22] sm:$0x1]
  %v2672 = vunpack.c.l.b16 %v2667
  %v2673 = vunpack.c.l.b16 %v2668
  %v2674 = vpack.c.b16 %v2673, %v2672
  %v2677 = vsel %vm270, 0, 0
  %2679 = vmatprep.subr.bf16.mxu0 0
  %2680 = vmatpush1.bf16.msra.mxu0 %v2674
  %2681 = vmatprep.subr.bf16.mxu0 0
  %2682 = vmatpush1.bf16.msra.mxu0 0
  %2683 = vmatprep.subr.bf16.mxu0 0
  %2684 = vmatpush1.bf16.msra.mxu0 0
  %2685 = vmatprep.subr.bf16.mxu0 0
  %2686 = vmatpush1.bf16.msra.mxu0 0
  %2687 = vmatprep.subr.bf16.mxu0 0
  %2688 = vmatpush1.bf16.msra.mxu0 0
  %2689 = vmatprep.subr.bf16.mxu0 0
  %2690 = vmatpush1.bf16.msra.mxu0 0
  %2691 = vmatprep.subr.bf16.mxu0 0
  %2692 = vmatpush1.bf16.msra.mxu0 0
  %2693 = vmatprep.subr.bf16.mxu0 0
  %2694 = vmatpush1.bf16.msra.mxu0 0
  %2695 = vmatprep.subr.bf16.mxu0 0
  %2696 = vmatpush1.bf16.msra.mxu0 0
  %2697 = vmatprep.subr.bf16.mxu0 0
  %2698 = vmatpush1.bf16.msra.mxu0 0
  %2699 = vmatprep.subr.bf16.mxu0 0
  %2700 = vmatpush1.bf16.msra.mxu0 0
  %2701 = vmatprep.subr.bf16.mxu0 0
  %2702 = vmatpush1.bf16.msra.mxu0 0
  %2703 = vmatprep.subr.bf16.mxu0 0
  %2704 = vmatpush1.bf16.msra.mxu0 0
  %2705 = vmatprep.subr.bf16.mxu0 0
  %2706 = vmatpush1.bf16.msra.mxu0 0
  %2707 = vmatprep.subr.bf16.mxu0 0
  %2708 = vmatpush1.bf16.msra.mxu0 0
  %2709 = vmatprep.subr.bf16.mxu0 0
  %2710 = vmatpush1.bf16.msra.mxu0 0
  %2711 = vmatprep.mubr.bf16.mxu0 0
  %2712 = vmatmul.mubr.bf16.gmra.mrb[0].mxu0 %v2677
  %v2713 = vpop.f32.mrb[0].mxu0
  %v2714 = vadd.f32 0.0, %v2713
  %v2715 = vpop.f32.mrb[0].mxu0
  %v2716 = vpop.f32.mrb[0].mxu0
  %v2717 = vpop.f32.mrb[0].mxu0
  %2718 = vdwg.mxu0
  %v2719 = vadd.f32 %v2661, %v2714
  %v2720 = vxor.u32 %v2719, 2147483648
  %v2721 = vmul.f32 %v2720, 1.442695
  %v2722 = vpow.pop %v2721
  %v2723 = vadd.f32 %v2722, 1.0
  %v2724 = vrcp.pop %v2723
  %v2725 = vmul.f32 1.0, %v2724
  %v2727 = vlaneseq
  %v2728 = vshrl.u32 %v2727, 7
  %v2729 = vsub.s32 0, %v2728
  %v2730 = vrot.slane %v2669, %v2729
  %2731 = vrot.lane.b32.xlu0 %v2730, 32
  %v2732 = vpop.permute.xlu0 %2731
  %v2734 = vadd.f32 %v2714, %v2732
  %2736 = vrot.lane.b32.xlu0 %v2734, 96
  %v2737 = vpop.permute.xlu0 %2736
  %v2739 = vmul.f32 %v2725, %v2737
  %2741 = vrot.lane.b32.xlu0 %v2739, 32
  %v2742 = vpop.permute.xlu0 %2741
  %v2744 = vadd.f32 %v2661, %v2742
  %v2745 = vtanh.pop %v2744
  %v2746 = vsub.f32 1.0, %v2725
  %2748 = vrot.lane.b32.xlu0 %v2745, 112
  %v2749 = vpop.permute.xlu0 %2748
  %v2751 = vmul.f32 %v2746, %v2749
  %v2752 = vmul.f32 %v2725, 0.0
  %v2753 = vadd.f32 %v2751, %v2752
  %2755 = vrot.lane.b32.xlu0 %v2753, 112
  %v2756 = vpop.permute.xlu0 %2755
  %vm2758 = vcmask 123904
  %2759 = vst.msk [vmem:[#allocation2] sm:$0x3] %vm2758, %v2756
  %v2760 = vpack.c.bf16 %v2753, %v2753
  %2762 = vrot.lane.b32.xlu0 %v2760, 112
  %v2763 = vpop.permute.xlu0 %2762
  %v2765 = vsel %vm270, %v2763, 0
  %2767 = vmatprep.subr.bf16.mxu0 0
  %2768 = vmatpush1.bf16.msra.mxu0 %v2674
  %2769 = vmatprep.subr.bf16.mxu0 0
  %2770 = vmatpush1.bf16.msra.mxu0 0
  %2771 = vmatprep.subr.bf16.mxu0 0
  %2772 = vmatpush1.bf16.msra.mxu0 0
  %2773 = vmatprep.subr.bf16.mxu0 0
  %2774 = vmatpush1.bf16.msra.mxu0 0
  %2775 = vmatprep.subr.bf16.mxu0 0
  %2776 = vmatpush1.bf16.msra.mxu0 0
  %2777 = vmatprep.subr.bf16.mxu0 0
  %2778 = vmatpush1.bf16.msra.mxu0 0
  %2779 = vmatprep.subr.bf16.mxu0 0
  %2780 = vmatpush1.bf16.msra.mxu0 0
  %2781 = vmatprep.subr.bf16.mxu0 0
  %2782 = vmatpush1.bf16.msra.mxu0 0
  %2783 = vmatprep.subr.bf16.mxu0 0
  %2784 = vmatpush1.bf16.msra.mxu0 0
  %2785 = vmatprep.subr.bf16.mxu0 0
  %2786 = vmatpush1.bf16.msra.mxu0 0
  %2787 = vmatprep.subr.bf16.mxu0 0
  %2788 = vmatpush1.bf16.msra.mxu0 0
  %2789 = vmatprep.subr.bf16.mxu0 0
  %2790 = vmatpush1.bf16.msra.mxu0 0
  %2791 = vmatprep.subr.bf16.mxu0 0
  %2792 = vmatpush1.bf16.msra.mxu0 0
  %2793 = vmatprep.subr.bf16.mxu0 0
  %2794 = vmatpush1.bf16.msra.mxu0 0
  %2795 = vmatprep.subr.bf16.mxu0 0
  %2796 = vmatpush1.bf16.msra.mxu0 0
  %2797 = vmatprep.subr.bf16.mxu0 0
  %2798 = vmatpush1.bf16.msra.mxu0 0
  %2799 = vmatprep.mubr.bf16.mxu0 0
  %2800 = vmatmul.mubr.bf16.gmra.mrb[0].mxu0 %v2765
  %v2801 = vpop.f32.mrb[0].mxu0
  %v2802 = vadd.f32 0.0, %v2801
  %v2803 = vpop.f32.mrb[0].mxu0
  %v2804 = vpop.f32.mrb[0].mxu0
  %v2805 = vpop.f32.mrb[0].mxu0
  %2806 = vdwg.mxu0
  %v2808 = vrot.slane %v2802, 6
  %v2810 = vadd.f32 %v2661, %v2808
  %v2811 = vxor.u32 %v2810, 2147483648
  %v2812 = vmul.f32 %v2811, 1.442695
  %v2813 = vpow.pop %v2812
  %v2814 = vadd.f32 %v2813, 1.0
  %v2815 = vrcp.pop %v2814
  %v2816 = vmul.f32 1.0, %v2815
  %v2817 = vadd.f32 %v2802, %v2732
  %v2819 = vrot.slane %v2817, 6
  %2820 = vrot.lane.b32.xlu0 %v2819, 96
  %v2821 = vpop.permute.xlu0 %2820
  %v2823 = vmul.f32 %v2816, %v2821
  %2825 = vrot.lane.b32.xlu0 %v2823, 32
  %v2826 = vpop.permute.xlu0 %2825
  %v2828 = vadd.f32 %v2661, %v2826
  %v2829 = vtanh.pop %v2828
  %v2830 = vsub.f32 1.0, %v2816
  %2832 = vrot.lane.b32.xlu0 %v2829, 112
  %v2833 = vpop.permute.xlu0 %2832
  %v2835 = vmul.f32 %v2830, %v2833
  %v2836 = vrot.slane %v2753, 6
  %v2838 = vmul.f32 %v2816, %v2836
  %v2839 = vadd.f32 %v2835, %v2838
  %2841 = vrot.lane.b32.xlu0 %v2839, 112
  %v2842 = vpop.permute.xlu0 %2841
  %vm2844 = vcmask 125954
  %2845 = vst.msk [vmem:[#allocation2] sm:$0xc] %vm2844, %v2842
  %v2846 = vpack.c.bf16 %v2839, %v2839
  %v2848 = vrot.slane %v2846, 1
  %2849 = vrot.lane.b32.xlu0 %v2848, 112
  %v2850 = vpop.permute.xlu0 %2849
  %v2852 = vsel %vm270, %v2850, 0
  %2854 = vmatprep.subr.bf16.mxu0 0
  %2855 = vmatpush1.bf16.msra.mxu0 %v2674
  %2856 = vmatprep.subr.bf16.mxu0 0
  %2857 = vmatpush1.bf16.msra.mxu0 0
  %2858 = vmatprep.subr.bf16.mxu0 0
  %2859 = vmatpush1.bf16.msra.mxu0 0
  %2860 = vmatprep.subr.bf16.mxu0 0
  %2861 = vmatpush1.bf16.msra.mxu0 0
  %2862 = vmatprep.subr.bf16.mxu0 0
  %2863 = vmatpush1.bf16.msra.mxu0 0
  %2864 = vmatprep.subr.bf16.mxu0 0
  %2865 = vmatpush1.bf16.msra.mxu0 0
  %2866 = vmatprep.subr.bf16.mxu0 0
  %2867 = vmatpush1.bf16.msra.mxu0 0
  %2868 = vmatprep.subr.bf16.mxu0 0
  %2869 = vmatpush1.bf16.msra.mxu0 0
  %2870 = vmatprep.subr.bf16.mxu0 0
  %2871 = vmatpush1.bf16.msra.mxu0 0
  %2872 = vmatprep.subr.bf16.mxu0 0
  %2873 = vmatpush1.bf16.msra.mxu0 0
  %2874 = vmatprep.subr.bf16.mxu0 0
  %2875 = vmatpush1.bf16.msra.mxu0 0
  %2876 = vmatprep.subr.bf16.mxu0 0
  %2877 = vmatpush1.bf16.msra.mxu0 0
  %2878 = vmatprep.subr.bf16.mxu0 0
  %2879 = vmatpush1.bf16.msra.mxu0 0
  %2880 = vmatprep.subr.bf16.mxu0 0
  %2881 = vmatpush1.bf16.msra.mxu0 0
  %2882 = vmatprep.subr.bf16.mxu0 0
  %2883 = vmatpush1.bf16.msra.mxu0 0
  %2884 = vmatprep.subr.bf16.mxu0 0
  %2885 = vmatpush1.bf16.msra.mxu0 0
  %2886 = vmatprep.mubr.bf16.mxu0 0
  %2887 = vmatmul.mubr.bf16.gmra.mrb[0].mxu0 %v2852
  %v2888 = vpop.f32.mrb[0].mxu0
  %v2889 = vadd.f32 0.0, %v2888
  %v2890 = vpop.f32.mrb[0].mxu0
  %v2891 = vpop.f32.mrb[0].mxu0
  %v2892 = vpop.f32.mrb[0].mxu0
  %2893 = vdwg.mxu0
  %v2895 = vrot.slane %v2889, 4
  %v2897 = vadd.f32 %v2661, %v2895
  %v2898 = vxor.u32 %v2897, 2147483648
  %v2899 = vmul.f32 %v2898, 1.442695
  %v2900 = vpow.pop %v2899
  %v2901 = vadd.f32 %v2900, 1.0
  %v2902 = vrcp.pop %v2901
  %v2903 = vmul.f32 1.0, %v2902
  %v2904 = vadd.f32 %v2889, %v2732
  %v2906 = vrot.slane %v2904, 4
  %2907 = vrot.lane.b32.xlu0 %v2906, 96
  %v2908 = vpop.permute.xlu0 %2907
  %v2910 = vmul.f32 %v2903, %v2908
  %2912 = vrot.lane.b32.xlu0 %v2910, 32
  %v2913 = vpop.permute.xlu0 %2912
  %v2915 = vadd.f32 %v2661, %v2913
  %v2916 = vtanh.pop %v2915
  %v2917 = vsub.f32 1.0, %v2903
  %2919 = vrot.lane.b32.xlu0 %v2916, 112
  %v2920 = vpop.permute.xlu0 %2919
  %v2922 = vmul.f32 %v2917, %v2920
  %v2923 = vrot.slane %v2839, 6
  %v2925 = vmul.f32 %v2903, %v2923
  %v2926 = vadd.f32 %v2922, %v2925
  %2928 = vrot.lane.b32.xlu0 %v2926, 112
  %v2929 = vpop.permute.xlu0 %2928
  %vm2931 = vcmask 128004
  %2932 = vst.msk [vmem:[#allocation2] sm:$0x30] %vm2931, %v2929
  %v2933 = vpack.c.bf16 %v2926, %v2926
  %v2935 = vrot.slane %v2933, 2
  %2936 = vrot.lane.b32.xlu0 %v2935, 112
  %v2937 = vpop.permute.xlu0 %2936
  %v2939 = vsel %vm270, %v2937, 0
  %2941 = vmatprep.subr.bf16.mxu0 0
  %2942 = vmatpush1.bf16.msra.mxu0 %v2674
  %2943 = vmatprep.subr.bf16.mxu0 0
  %2944 = vmatpush1.bf16.msra.mxu0 0
  %2945 = vmatprep.subr.bf16.mxu0 0
  %2946 = vmatpush1.bf16.msra.mxu0 0
  %2947 = vmatprep.subr.bf16.mxu0 0
  %2948 = vmatpush1.bf16.msra.mxu0 0
  %2949 = vmatprep.subr.bf16.mxu0 0
  %2950 = vmatpush1.bf16.msra.mxu0 0
  %2951 = vmatprep.subr.bf16.mxu0 0
  %2952 = vmatpush1.bf16.msra.mxu0 0
  %2953 = vmatprep.subr.bf16.mxu0 0
  %2954 = vmatpush1.bf16.msra.mxu0 0
  %2955 = vmatprep.subr.bf16.mxu0 0
  %2956 = vmatpush1.bf16.msra.mxu0 0
  %2957 = vmatprep.subr.bf16.mxu0 0
  %2958 = vmatpush1.bf16.msra.mxu0 0
  %2959 = vmatprep.subr.bf16.mxu0 0
  %2960 = vmatpush1.bf16.msra.mxu0 0
  %2961 = vmatprep.subr.bf16.mxu0 0
  %2962 = vmatpush1.bf16.msra.mxu0 0
  %2963 = vmatprep.subr.bf16.mxu0 0
  %2964 = vmatpush1.bf16.msra.mxu0 0
  %2965 = vmatprep.subr.bf16.mxu0 0
  %2966 = vmatpush1.bf16.msra.mxu0 0
  %2967 = vmatprep.subr.bf16.mxu0 0
  %2968 = vmatpush1.bf16.msra.mxu0 0
  %2969 = vmatprep.subr.bf16.mxu0 0
  %2970 = vmatpush1.bf16.msra.mxu0 0
  %2971 = vmatprep.subr.bf16.mxu0 0
  %2972 = vmatpush1.bf16.msra.mxu0 0
  %2973 = vmatprep.mubr.bf16.mxu0 0
  %2974 = vmatmul.mubr.bf16.gmra.mrb[0].mxu0 %v2939
  %v2975 = vpop.f32.mrb[0].mxu0
  %v2976 = vadd.f32 0.0, %v2975
  %v2977 = vpop.f32.mrb[0].mxu0
  %v2978 = vpop.f32.mrb[0].mxu0
  %v2979 = vpop.f32.mrb[0].mxu0
  %2980 = vdwg.mxu0
  %v2982 = vrot.slane %v2976, 2
  %v2984 = vadd.f32 %v2661, %v2982
  %v2985 = vxor.u32 %v2984, 2147483648
  %v2986 = vmul.f32 %v2985, 1.442695
  %v2987 = vpow.pop %v2986
  %v2988 = vadd.f32 %v2987, 1.0
  %v2989 = vrcp.pop %v2988
  %v2990 = vmul.f32 1.0, %v2989
  %v2991 = vadd.f32 %v2976, %v2732
  %v2993 = vrot.slane %v2991, 2
  %2994 = vrot.lane.b32.xlu0 %v2993, 96
  %v2995 = vpop.permute.xlu0 %2994
  %v2997 = vmul.f32 %v2990, %v2995
  %2999 = vrot.lane.b32.xlu0 %v2997, 32
  %v3000 = vpop.permute.xlu0 %2999
  %v3002 = vadd.f32 %v2661, %v3000
  %v3003 = vtanh.pop %v3002
  %v3004 = vsub.f32 1.0, %v2990
  %3006 = vrot.lane.b32.xlu0 %v3003, 112
  %v3007 = vpop.permute.xlu0 %3006
  %v3009 = vmul.f32 %v3004, %v3007
  %v3010 = vrot.slane %v2926, 6
  %v3012 = vmul.f32 %v2990, %v3010
  %v3013 = vadd.f32 %v3009, %v3012
  %3015 = vrot.lane.b32.xlu0 %v3013, 112
  %v3016 = vpop.permute.xlu0 %3015
  %vm3018 = vcmask 130054
  %3019 = vst.msk [vmem:[#allocation2] sm:$0xc0] %vm3018, %v3016
  %v3020 = vpack.c.bf16 %v3013, %v3013
  %v3022 = vrot.slane %v3020, 3
  %3023 = vrot.lane.b32.xlu0 %v3022, 112
  %v3024 = vpop.permute.xlu0 %3023
  %v3026 = vsel %vm270, %v3024, 0
  %3028 = vmatprep.subr.bf16.mxu0 0
  %3029 = vmatpush1.bf16.msra.mxu0 %v2674
  %3030 = vmatprep.subr.bf16.mxu0 0
  %3031 = vmatpush1.bf16.msra.mxu0 0
  %3032 = vmatprep.subr.bf16.mxu0 0
  %3033 = vmatpush1.bf16.msra.mxu0 0
  %3034 = vmatprep.subr.bf16.mxu0 0
  %3035 = vmatpush1.bf16.msra.mxu0 0
  %3036 = vmatprep.subr.bf16.mxu0 0
  %3037 = vmatpush1.bf16.msra.mxu0 0
  %3038 = vmatprep.subr.bf16.mxu0 0
  %3039 = vmatpush1.bf16.msra.mxu0 0
  %3040 = vmatprep.subr.bf16.mxu0 0
  %3041 = vmatpush1.bf16.msra.mxu0 0
  %3042 = vmatprep.subr.bf16.mxu0 0
  %3043 = vmatpush1.bf16.msra.mxu0 0
  %3044 = vmatprep.subr.bf16.mxu0 0
  %3045 = vmatpush1.bf16.msra.mxu0 0
  %3046 = vmatprep.subr.bf16.mxu0 0
  %3047 = vmatpush1.bf16.msra.mxu0 0
  %3048 = vmatprep.subr.bf16.mxu0 0
  %3049 = vmatpush1.bf16.msra.mxu0 0
  %3050 = vmatprep.subr.bf16.mxu0 0
  %3051 = vmatpush1.bf16.msra.mxu0 0
  %3052 = vmatprep.subr.bf16.mxu0 0
  %3053 = vmatpush1.bf16.msra.mxu0 0
  %3054 = vmatprep.subr.bf16.mxu0 0
  %3055 = vmatpush1.bf16.msra.mxu0 0
  %3056 = vmatprep.subr.bf16.mxu0 0
  %3057 = vmatpush1.bf16.msra.mxu0 0
  %3058 = vmatprep.subr.bf16.mxu0 0
  %3059 = vmatpush1.bf16.msra.mxu0 0
  %3060 = vmatprep.mubr.bf16.mxu0 0
  %3061 = vmatmul.mubr.bf16.gmra.mrb[0].mxu0 %v3026
  %v3062 = vpop.f32.mrb[0].mxu0
  %v3063 = vadd.f32 0.0, %v3062
  %v3064 = vpop.f32.mrb[0].mxu0
  %v3065 = vpop.f32.mrb[0].mxu0
  %v3066 = vpop.f32.mrb[0].mxu0
  %3067 = vdwg.mxu0
  %v3068 = vadd.f32 %v2664, %v3063
  %v3069 = vxor.u32 %v3068, 2147483648
  %v3070 = vmul.f32 %v3069, 1.442695
  %v3071 = vpow.pop %v3070
  %v3072 = vadd.f32 %v3071, 1.0
  %v3073 = vrcp.pop %v3072
  %v3074 = vmul.f32 1.0, %v3073
  %v3075 = vadd.f32 %v3063, %v2732
  %3077 = vrot.lane.b32.xlu0 %v3075, 96
  %v3078 = vpop.permute.xlu0 %3077
  %v3080 = vmul.f32 %v3074, %v3078
  %3082 = vrot.lane.b32.xlu0 %v3080, 32
  %v3083 = vpop.permute.xlu0 %3082
  %v3085 = vadd.f32 %v2664, %v3083
  %v3086 = vtanh.pop %v3085
  %v3087 = vsub.f32 1.0, %v3074
  %3089 = vrot.lane.b32.xlu0 %v3086, 112
  %v3090 = vpop.permute.xlu0 %3089
  %v3092 = vmul.f32 %v3087, %v3090
  %v3093 = vrot.slane %v3013, 6
  %v3095 = vmul.f32 %v3074, %v3093
  %v3096 = vadd.f32 %v3092, %v3095
  %3098 = vrot.lane.b32.xlu0 %v3096, 112
  %v3099 = vpop.permute.xlu0 %3098
  %3101 = vst.msk [vmem:[#allocation2 + $0x8] sm:$0x3] %vm2758, %v3099
  %v3102 = vpack.c.bf16 %v3096, %v3096
  %3104 = vrot.lane.b32.xlu0 %v3102, 112
  %v3105 = vpop.permute.xlu0 %3104
  %v3107 = vsel %vm270, %v3105, 0
  %3109 = vmatprep.subr.bf16.mxu0 0
  %3110 = vmatpush1.bf16.msra.mxu0 %v2674
  %3111 = vmatprep.subr.bf16.mxu0 0
  %3112 = vmatpush1.bf16.msra.mxu0 0
  %3113 = vmatprep.subr.bf16.mxu0 0
  %3114 = vmatpush1.bf16.msra.mxu0 0
  %3115 = vmatprep.subr.bf16.mxu0 0
  %3116 = vmatpush1.bf16.msra.mxu0 0
  %3117 = vmatprep.subr.bf16.mxu0 0
  %3118 = vmatpush1.bf16.msra.mxu0 0
  %3119 = vmatprep.subr.bf16.mxu0 0
  %3120 = vmatpush1.bf16.msra.mxu0 0
  %3121 = vmatprep.subr.bf16.mxu0 0
  %3122 = vmatpush1.bf16.msra.mxu0 0
  %3123 = vmatprep.subr.bf16.mxu0 0
  %3124 = vmatpush1.bf16.msra.mxu0 0
  %3125 = vmatprep.subr.bf16.mxu0 0
  %3126 = vmatpush1.bf16.msra.mxu0 0
  %3127 = vmatprep.subr.bf16.mxu0 0
  %3128 = vmatpush1.bf16.msra.mxu0 0
  %3129 = vmatprep.subr.bf16.mxu0 0
  %3130 = vmatpush1.bf16.msra.mxu0 0
  %3131 = vmatprep.subr.bf16.mxu0 0
  %3132 = vmatpush1.bf16.msra.mxu0 0
  %3133 = vmatprep.subr.bf16.mxu0 0
  %3134 = vmatpush1.bf16.msra.mxu0 0
  %3135 = vmatprep.subr.bf16.mxu0 0
  %3136 = vmatpush1.bf16.msra.mxu0 0
  %3137 = vmatprep.subr.bf16.mxu0 0
  %3138 = vmatpush1.bf16.msra.mxu0 0
  %3139 = vmatprep.subr.bf16.mxu0 0
  %3140 = vmatpush1.bf16.msra.mxu0 0
  %3141 = vmatprep.mubr.bf16.mxu0 0
  %3142 = vmatmul.mubr.bf16.gmra.mrb[0].mxu0 %v3107
  %v3143 = vpop.f32.mrb[0].mxu0
  %v3144 = vadd.f32 0.0, %v3143
  %v3145 = vpop.f32.mrb[0].mxu0
  %v3146 = vpop.f32.mrb[0].mxu0
  %v3147 = vpop.f32.mrb[0].mxu0
  %3148 = vdwg.mxu0
  %v3150 = vrot.slane %v3144, 6
  %v3152 = vadd.f32 %v2664, %v3150
  %v3153 = vxor.u32 %v3152, 2147483648
  %v3154 = vmul.f32 %v3153, 1.442695
  %v3155 = vpow.pop %v3154
  %v3156 = vadd.f32 %v3155, 1.0
  %v3157 = vrcp.pop %v3156
  %v3158 = vmul.f32 1.0, %v3157
  %v3159 = vadd.f32 %v3144, %v2732
  %v3161 = vrot.slane %v3159, 6
  %3162 = vrot.lane.b32.xlu0 %v3161, 96
  %v3163 = vpop.permute.xlu0 %3162
  %v3165 = vmul.f32 %v3158, %v3163
  %3167 = vrot.lane.b32.xlu0 %v3165, 32
  %v3168 = vpop.permute.xlu0 %3167
  %v3170 = vadd.f32 %v2664, %v3168
  %v3171 = vtanh.pop %v3170
  %v3172 = vsub.f32 1.0, %v3158
  %3174 = vrot.lane.b32.xlu0 %v3171, 112
  %v3175 = vpop.permute.xlu0 %3174
  %v3177 = vmul.f32 %v3172, %v3175
  %v3178 = vrot.slane %v3096, 6
  %v3180 = vmul.f32 %v3158, %v3178
  %v3181 = vadd.f32 %v3177, %v3180
  %3183 = vrot.lane.b32.xlu0 %v3181, 112
  %v3184 = vpop.permute.xlu0 %3183
  %3186 = vst.msk [vmem:[#allocation2 + $0x8] sm:$0xc] %vm2844, %v3184
  %v3187 = vpack.c.bf16 %v3181, %v3181
  %v3189 = vrot.slane %v3187, 1
  %3190 = vrot.lane.b32.xlu0 %v3189, 112
  %v3191 = vpop.permute.xlu0 %3190
  %v3193 = vsel %vm270, %v3191, 0
  %3195 = vmatprep.subr.bf16.mxu0 0
  %3196 = vmatpush1.bf16.msra.mxu0 %v2674
  %3197 = vmatprep.subr.bf16.mxu0 0
  %3198 = vmatpush1.bf16.msra.mxu0 0
  %3199 = vmatprep.subr.bf16.mxu0 0
  %3200 = vmatpush1.bf16.msra.mxu0 0
  %3201 = vmatprep.subr.bf16.mxu0 0
  %3202 = vmatpush1.bf16.msra.mxu0 0
  %3203 = vmatprep.subr.bf16.mxu0 0
  %3204 = vmatpush1.bf16.msra.mxu0 0
  %3205 = vmatprep.subr.bf16.mxu0 0
  %3206 = vmatpush1.bf16.msra.mxu0 0
  %3207 = vmatprep.subr.bf16.mxu0 0
  %3208 = vmatpush1.bf16.msra.mxu0 0
  %3209 = vmatprep.subr.bf16.mxu0 0
  %3210 = vmatpush1.bf16.msra.mxu0 0
  %3211 = vmatprep.subr.bf16.mxu0 0
  %3212 = vmatpush1.bf16.msra.mxu0 0
  %3213 = vmatprep.subr.bf16.mxu0 0
  %3214 = vmatpush1.bf16.msra.mxu0 0
  %3215 = vmatprep.subr.bf16.mxu0 0
  %3216 = vmatpush1.bf16.msra.mxu0 0
  %3217 = vmatprep.subr.bf16.mxu0 0
  %3218 = vmatpush1.bf16.msra.mxu0 0
  %3219 = vmatprep.subr.bf16.mxu0 0
  %3220 = vmatpush1.bf16.msra.mxu0 0
  %3221 = vmatprep.subr.bf16.mxu0 0
  %3222 = vmatpush1.bf16.msra.mxu0 0
  %3223 = vmatprep.subr.bf16.mxu0 0
  %3224 = vmatpush1.bf16.msra.mxu0 0
  %3225 = vmatprep.subr.bf16.mxu0 0
  %3226 = vmatpush1.bf16.msra.mxu0 0
  %3227 = vmatprep.mubr.bf16.mxu0 0
  %3228 = vmatmul.mubr.bf16.gmra.mrb[0].mxu0 %v3193
  %v3229 = vpop.f32.mrb[0].mxu0
  %v3230 = vadd.f32 0.0, %v3229
  %v3231 = vpop.f32.mrb[0].mxu0
  %v3232 = vpop.f32.mrb[0].mxu0
  %v3233 = vpop.f32.mrb[0].mxu0
  %3234 = vdwg.mxu0
  %v3236 = vrot.slane %v3230, 4
  %v3238 = vadd.f32 %v2664, %v3236
  %v3239 = vxor.u32 %v3238, 2147483648
  %v3240 = vmul.f32 %v3239, 1.442695
  %v3241 = vpow.pop %v3240
  %v3242 = vadd.f32 %v3241, 1.0
  %v3243 = vrcp.pop %v3242
  %v3244 = vmul.f32 1.0, %v3243
  %v3245 = vadd.f32 %v3230, %v2732
  %v3247 = vrot.slane %v3245, 4
  %3248 = vrot.lane.b32.xlu0 %v3247, 96
  %v3249 = vpop.permute.xlu0 %3248
  %v3251 = vmul.f32 %v3244, %v3249
  %3253 = vrot.lane.b32.xlu0 %v3251, 32
  %v3254 = vpop.permute.xlu0 %3253
  %v3256 = vadd.f32 %v2664, %v3254
  %v3257 = vtanh.pop %v3256
  %v3258 = vsub.f32 1.0, %v3244
  %3260 = vrot.lane.b32.xlu0 %v3257, 112
  %v3261 = vpop.permute.xlu0 %3260
  %v3263 = vmul.f32 %v3258, %v3261
  %v3264 = vrot.slane %v3181, 6
  %v3266 = vmul.f32 %v3244, %v3264
  %v3267 = vadd.f32 %v3263, %v3266
  %3269 = vrot.lane.b32.xlu0 %v3267, 112
  %v3270 = vpop.permute.xlu0 %3269
  %3272 = vst.msk [vmem:[#allocation2 + $0x8] sm:$0x30] %vm2931, %v3270
  %v3273 = vpack.c.bf16 %v3267, %v3267
  %v3275 = vrot.slane %v3273, 2
  %3276 = vrot.lane.b32.xlu0 %v3275, 112
  %v3277 = vpop.permute.xlu0 %3276
  %v3279 = vsel %vm270, %v3277, 0
  %3281 = vmatprep.subr.bf16.mxu0 0
  %3282 = vmatpush1.bf16.msra.mxu0 %v2674
  %3283 = vmatprep.subr.bf16.mxu0 0
  %3284 = vmatpush1.bf16.msra.mxu0 0
  %3285 = vmatprep.subr.bf16.mxu0 0
  %3286 = vmatpush1.bf16.msra.mxu0 0
  %3287 = vmatprep.subr.bf16.mxu0 0
  %3288 = vmatpush1.bf16.msra.mxu0 0
  %3289 = vmatprep.subr.bf16.mxu0 0
  %3290 = vmatpush1.bf16.msra.mxu0 0
  %3291 = vmatprep.subr.bf16.mxu0 0
  %3292 = vmatpush1.bf16.msra.mxu0 0
  %3293 = vmatprep.subr.bf16.mxu0 0
  %3294 = vmatpush1.bf16.msra.mxu0 0
  %3295 = vmatprep.subr.bf16.mxu0 0
  %3296 = vmatpush1.bf16.msra.mxu0 0
  %3297 = vmatprep.subr.bf16.mxu0 0
  %3298 = vmatpush1.bf16.msra.mxu0 0
  %3299 = vmatprep.subr.bf16.mxu0 0
  %3300 = vmatpush1.bf16.msra.mxu0 0
  %3301 = vmatprep.subr.bf16.mxu0 0
  %3302 = vmatpush1.bf16.msra.mxu0 0
  %3303 = vmatprep.subr.bf16.mxu0 0
  %3304 = vmatpush1.bf16.msra.mxu0 0
  %3305 = vmatprep.subr.bf16.mxu0 0
  %3306 = vmatpush1.bf16.msra.mxu0 0
  %3307 = vmatprep.subr.bf16.mxu0 0
  %3308 = vmatpush1.bf16.msra.mxu0 0
  %3309 = vmatprep.subr.bf16.mxu0 0
  %3310 = vmatpush1.bf16.msra.mxu0 0
  %3311 = vmatprep.subr.bf16.mxu0 0
  %3312 = vmatpush1.bf16.msra.mxu0 0
  %3313 = vmatprep.mubr.bf16.mxu0 0
  %3314 = vmatmul.mubr.bf16.gmra.mrb[0].mxu0 %v3279
  %v3315 = vpop.f32.mrb[0].mxu0
  %v3316 = vadd.f32 0.0, %v3315
  %v3317 = vpop.f32.mrb[0].mxu0
  %v3318 = vpop.f32.mrb[0].mxu0
  %v3319 = vpop.f32.mrb[0].mxu0
  %3320 = vdwg.mxu0
  %v3322 = vrot.slane %v3316, 2
  %v3324 = vadd.f32 %v2664, %v3322
  %v3325 = vxor.u32 %v3324, 2147483648
  %v3326 = vmul.f32 %v3325, 1.442695
  %v3327 = vpow.pop %v3326
  %v3328 = vadd.f32 %v3327, 1.0
  %v3329 = vrcp.pop %v3328
  %v3330 = vmul.f32 1.0, %v3329
  %v3331 = vadd.f32 %v3316, %v2732
  %v3333 = vrot.slane %v3331, 2
  %3334 = vrot.lane.b32.xlu0 %v3333, 96
  %v3335 = vpop.permute.xlu0 %3334
  %v3337 = vmul.f32 %v3330, %v3335
  %3339 = vrot.lane.b32.xlu0 %v3337, 32
  %v3340 = vpop.permute.xlu0 %3339
  %v3342 = vadd.f32 %v2664, %v3340
  %v3343 = vtanh.pop %v3342
  %v3344 = vsub.f32 1.0, %v3330
  %3346 = vrot.lane.b32.xlu0 %v3343, 112
  %v3347 = vpop.permute.xlu0 %3346
  %v3349 = vmul.f32 %v3344, %v3347
  %v3350 = vrot.slane %v3267, 6
  %v3352 = vmul.f32 %v3330, %v3350
  %v3353 = vadd.f32 %v3349, %v3352
  %3355 = vrot.lane.b32.xlu0 %v3353, 112
  %v3356 = vpop.permute.xlu0 %3355
  %3358 = vst.msk [vmem:[#allocation2 + $0x8] sm:$0xc0] %vm3018, %v3356
  %v3359 = vld [vmem:[#allocation2] sm:$0xff]
  %v3360 = vld [vmem:[#allocation2 + $0x8] sm:$0xff]
  %v3361 = vld [vmem:[%s23] sm:$0xf]
  %v3362 = vld [vmem:[%s23 + $0x4] sm:$0xf]
  %v3363 = vpack.c.bf16 %v3360, %v3359
  %v3366 = vunpack.c.l.b16 %v3361
  %v3367 = vunpack.c.l.b16 %v3362
  %v3368 = vpack.c.b16 %v3367, %v3366
  %v3371 = vsel %vm270, %v3363, 0
  %3373 = vmatprep.subr.bf16.mxu0 0
  %3374 = vmatpush1.bf16.msra.mxu0 %v3368
  %3375 = vmatprep.subr.bf16.mxu0 0
  %3376 = vmatpush1.bf16.msra.mxu0 0
  %3377 = vmatprep.subr.bf16.mxu0 0
  %3378 = vmatpush1.bf16.msra.mxu0 0
  %3379 = vmatprep.subr.bf16.mxu0 0
  %3380 = vmatpush1.bf16.msra.mxu0 0
  %3381 = vmatprep.subr.bf16.mxu0 0
  %3382 = vmatpush1.bf16.msra.mxu0 0
  %3383 = vmatprep.subr.bf16.mxu0 0
  %3384 = vmatpush1.bf16.msra.mxu0 0
  %3385 = vmatprep.subr.bf16.mxu0 0
  %3386 = vmatpush1.bf16.msra.mxu0 0
  %3387 = vmatprep.subr.bf16.mxu0 0
  %3388 = vmatpush1.bf16.msra.mxu0 0
  %3389 = vmatprep.subr.bf16.mxu0 0
  %3390 = vmatpush1.bf16.msra.mxu0 0
  %3391 = vmatprep.subr.bf16.mxu0 0
  %3392 = vmatpush1.bf16.msra.mxu0 0
  %3393 = vmatprep.subr.bf16.mxu0 0
  %3394 = vmatpush1.bf16.msra.mxu0 0
  %3395 = vmatprep.subr.bf16.mxu0 0
  %3396 = vmatpush1.bf16.msra.mxu0 0
  %3397 = vmatprep.subr.bf16.mxu0 0
  %3398 = vmatpush1.bf16.msra.mxu0 0
  %3399 = vmatprep.subr.bf16.mxu0 0
  %3400 = vmatpush1.bf16.msra.mxu0 0
  %3401 = vmatprep.subr.bf16.mxu0 0
  %3402 = vmatpush1.bf16.msra.mxu0 0
  %3403 = vmatprep.subr.bf16.mxu0 0
  %3404 = vmatpush1.bf16.msra.mxu0 0
  %3405 = vmatprep.mubr.bf16.mxu0 0
  %3406 = vmatmul.mubr.bf16.gmra.mrb[0].mxu0 %v3371
  %v3407 = vpop.f32.mrb[0].mxu0
  %v3408 = vadd.f32 0.0, %v3407
  %v3409 = vpop.f32.mrb[0].mxu0
  %v3410 = vpop.f32.mrb[0].mxu0
  %v3411 = vadd.f32 0.0, %v3410
  %v3412 = vpop.f32.mrb[0].mxu0
  %3413 = vdwg.mxu0
  %s3414 = scalar_lea.vmem %s2, 16
  %v3415 = vld [vmem:[%s3414] sm:$0xff]
  %v3416 = vld [vmem:[%s3414 + $0x8] sm:$0xff]
  %v3417 = vmul.f32 %v3415, %v2509
  %v3418 = vmul.f32 %v3416, %v2511
  %v3419 = vld [vmem:[%s169] sm:$0xff]
  %v3420 = vld [vmem:[%s169 + $0x8] sm:$0xff]
  %3423 = vrot.lane.b32.xlu0 %v2577, 112
  %v3424 = vpop.permute.xlu0 %3423
  %3425 = vrot.lane.b32.xlu0 %v2580, 112
  %v3426 = vpop.permute.xlu0 %3425
  %v3429 = vadd.f32 %v3419, %v3424
  %v3430 = vadd.f32 %v3420, %v3426
  %3433 = vrot.lane.b32.xlu0 %v3429, 16
  %v3434 = vpop.permute.xlu0 %3433
  %3435 = vrot.lane.b32.xlu0 %v3430, 16
  %v3436 = vpop.permute.xlu0 %3435
  %v3439 = vsel %vm270, %v3417, %v3434
  %v3440 = vsel %vm270, %v3418, %v3436
  %s3441 = scalar_lea.vmem %s19, 16
  %v3442 = vld [vmem:[%s3441] sm:$0xf]
  %v3443 = vld [vmem:[%s3441 + $0x4] sm:$0xf]
  %v3444 = vld [vmem:[%s3441 + $0x8] sm:$0xf]
  %v3445 = vld [vmem:[%s3441 + $0xc] sm:$0xf]
  %v3446 = vpack.c.bf16 %v3440, %v3439
  %s3447 = scalar_lea.vmem %s20, 1
  %v3448 = vld [vmem:[%s3447] sm:$0x1]
  %v3450 = vlaneseq
  %v3451 = vshrl.u32 %v3450, 7
  %v3452 = vsub.s32 0, %v3451
  %v3453 = vrot.slane %v3448, %v3452
  %v3459 = vunpack.c.l.b16 %v3442
  %v3460 = vunpack.c.l.b16 %v3443
  %v3461 = vunpack.c.l.b16 %v3444
  %v3462 = vunpack.c.l.b16 %v3445
  %v3463 = vpack.c.b16 %v3460, %v3459
  %v3464 = vpack.c.b16 %v3462, %v3461
  %v3468 = vsel %vm216, %v3446, 0
  %3470 = vmatprep.subr.bf16.mxu0 0
  %3471 = vmatpush1.bf16.msra.mxu0 %v3463
  %3472 = vmatprep.subr.bf16.mxu0 0
  %3473 = vmatpush1.bf16.msra.mxu0 %v3464
  %3474 = vmatprep.subr.bf16.mxu0 0
  %3475 = vmatpush1.bf16.msra.mxu0 0
  %3476 = vmatprep.subr.bf16.mxu0 0
  %3477 = vmatpush1.bf16.msra.mxu0 0
  %3478 = vmatprep.subr.bf16.mxu0 0
  %3479 = vmatpush1.bf16.msra.mxu0 0
  %3480 = vmatprep.subr.bf16.mxu0 0
  %3481 = vmatpush1.bf16.msra.mxu0 0
  %3482 = vmatprep.subr.bf16.mxu0 0
  %3483 = vmatpush1.bf16.msra.mxu0 0
  %3484 = vmatprep.subr.bf16.mxu0 0
  %3485 = vmatpush1.bf16.msra.mxu0 0
  %3486 = vmatprep.subr.bf16.mxu0 0
  %3487 = vmatpush1.bf16.msra.mxu0 0
  %3488 = vmatprep.subr.bf16.mxu0 0
  %3489 = vmatpush1.bf16.msra.mxu0 0
  %3490 = vmatprep.subr.bf16.mxu0 0
  %3491 = vmatpush1.bf16.msra.mxu0 0
  %3492 = vmatprep.subr.bf16.mxu0 0
  %3493 = vmatpush1.bf16.msra.mxu0 0
  %3494 = vmatprep.subr.bf16.mxu0 0
  %3495 = vmatpush1.bf16.msra.mxu0 0
  %3496 = vmatprep.subr.bf16.mxu0 0
  %3497 = vmatpush1.bf16.msra.mxu0 0
  %3498 = vmatprep.subr.bf16.mxu0 0
  %3499 = vmatpush1.bf16.msra.mxu0 0
  %3500 = vmatprep.subr.bf16.mxu0 0
  %3501 = vmatpush1.bf16.msra.mxu0 0
  %3502 = vmatprep.mubr.bf16.mxu0 0
  %3503 = vmatmul.mubr.bf16.gmra.mrb[0].mxu0 %v3468
  %v3504 = vpop.f32.mrb[0].mxu0
  %v3505 = vadd.f32 %v3453, %v3504
  %v3506 = vpop.f32.mrb[0].mxu0
  %v3507 = vpop.f32.mrb[0].mxu0
  %v3508 = vadd.f32 %v3453, %v3507
  %v3509 = vpop.f32.mrb[0].mxu0
  %3510 = vdwg.mxu0
  %s3511 = scalar_lea.vmem %s21, 8
  %v3512 = vld [vmem:[%s3511] sm:$0xf]
  %v3513 = vld [vmem:[%s3511 + $0x4] sm:$0xf]
  %s3514 = scalar_lea.vmem %s22, 1
  %v3515 = vld [vmem:[%s3514] sm:$0x1]
  %v3518 = vunpack.c.l.b16 %v3512
  %v3519 = vunpack.c.l.b16 %v3513
  %v3520 = vpack.c.b16 %v3519, %v3518
  %3522 = vmatprep.subr.bf16.mxu0 0
  %3523 = vmatpush1.bf16.msra.mxu0 %v3520
  %3524 = vmatprep.subr.bf16.mxu0 0
  %3525 = vmatpush1.bf16.msra.mxu0 0
  %3526 = vmatprep.subr.bf16.mxu0 0
  %3527 = vmatpush1.bf16.msra.mxu0 0
  %3528 = vmatprep.subr.bf16.mxu0 0
  %3529 = vmatpush1.bf16.msra.mxu0 0
  %3530 = vmatprep.subr.bf16.mxu0 0
  %3531 = vmatpush1.bf16.msra.mxu0 0
  %3532 = vmatprep.subr.bf16.mxu0 0
  %3533 = vmatpush1.bf16.msra.mxu0 0
  %3534 = vmatprep.subr.bf16.mxu0 0
  %3535 = vmatpush1.bf16.msra.mxu0 0
  %3536 = vmatprep.subr.bf16.mxu0 0
  %3537 = vmatpush1.bf16.msra.mxu0 0
  %3538 = vmatprep.subr.bf16.mxu0 0
  %3539 = vmatpush1.bf16.msra.mxu0 0
  %3540 = vmatprep.subr.bf16.mxu0 0
  %3541 = vmatpush1.bf16.msra.mxu0 0
  %3542 = vmatprep.subr.bf16.mxu0 0
  %3543 = vmatpush1.bf16.msra.mxu0 0
  %3544 = vmatprep.subr.bf16.mxu0 0
  %3545 = vmatpush1.bf16.msra.mxu0 0
  %3546 = vmatprep.subr.bf16.mxu0 0
  %3547 = vmatpush1.bf16.msra.mxu0 0
  %3548 = vmatprep.subr.bf16.mxu0 0
  %3549 = vmatpush1.bf16.msra.mxu0 0
  %3550 = vmatprep.subr.bf16.mxu0 0
  %3551 = vmatpush1.bf16.msra.mxu0 0
  %3552 = vmatprep.subr.bf16.mxu0 0
  %3553 = vmatpush1.bf16.msra.mxu0 0
  %3554 = vmatprep.mubr.bf16.mxu0 0
  %3555 = vmatmul.mubr.bf16.gmra.mrb[0].mxu0 %v2677
  %v3556 = vpop.f32.mrb[0].mxu0
  %v3557 = vadd.f32 0.0, %v3556
  %v3558 = vpop.f32.mrb[0].mxu0
  %v3559 = vpop.f32.mrb[0].mxu0
  %v3560 = vpop.f32.mrb[0].mxu0
  %3561 = vdwg.mxu0
  %v3562 = vadd.f32 %v3505, %v3557
  %v3563 = vxor.u32 %v3562, 2147483648
  %v3564 = vmul.f32 %v3563, 1.442695
  %v3565 = vpow.pop %v3564
  %v3566 = vadd.f32 %v3565, 1.0
  %v3567 = vrcp.pop %v3566
  %v3568 = vmul.f32 1.0, %v3567
  %v3570 = vlaneseq
  %v3571 = vshrl.u32 %v3570, 7
  %v3572 = vsub.s32 0, %v3571
  %v3573 = vrot.slane %v3515, %v3572
  %3574 = vrot.lane.b32.xlu0 %v3573, 32
  %v3575 = vpop.permute.xlu0 %3574
  %v3577 = vadd.f32 %v3557, %v3575
  %3579 = vrot.lane.b32.xlu0 %v3577, 96
  %v3580 = vpop.permute.xlu0 %3579
  %v3582 = vmul.f32 %v3568, %v3580
  %3584 = vrot.lane.b32.xlu0 %v3582, 32
  %v3585 = vpop.permute.xlu0 %3584
  %v3587 = vadd.f32 %v3505, %v3585
  %v3588 = vtanh.pop %v3587
  %v3589 = vsub.f32 1.0, %v3568
  %3591 = vrot.lane.b32.xlu0 %v3588, 112
  %v3592 = vpop.permute.xlu0 %3591
  %v3594 = vmul.f32 %v3589, %v3592
  %v3595 = vmul.f32 %v3568, 0.0
  %v3596 = vadd.f32 %v3594, %v3595
  %3598 = vrot.lane.b32.xlu0 %v3596, 112
  %v3599 = vpop.permute.xlu0 %3598
  %s3601 = scalar_lea.vmem [#allocation2], 16
  %3602 = vst.msk [vmem:[%s3601] sm:$0x3] %vm2758, %v3599
  %v3603 = vpack.c.bf16 %v3596, %v3596
  %3605 = vrot.lane.b32.xlu0 %v3603, 112
  %v3606 = vpop.permute.xlu0 %3605
  %v3608 = vsel %vm270, %v3606, 0
  %3610 = vmatprep.subr.bf16.mxu0 0
  %3611 = vmatpush1.bf16.msra.mxu0 %v3520
  %3612 = vmatprep.subr.bf16.mxu0 0
  %3613 = vmatpush1.bf16.msra.mxu0 0
  %3614 = vmatprep.subr.bf16.mxu0 0
  %3615 = vmatpush1.bf16.msra.mxu0 0
  %3616 = vmatprep.subr.bf16.mxu0 0
  %3617 = vmatpush1.bf16.msra.mxu0 0
  %3618 = vmatprep.subr.bf16.mxu0 0
  %3619 = vmatpush1.bf16.msra.mxu0 0
  %3620 = vmatprep.subr.bf16.mxu0 0
  %3621 = vmatpush1.bf16.msra.mxu0 0
  %3622 = vmatprep.subr.bf16.mxu0 0
  %3623 = vmatpush1.bf16.msra.mxu0 0
  %3624 = vmatprep.subr.bf16.mxu0 0
  %3625 = vmatpush1.bf16.msra.mxu0 0
  %3626 = vmatprep.subr.bf16.mxu0 0
  %3627 = vmatpush1.bf16.msra.mxu0 0
  %3628 = vmatprep.subr.bf16.mxu0 0
  %3629 = vmatpush1.bf16.msra.mxu0 0
  %3630 = vmatprep.subr.bf16.mxu0 0
  %3631 = vmatpush1.bf16.msra.mxu0 0
  %3632 = vmatprep.subr.bf16.mxu0 0
  %3633 = vmatpush1.bf16.msra.mxu0 0
  %3634 = vmatprep.subr.bf16.mxu0 0
  %3635 = vmatpush1.bf16.msra.mxu0 0
  %3636 = vmatprep.subr.bf16.mxu0 0
  %3637 = vmatpush1.bf16.msra.mxu0 0
  %3638 = vmatprep.subr.bf16.mxu0 0
  %3639 = vmatpush1.bf16.msra.mxu0 0
  %3640 = vmatprep.subr.bf16.mxu0 0
  %3641 = vmatpush1.bf16.msra.mxu0 0
  %3642 = vmatprep.mubr.bf16.mxu0 0
  %3643 = vmatmul.mubr.bf16.gmra.mrb[0].mxu0 %v3608
  %v3644 = vpop.f32.mrb[0].mxu0
  %v3645 = vadd.f32 0.0, %v3644
  %v3646 = vpop.f32.mrb[0].mxu0
  %v3647 = vpop.f32.mrb[0].mxu0
  %v3648 = vpop.f32.mrb[0].mxu0
  %3649 = vdwg.mxu0
  %v3651 = vrot.slane %v3645, 6
  %v3653 = vadd.f32 %v3505, %v3651
  %v3654 = vxor.u32 %v3653, 2147483648
  %v3655 = vmul.f32 %v3654, 1.442695
  %v3656 = vpow.pop %v3655
  %v3657 = vadd.f32 %v3656, 1.0
  %v3658 = vrcp.pop %v3657
  %v3659 = vmul.f32 1.0, %v3658
  %v3660 = vadd.f32 %v3645, %v3575
  %v3662 = vrot.slane %v3660, 6
  %3663 = vrot.lane.b32.xlu0 %v3662, 96
  %v3664 = vpop.permute.xlu0 %3663
  %v3666 = vmul.f32 %v3659, %v3664
  %3668 = vrot.lane.b32.xlu0 %v3666, 32
  %v3669 = vpop.permute.xlu0 %3668
  %v3671 = vadd.f32 %v3505, %v3669
  %v3672 = vtanh.pop %v3671
  %v3673 = vsub.f32 1.0, %v3659
  %3675 = vrot.lane.b32.xlu0 %v3672, 112
  %v3676 = vpop.permute.xlu0 %3675
  %v3678 = vmul.f32 %v3673, %v3676
  %v3679 = vrot.slane %v3596, 6
  %v3681 = vmul.f32 %v3659, %v3679
  %v3682 = vadd.f32 %v3678, %v3681
  %3684 = vrot.lane.b32.xlu0 %v3682, 112
  %v3685 = vpop.permute.xlu0 %3684
  %3687 = vst.msk [vmem:[%s3601] sm:$0xc] %vm2844, %v3685
  %v3688 = vpack.c.bf16 %v3682, %v3682
  %v3690 = vrot.slane %v3688, 1
  %3691 = vrot.lane.b32.xlu0 %v3690, 112
  %v3692 = vpop.permute.xlu0 %3691
  %v3694 = vsel %vm270, %v3692, 0
  %3696 = vmatprep.subr.bf16.mxu0 0
  %3697 = vmatpush1.bf16.msra.mxu0 %v3520
  %3698 = vmatprep.subr.bf16.mxu0 0
  %3699 = vmatpush1.bf16.msra.mxu0 0
  %3700 = vmatprep.subr.bf16.mxu0 0
  %3701 = vmatpush1.bf16.msra.mxu0 0
  %3702 = vmatprep.subr.bf16.mxu0 0
  %3703 = vmatpush1.bf16.msra.mxu0 0
  %3704 = vmatprep.subr.bf16.mxu0 0
  %3705 = vmatpush1.bf16.msra.mxu0 0
  %3706 = vmatprep.subr.bf16.mxu0 0
  %3707 = vmatpush1.bf16.msra.mxu0 0
  %3708 = vmatprep.subr.bf16.mxu0 0
  %3709 = vmatpush1.bf16.msra.mxu0 0
  %3710 = vmatprep.subr.bf16.mxu0 0
  %3711 = vmatpush1.bf16.msra.mxu0 0
  %3712 = vmatprep.subr.bf16.mxu0 0
  %3713 = vmatpush1.bf16.msra.mxu0 0
  %3714 = vmatprep.subr.bf16.mxu0 0
  %3715 = vmatpush1.bf16.msra.mxu0 0
  %3716 = vmatprep.subr.bf16.mxu0 0
  %3717 = vmatpush1.bf16.msra.mxu0 0
  %3718 = vmatprep.subr.bf16.mxu0 0
  %3719 = vmatpush1.bf16.msra.mxu0 0
  %3720 = vmatprep.subr.bf16.mxu0 0
  %3721 = vmatpush1.bf16.msra.mxu0 0
  %3722 = vmatprep.subr.bf16.mxu0 0
  %3723 = vmatpush1.bf16.msra.mxu0 0
  %3724 = vmatprep.subr.bf16.mxu0 0
  %3725 = vmatpush1.bf16.msra.mxu0 0
  %3726 = vmatprep.subr.bf16.mxu0 0
  %3727 = vmatpush1.bf16.msra.mxu0 0
  %3728 = vmatprep.mubr.bf16.mxu0 0
  %3729 = vmatmul.mubr.bf16.gmra.mrb[0].mxu0 %v3694
  %v3730 = vpop.f32.mrb[0].mxu0
  %v3731 = vadd.f32 0.0, %v3730
  %v3732 = vpop.f32.mrb[0].mxu0
  %v3733 = vpop.f32.mrb[0].mxu0
  %v3734 = vpop.f32.mrb[0].mxu0
  %3735 = vdwg.mxu0
  %v3737 = vrot.slane %v3731, 4
  %v3739 = vadd.f32 %v3505, %v3737
  %v3740 = vxor.u32 %v3739, 2147483648
  %v3741 = vmul.f32 %v3740, 1.442695
  %v3742 = vpow.pop %v3741
  %v3743 = vadd.f32 %v3742, 1.0
  %v3744 = vrcp.pop %v3743
  %v3745 = vmul.f32 1.0, %v3744
  %v3746 = vadd.f32 %v3731, %v3575
  %v3748 = vrot.slane %v3746, 4
  %3749 = vrot.lane.b32.xlu0 %v3748, 96
  %v3750 = vpop.permute.xlu0 %3749
  %v3752 = vmul.f32 %v3745, %v3750
  %3754 = vrot.lane.b32.xlu0 %v3752, 32
  %v3755 = vpop.permute.xlu0 %3754
  %v3757 = vadd.f32 %v3505, %v3755
  %v3758 = vtanh.pop %v3757
  %v3759 = vsub.f32 1.0, %v3745
  %3761 = vrot.lane.b32.xlu0 %v3758, 112
  %v3762 = vpop.permute.xlu0 %3761
  %v3764 = vmul.f32 %v3759, %v3762
  %v3765 = vrot.slane %v3682, 6
  %v3767 = vmul.f32 %v3745, %v3765
  %v3768 = vadd.f32 %v3764, %v3767
  %3770 = vrot.lane.b32.xlu0 %v3768, 112
  %v3771 = vpop.permute.xlu0 %3770
  %3773 = vst.msk [vmem:[%s3601] sm:$0x30] %vm2931, %v3771
  %v3774 = vpack.c.bf16 %v3768, %v3768
  %v3776 = vrot.slane %v3774, 2
  %3777 = vrot.lane.b32.xlu0 %v3776, 112
  %v3778 = vpop.permute.xlu0 %3777
  %v3780 = vsel %vm270, %v3778, 0
  %3782 = vmatprep.subr.bf16.mxu0 0
  %3783 = vmatpush1.bf16.msra.mxu0 %v3520
  %3784 = vmatprep.subr.bf16.mxu0 0
  %3785 = vmatpush1.bf16.msra.mxu0 0
  %3786 = vmatprep.subr.bf16.mxu0 0
  %3787 = vmatpush1.bf16.msra.mxu0 0
  %3788 = vmatprep.subr.bf16.mxu0 0
  %3789 = vmatpush1.bf16.msra.mxu0 0
  %3790 = vmatprep.subr.bf16.mxu0 0
  %3791 = vmatpush1.bf16.msra.mxu0 0
  %3792 = vmatprep.subr.bf16.mxu0 0
  %3793 = vmatpush1.bf16.msra.mxu0 0
  %3794 = vmatprep.subr.bf16.mxu0 0
  %3795 = vmatpush1.bf16.msra.mxu0 0
  %3796 = vmatprep.subr.bf16.mxu0 0
  %3797 = vmatpush1.bf16.msra.mxu0 0
  %3798 = vmatprep.subr.bf16.mxu0 0
  %3799 = vmatpush1.bf16.msra.mxu0 0
  %3800 = vmatprep.subr.bf16.mxu0 0
  %3801 = vmatpush1.bf16.msra.mxu0 0
  %3802 = vmatprep.subr.bf16.mxu0 0
  %3803 = vmatpush1.bf16.msra.mxu0 0
  %3804 = vmatprep.subr.bf16.mxu0 0
  %3805 = vmatpush1.bf16.msra.mxu0 0
  %3806 = vmatprep.subr.bf16.mxu0 0
  %3807 = vmatpush1.bf16.msra.mxu0 0
  %3808 = vmatprep.subr.bf16.mxu0 0
  %3809 = vmatpush1.bf16.msra.mxu0 0
  %3810 = vmatprep.subr.bf16.mxu0 0
  %3811 = vmatpush1.bf16.msra.mxu0 0
  %3812 = vmatprep.subr.bf16.mxu0 0
  %3813 = vmatpush1.bf16.msra.mxu0 0
  %3814 = vmatprep.mubr.bf16.mxu0 0
  %3815 = vmatmul.mubr.bf16.gmra.mrb[0].mxu0 %v3780
  %v3816 = vpop.f32.mrb[0].mxu0
  %v3817 = vadd.f32 0.0, %v3816
  %v3818 = vpop.f32.mrb[0].mxu0
  %v3819 = vpop.f32.mrb[0].mxu0
  %v3820 = vpop.f32.mrb[0].mxu0
  %3821 = vdwg.mxu0
  %v3823 = vrot.slane %v3817, 2
  %v3825 = vadd.f32 %v3505, %v3823
  %v3826 = vxor.u32 %v3825, 2147483648
  %v3827 = vmul.f32 %v3826, 1.442695
  %v3828 = vpow.pop %v3827
  %v3829 = vadd.f32 %v3828, 1.0
  %v3830 = vrcp.pop %v3829
  %v3831 = vmul.f32 1.0, %v3830
  %v3832 = vadd.f32 %v3817, %v3575
  %v3834 = vrot.slane %v3832, 2
  %3835 = vrot.lane.b32.xlu0 %v3834, 96
  %v3836 = vpop.permute.xlu0 %3835
  %v3838 = vmul.f32 %v3831, %v3836
  %3840 = vrot.lane.b32.xlu0 %v3838, 32
  %v3841 = vpop.permute.xlu0 %3840
  %v3843 = vadd.f32 %v3505, %v3841
  %v3844 = vtanh.pop %v3843
  %v3845 = vsub.f32 1.0, %v3831
  %3847 = vrot.lane.b32.xlu0 %v3844, 112
  %v3848 = vpop.permute.xlu0 %3847
  %v3850 = vmul.f32 %v3845, %v3848
  %v3851 = vrot.slane %v3768, 6
  %v3853 = vmul.f32 %v3831, %v3851
  %v3854 = vadd.f32 %v3850, %v3853
  %3856 = vrot.lane.b32.xlu0 %v3854, 112
  %v3857 = vpop.permute.xlu0 %3856
  %3859 = vst.msk [vmem:[%s3601] sm:$0xc0] %vm3018, %v3857
  %v3860 = vpack.c.bf16 %v3854, %v3854
  %v3862 = vrot.slane %v3860, 3
  %3863 = vrot.lane.b32.xlu0 %v3862, 112
  %v3864 = vpop.permute.xlu0 %3863
  %v3866 = vsel %vm270, %v3864, 0
  %3868 = vmatprep.subr.bf16.mxu0 0
  %3869 = vmatpush1.bf16.msra.mxu0 %v3520
  %3870 = vmatprep.subr.bf16.mxu0 0
  %3871 = vmatpush1.bf16.msra.mxu0 0
  %3872 = vmatprep.subr.bf16.mxu0 0
  %3873 = vmatpush1.bf16.msra.mxu0 0
  %3874 = vmatprep.subr.bf16.mxu0 0
  %3875 = vmatpush1.bf16.msra.mxu0 0
  %3876 = vmatprep.subr.bf16.mxu0 0
  %3877 = vmatpush1.bf16.msra.mxu0 0
  %3878 = vmatprep.subr.bf16.mxu0 0
  %3879 = vmatpush1.bf16.msra.mxu0 0
  %3880 = vmatprep.subr.bf16.mxu0 0
  %3881 = vmatpush1.bf16.msra.mxu0 0
  %3882 = vmatprep.subr.bf16.mxu0 0
  %3883 = vmatpush1.bf16.msra.mxu0 0
  %3884 = vmatprep.subr.bf16.mxu0 0
  %3885 = vmatpush1.bf16.msra.mxu0 0
  %3886 = vmatprep.subr.bf16.mxu0 0
  %3887 = vmatpush1.bf16.msra.mxu0 0
  %3888 = vmatprep.subr.bf16.mxu0 0
  %3889 = vmatpush1.bf16.msra.mxu0 0
  %3890 = vmatprep.subr.bf16.mxu0 0
  %3891 = vmatpush1.bf16.msra.mxu0 0
  %3892 = vmatprep.subr.bf16.mxu0 0
  %3893 = vmatpush1.bf16.msra.mxu0 0
  %3894 = vmatprep.subr.bf16.mxu0 0
  %3895 = vmatpush1.bf16.msra.mxu0 0
  %3896 = vmatprep.subr.bf16.mxu0 0
  %3897 = vmatpush1.bf16.msra.mxu0 0
  %3898 = vmatprep.subr.bf16.mxu0 0
  %3899 = vmatpush1.bf16.msra.mxu0 0
  %3900 = vmatprep.mubr.bf16.mxu0 0
  %3901 = vmatmul.mubr.bf16.gmra.mrb[0].mxu0 %v3866
  %v3902 = vpop.f32.mrb[0].mxu0
  %v3903 = vadd.f32 0.0, %v3902
  %v3904 = vpop.f32.mrb[0].mxu0
  %v3905 = vpop.f32.mrb[0].mxu0
  %v3906 = vpop.f32.mrb[0].mxu0
  %3907 = vdwg.mxu0
  %v3908 = vadd.f32 %v3508, %v3903
  %v3909 = vxor.u32 %v3908, 2147483648
  %v3910 = vmul.f32 %v3909, 1.442695
  %v3911 = vpow.pop %v3910
  %v3912 = vadd.f32 %v3911, 1.0
  %v3913 = vrcp.pop %v3912
  %v3914 = vmul.f32 1.0, %v3913
  %v3915 = vadd.f32 %v3903, %v3575
  %3917 = vrot.lane.b32.xlu0 %v3915, 96
  %v3918 = vpop.permute.xlu0 %3917
  %v3920 = vmul.f32 %v3914, %v3918
  %3922 = vrot.lane.b32.xlu0 %v3920, 32
  %v3923 = vpop.permute.xlu0 %3922
  %v3925 = vadd.f32 %v3508, %v3923
  %v3926 = vtanh.pop %v3925
  %v3927 = vsub.f32 1.0, %v3914
  %3929 = vrot.lane.b32.xlu0 %v3926, 112
  %v3930 = vpop.permute.xlu0 %3929
  %v3932 = vmul.f32 %v3927, %v3930
  %v3933 = vrot.slane %v3854, 6
  %v3935 = vmul.f32 %v3914, %v3933
  %v3936 = vadd.f32 %v3932, %v3935
  %3938 = vrot.lane.b32.xlu0 %v3936, 112
  %v3939 = vpop.permute.xlu0 %3938
  %3941 = vst.msk [vmem:[%s3601 + $0x8] sm:$0x3] %vm2758, %v3939
  %v3942 = vpack.c.bf16 %v3936, %v3936
  %3944 = vrot.lane.b32.xlu0 %v3942, 112
  %v3945 = vpop.permute.xlu0 %3944
  %v3947 = vsel %vm270, %v3945, 0
  %3949 = vmatprep.subr.bf16.mxu0 0
  %3950 = vmatpush1.bf16.msra.mxu0 %v3520
  %3951 = vmatprep.subr.bf16.mxu0 0
  %3952 = vmatpush1.bf16.msra.mxu0 0
  %3953 = vmatprep.subr.bf16.mxu0 0
  %3954 = vmatpush1.bf16.msra.mxu0 0
  %3955 = vmatprep.subr.bf16.mxu0 0
  %3956 = vmatpush1.bf16.msra.mxu0 0
  %3957 = vmatprep.subr.bf16.mxu0 0
  %3958 = vmatpush1.bf16.msra.mxu0 0
  %3959 = vmatprep.subr.bf16.mxu0 0
  %3960 = vmatpush1.bf16.msra.mxu0 0
  %3961 = vmatprep.subr.bf16.mxu0 0
  %3962 = vmatpush1.bf16.msra.mxu0 0
  %3963 = vmatprep.subr.bf16.mxu0 0
  %3964 = vmatpush1.bf16.msra.mxu0 0
  %3965 = vmatprep.subr.bf16.mxu0 0
  %3966 = vmatpush1.bf16.msra.mxu0 0
  %3967 = vmatprep.subr.bf16.mxu0 0
  %3968 = vmatpush1.bf16.msra.mxu0 0
  %3969 = vmatprep.subr.bf16.mxu0 0
  %3970 = vmatpush1.bf16.msra.mxu0 0
  %3971 = vmatprep.subr.bf16.mxu0 0
  %3972 = vmatpush1.bf16.msra.mxu0 0
  %3973 = vmatprep.subr.bf16.mxu0 0
  %3974 = vmatpush1.bf16.msra.mxu0 0
  %3975 = vmatprep.subr.bf16.mxu0 0
  %3976 = vmatpush1.bf16.msra.mxu0 0
  %3977 = vmatprep.subr.bf16.mxu0 0
  %3978 = vmatpush1.bf16.msra.mxu0 0
  %3979 = vmatprep.subr.bf16.mxu0 0
  %3980 = vmatpush1.bf16.msra.mxu0 0
  %3981 = vmatprep.mubr.bf16.mxu0 0
  %3982 = vmatmul.mubr.bf16.gmra.mrb[0].mxu0 %v3947
  %v3983 = vpop.f32.mrb[0].mxu0
  %v3984 = vadd.f32 0.0, %v3983
  %v3985 = vpop.f32.mrb[0].mxu0
  %v3986 = vpop.f32.mrb[0].mxu0
  %v3987 = vpop.f32.mrb[0].mxu0
  %3988 = vdwg.mxu0
  %v3990 = vrot.slane %v3984, 6
  %v3992 = vadd.f32 %v3508, %v3990
  %v3993 = vxor.u32 %v3992, 2147483648
  %v3994 = vmul.f32 %v3993, 1.442695
  %v3995 = vpow.pop %v3994
  %v3996 = vadd.f32 %v3995, 1.0
  %v3997 = vrcp.pop %v3996
  %v3998 = vmul.f32 1.0, %v3997
  %v3999 = vadd.f32 %v3984, %v3575
  %v4001 = vrot.slane %v3999, 6
  %4002 = vrot.lane.b32.xlu0 %v4001, 96
  %v4003 = vpop.permute.xlu0 %4002
  %v4005 = vmul.f32 %v3998, %v4003
  %4007 = vrot.lane.b32.xlu0 %v4005, 32
  %v4008 = vpop.permute.xlu0 %4007
  %v4010 = vadd.f32 %v3508, %v4008
  %v4011 = vtanh.pop %v4010
  %v4012 = vsub.f32 1.0, %v3998
  %4014 = vrot.lane.b32.xlu0 %v4011, 112
  %v4015 = vpop.permute.xlu0 %4014
  %v4017 = vmul.f32 %v4012, %v4015
  %v4018 = vrot.slane %v3936, 6
  %v4020 = vmul.f32 %v3998, %v4018
  %v4021 = vadd.f32 %v4017, %v4020
  %4023 = vrot.lane.b32.xlu0 %v4021, 112
  %v4024 = vpop.permute.xlu0 %4023
  %4026 = vst.msk [vmem:[%s3601 + $0x8] sm:$0xc] %vm2844, %v4024
  %v4027 = vpack.c.bf16 %v4021, %v4021
  %v4029 = vrot.slane %v4027, 1
  %4030 = vrot.lane.b32.xlu0 %v4029, 112
  %v4031 = vpop.permute.xlu0 %4030
  %v4033 = vsel %vm270, %v4031, 0
  %4035 = vmatprep.subr.bf16.mxu0 0
  %4036 = vmatpush1.bf16.msra.mxu0 %v3520
  %4037 = vmatprep.subr.bf16.mxu0 0
  %4038 = vmatpush1.bf16.msra.mxu0 0
  %4039 = vmatprep.subr.bf16.mxu0 0
  %4040 = vmatpush1.bf16.msra.mxu0 0
  %4041 = vmatprep.subr.bf16.mxu0 0
  %4042 = vmatpush1.bf16.msra.mxu0 0
  %4043 = vmatprep.subr.bf16.mxu0 0
  %4044 = vmatpush1.bf16.msra.mxu0 0
  %4045 = vmatprep.subr.bf16.mxu0 0
  %4046 = vmatpush1.bf16.msra.mxu0 0
  %4047 = vmatprep.subr.bf16.mxu0 0
  %4048 = vmatpush1.bf16.msra.mxu0 0
  %4049 = vmatprep.subr.bf16.mxu0 0
  %4050 = vmatpush1.bf16.msra.mxu0 0
  %4051 = vmatprep.subr.bf16.mxu0 0
  %4052 = vmatpush1.bf16.msra.mxu0 0
  %4053 = vmatprep.subr.bf16.mxu0 0
  %4054 = vmatpush1.bf16.msra.mxu0 0
  %4055 = vmatprep.subr.bf16.mxu0 0
  %4056 = vmatpush1.bf16.msra.mxu0 0
  %4057 = vmatprep.subr.bf16.mxu0 0
  %4058 = vmatpush1.bf16.msra.mxu0 0
  %4059 = vmatprep.subr.bf16.mxu0 0
  %4060 = vmatpush1.bf16.msra.mxu0 0
  %4061 = vmatprep.subr.bf16.mxu0 0
  %4062 = vmatpush1.bf16.msra.mxu0 0
  %4063 = vmatprep.subr.bf16.mxu0 0
  %4064 = vmatpush1.bf16.msra.mxu0 0
  %4065 = vmatprep.subr.bf16.mxu0 0
  %4066 = vmatpush1.bf16.msra.mxu0 0
  %4067 = vmatprep.mubr.bf16.mxu0 0
  %4068 = vmatmul.mubr.bf16.gmra.mrb[0].mxu0 %v4033
  %v4069 = vpop.f32.mrb[0].mxu0
  %v4070 = vadd.f32 0.0, %v4069
  %v4071 = vpop.f32.mrb[0].mxu0
  %v4072 = vpop.f32.mrb[0].mxu0
  %v4073 = vpop.f32.mrb[0].mxu0
  %4074 = vdwg.mxu0
  %v4076 = vrot.slane %v4070, 4
  %v4078 = vadd.f32 %v3508, %v4076
  %v4079 = vxor.u32 %v4078, 2147483648
  %v4080 = vmul.f32 %v4079, 1.442695
  %v4081 = vpow.pop %v4080
  %v4082 = vadd.f32 %v4081, 1.0
  %v4083 = vrcp.pop %v4082
  %v4084 = vmul.f32 1.0, %v4083
  %v4085 = vadd.f32 %v4070, %v3575
  %v4087 = vrot.slane %v4085, 4
  %4088 = vrot.lane.b32.xlu0 %v4087, 96
  %v4089 = vpop.permute.xlu0 %4088
  %v4091 = vmul.f32 %v4084, %v4089
  %4093 = vrot.lane.b32.xlu0 %v4091, 32
  %v4094 = vpop.permute.xlu0 %4093
  %v4096 = vadd.f32 %v3508, %v4094
  %v4097 = vtanh.pop %v4096
  %v4098 = vsub.f32 1.0, %v4084
  %4100 = vrot.lane.b32.xlu0 %v4097, 112
  %v4101 = vpop.permute.xlu0 %4100
  %v4103 = vmul.f32 %v4098, %v4101
  %v4104 = vrot.slane %v4021, 6
  %v4106 = vmul.f32 %v4084, %v4104
  %v4107 = vadd.f32 %v4103, %v4106
  %4109 = vrot.lane.b32.xlu0 %v4107, 112
  %v4110 = vpop.permute.xlu0 %4109
  %4112 = vst.msk [vmem:[%s3601 + $0x8] sm:$0x30] %vm2931, %v4110
  %v4113 = vpack.c.bf16 %v4107, %v4107
  %v4115 = vrot.slane %v4113, 2
  %4116 = vrot.lane.b32.xlu0 %v4115, 112
  %v4117 = vpop.permute.xlu0 %4116
  %v4119 = vsel %vm270, %v4117, 0
  %4121 = vmatprep.subr.bf16.mxu0 0
  %4122 = vmatpush1.bf16.msra.mxu0 %v3520
  %4123 = vmatprep.subr.bf16.mxu0 0
  %4124 = vmatpush1.bf16.msra.mxu0 0
  %4125 = vmatprep.subr.bf16.mxu0 0
  %4126 = vmatpush1.bf16.msra.mxu0 0
  %4127 = vmatprep.subr.bf16.mxu0 0
  %4128 = vmatpush1.bf16.msra.mxu0 0
  %4129 = vmatprep.subr.bf16.mxu0 0
  %4130 = vmatpush1.bf16.msra.mxu0 0
  %4131 = vmatprep.subr.bf16.mxu0 0
  %4132 = vmatpush1.bf16.msra.mxu0 0
  %4133 = vmatprep.subr.bf16.mxu0 0
  %4134 = vmatpush1.bf16.msra.mxu0 0
  %4135 = vmatprep.subr.bf16.mxu0 0
  %4136 = vmatpush1.bf16.msra.mxu0 0
  %4137 = vmatprep.subr.bf16.mxu0 0
  %4138 = vmatpush1.bf16.msra.mxu0 0
  %4139 = vmatprep.subr.bf16.mxu0 0
  %4140 = vmatpush1.bf16.msra.mxu0 0
  %4141 = vmatprep.subr.bf16.mxu0 0
  %4142 = vmatpush1.bf16.msra.mxu0 0
  %4143 = vmatprep.subr.bf16.mxu0 0
  %4144 = vmatpush1.bf16.msra.mxu0 0
  %4145 = vmatprep.subr.bf16.mxu0 0
  %4146 = vmatpush1.bf16.msra.mxu0 0
  %4147 = vmatprep.subr.bf16.mxu0 0
  %4148 = vmatpush1.bf16.msra.mxu0 0
  %4149 = vmatprep.subr.bf16.mxu0 0
  %4150 = vmatpush1.bf16.msra.mxu0 0
  %4151 = vmatprep.subr.bf16.mxu0 0
  %4152 = vmatpush1.bf16.msra.mxu0 0
  %4153 = vmatprep.mubr.bf16.mxu0 0
  %4154 = vmatmul.mubr.bf16.gmra.mrb[0].mxu0 %v4119
  %v4155 = vpop.f32.mrb[0].mxu0
  %v4156 = vadd.f32 0.0, %v4155
  %v4157 = vpop.f32.mrb[0].mxu0
  %v4158 = vpop.f32.mrb[0].mxu0
  %v4159 = vpop.f32.mrb[0].mxu0
  %4160 = vdwg.mxu0
  %v4162 = vrot.slane %v4156, 2
  %v4164 = vadd.f32 %v3508, %v4162
  %v4165 = vxor.u32 %v4164, 2147483648
  %v4166 = vmul.f32 %v4165, 1.442695
  %v4167 = vpow.pop %v4166
  %v4168 = vadd.f32 %v4167, 1.0
  %v4169 = vrcp.pop %v4168
  %v4170 = vmul.f32 1.0, %v4169
  %v4171 = vadd.f32 %v4156, %v3575
  %v4173 = vrot.slane %v4171, 2
  %4174 = vrot.lane.b32.xlu0 %v4173, 96
  %v4175 = vpop.permute.xlu0 %4174
  %v4177 = vmul.f32 %v4170, %v4175
  %4179 = vrot.lane.b32.xlu0 %v4177, 32
  %v4180 = vpop.permute.xlu0 %4179
  %v4182 = vadd.f32 %v3508, %v4180
  %v4183 = vtanh.pop %v4182
  %v4184 = vsub.f32 1.0, %v4170
  %4186 = vrot.lane.b32.xlu0 %v4183, 112
  %v4187 = vpop.permute.xlu0 %4186
  %v4189 = vmul.f32 %v4184, %v4187
  %v4190 = vrot.slane %v4107, 6
  %v4192 = vmul.f32 %v4170, %v4190
  %v4193 = vadd.f32 %v4189, %v4192
  %4195 = vrot.lane.b32.xlu0 %v4193, 112
  %v4196 = vpop.permute.xlu0 %4195
  %4198 = vst.msk [vmem:[%s3601 + $0x8] sm:$0xc0] %vm3018, %v4196
  %v4199 = vld [vmem:[%s3601] sm:$0xff]
  %v4200 = vld [vmem:[%s3601 + $0x8] sm:$0xff]
  %s4201 = scalar_lea.vmem %s23, 8
  %v4202 = vld [vmem:[%s4201] sm:$0xf]
  %v4203 = vld [vmem:[%s4201 + $0x4] sm:$0xf]
  %v4204 = vpack.c.bf16 %v4200, %v4199
  %v4207 = vunpack.c.l.b16 %v4202
  %v4208 = vunpack.c.l.b16 %v4203
  %v4209 = vpack.c.b16 %v4208, %v4207
  %v4212 = vsel %vm270, %v4204, 0
  %4214 = vmatprep.subr.bf16.mxu0 0
  %4215 = vmatpush1.bf16.msra.mxu0 %v4209
  %4216 = vmatprep.subr.bf16.mxu0 0
  %4217 = vmatpush1.bf16.msra.mxu0 0
  %4218 = vmatprep.subr.bf16.mxu0 0
  %4219 = vmatpush1.bf16.msra.mxu0 0
  %4220 = vmatprep.subr.bf16.mxu0 0
  %4221 = vmatpush1.bf16.msra.mxu0 0
  %4222 = vmatprep.subr.bf16.mxu0 0
  %4223 = vmatpush1.bf16.msra.mxu0 0
  %4224 = vmatprep.subr.bf16.mxu0 0
  %4225 = vmatpush1.bf16.msra.mxu0 0
  %4226 = vmatprep.subr.bf16.mxu0 0
  %4227 = vmatpush1.bf16.msra.mxu0 0
  %4228 = vmatprep.subr.bf16.mxu0 0
  %4229 = vmatpush1.bf16.msra.mxu0 0
  %4230 = vmatprep.subr.bf16.mxu0 0
  %4231 = vmatpush1.bf16.msra.mxu0 0
  %4232 = vmatprep.subr.bf16.mxu0 0
  %4233 = vmatpush1.bf16.msra.mxu0 0
  %4234 = vmatprep.subr.bf16.mxu0 0
  %4235 = vmatpush1.bf16.msra.mxu0 0
  %4236 = vmatprep.subr.bf16.mxu0 0
  %4237 = vmatpush1.bf16.msra.mxu0 0
  %4238 = vmatprep.subr.bf16.mxu0 0
  %4239 = vmatpush1.bf16.msra.mxu0 0
  %4240 = vmatprep.subr.bf16.mxu0 0
  %4241 = vmatpush1.bf16.msra.mxu0 0
  %4242 = vmatprep.subr.bf16.mxu0 0
  %4243 = vmatpush1.bf16.msra.mxu0 0
  %4244 = vmatprep.subr.bf16.mxu0 0
  %4245 = vmatpush1.bf16.msra.mxu0 0
  %4246 = vmatprep.mubr.bf16.mxu0 0
  %4247 = vmatmul.mubr.bf16.gmra.mrb[0].mxu0 %v4212
  %v4248 = vpop.f32.mrb[0].mxu0
  %v4249 = vadd.f32 0.0, %v4248
  %v4250 = vpop.f32.mrb[0].mxu0
  %v4251 = vpop.f32.mrb[0].mxu0
  %v4252 = vadd.f32 0.0, %v4251
  %v4253 = vpop.f32.mrb[0].mxu0
  %4254 = vdwg.mxu0
  %4257 = vrot.lane.b32.xlu0 %v4249, 16
  %v4258 = vpop.permute.xlu0 %4257
  %4259 = vrot.lane.b32.xlu0 %v4252, 16
  %v4260 = vpop.permute.xlu0 %4259
  %v4263 = vsel %vm270, %v3408, %v4258
  %v4264 = vsel %vm270, %v3411, %v4260
  %4265 = vst.msk [vmem:[%s24] sm:$0xff] %vm216, %v4263
  %4266 = vst.msk [vmem:[%s24 + $0x8] sm:$0xff] %vm216, %v4264
  // Predicated region
  $region98: #{collaborative_post_processing.1} parent=0 // pred_check
    _
  $region99: #{collaborative_post_processing.1} parent=0 // pred_check_branch
    %4268 = sbr.rel (0) target = $region101
  $region100: #{collaborative_post_processing.1} parent=0 // pred_region
    _
  $region101: #{collaborative_post_processing.1} parent=0 // pred_fallthru
    _
  // Predicated region
  $region102: #{collaborative_post_processing.1} parent=0 // pred_check
    _
  $region103: #{collaborative_post_processing.1} parent=0 // pred_check_branch
    %4270 = sbr.rel (0) target = $region105
  $region104: #{collaborative_post_processing.1} parent=0 // pred_region
    _
  $region105: #{collaborative_post_processing.1} parent=0 // pred_fallthru
    _

</llo_original>
